<compile_context>
chip_gen: v6e
topology: v6e:2x2x1
jax: 0.10.0
libtpu: 0.0.40
codegen_flags: <defaults>
</compile_context>

<pallas_src>
import functools

import jax
import jax.numpy as jnp
from jax import lax
from jax.experimental import pallas as pl
from jax.experimental.pallas import tpu as pltpu


def _gated_attn_kernel(x_ref, wab_ref, bab_ref, wct_ref, bc_ref, out_ref, *,
                       hidden_d):
    x = x_ref[...]                                            # (tile_n, L) bf16
    # Fused attention_a | attention_b projection: one (L, 2D) matmul, f32 acc.
    h = (jnp.dot(x, wab_ref[...], preferred_element_type=jnp.float32)
         + bab_ref[...])                                      # (tile_n, 2D) f32
    a = jnp.tanh(h[:, :hidden_d])                             # f32 activations
    b = jax.nn.sigmoid(h[:, hidden_d:])
    gated = (a * b).astype(wct_ref.dtype)                     # (tile_n, D) bf16
    # attention_c computed transposed: (C, D) x (tile_n, D)^T -> (C, tile_n)
    # so the output block is lane-dense (tile_n on the 128-lane axis).
    out_t = (lax.dot_general(
        wct_ref[...], gated,
        dimension_numbers=(((1,), (1,)), ((), ())),           # contract over D
        preferred_element_type=jnp.float32)
        + bc_ref[...])                                        # (C, tile_n) f32
    out_ref[...] = out_t.astype(out_ref.dtype)


def prepare_attn_params(wa, ba, wb, bb, wc, bc, *, matmul_dtype=jnp.bfloat16):
    """One-time parameter prep: fuse Wa|Wb, transpose Wc, cast to bf16.

    wa: (L, D), ba: (D,)   attention_a Linear (weights stored transposed)
    wb: (L, D), bb: (D,)   attention_b Linear
    wc: (D, C), bc: (C,)   attention_c Linear
    Returns (wab, bab, wct, bc_col) ready to feed attn_net_gated; call once
    per parameter set, NOT per forward.
    """
    D = wa.shape[1]
    C = wc.shape[1]
    wab = jnp.concatenate([wa, wb], axis=1).astype(matmul_dtype)      # (L, 2D)
    bab = jnp.concatenate([ba.reshape(1, D), bb.reshape(1, D)],
                          axis=1).astype(jnp.float32)                 # (1, 2D)
    wct = wc.T.astype(matmul_dtype)                                   # (C, D)
    bc_col = bc.reshape(C, 1).astype(jnp.float32)                     # (C, 1)
    return wab, bab, wct, bc_col


def attn_net_gated(x, fused_params, *, tile_n=1024,
                   vmem_limit_bytes=32 * 1024 * 1024):
    """Pallas implementation of Attn_Net_Gated.forward. Returns (A, x).

    x:            (N, L) tokens x features; bf16 recommended (f32 also works).
    fused_params: output of prepare_attn_params().
    tile_n:       rows per grid step; multiple of 128.  1024 for v6e/v7x,
                  512 for v5e.  N need NOT be a multiple (ragged last block).
    """
    wab, bab, wct, bc_col = fused_params
    N, L = x.shape
    C, D = wct.shape
    assert wab.shape == (L, 2 * D)
    assert tile_n % 128 == 0, "tile_n must be a multiple of 128"

    grid_n = pl.cdiv(N, tile_n)
    kernel = functools.partial(_gated_attn_kernel, hidden_d=D)

    a_t = pl.pallas_call(
        kernel,
        out_shape=jax.ShapeDtypeStruct((C, N), jnp.float32),
        grid_spec=pltpu.PrefetchScalarGridSpec(
            num_scalar_prefetch=0,
            grid=(grid_n,),
            in_specs=[
                pl.BlockSpec((tile_n, L), lambda i: (i, 0)),   # x tile (ragged last)
                pl.BlockSpec((L, 2 * D), lambda i: (0, 0)),    # fused Wa|Wb (resident)
                pl.BlockSpec((1, 2 * D), lambda i: (0, 0)),    # fused ba|bb (resident)
                pl.BlockSpec((C, D), lambda i: (0, 0)),        # Wc^T (resident)
                pl.BlockSpec((C, 1), lambda i: (0, 0)),        # bc (resident)
            ],
            out_specs=pl.BlockSpec((C, tile_n), lambda i: (0, i)),
        ),
        compiler_params=pltpu.CompilerParams(
            dimension_semantics=("parallel",),
            vmem_limit_bytes=vmem_limit_bytes),
    )(x, wab, bab, wct, bc_col)

    A = a_t.T                                                  # (N, C), f32 logits
    # Module returns the raw input alongside the attention scores.
    return A, x


def _init_params(key, L, D, C, dtype=jnp.float32):
    """Deterministic synthetic parameters (shapes match the nn.Linear layers)."""
    ks = jax.random.split(key, 6)
    wa = jax.random.normal(ks[0], (L, D), dtype) * 0.02
    ba = jax.random.normal(ks[1], (D,), dtype) * 0.02
    wb = jax.random.normal(ks[2], (L, D), dtype) * 0.02
    bb = jax.random.normal(ks[3], (D,), dtype) * 0.02
    wc = jax.random.normal(ks[4], (D, C), dtype) * 0.02
    bc = jax.random.normal(ks[5], (C,), dtype) * 0.02
    return wa, ba, wb, bb, wc, bc


if __name__ == "__main__":
    # Module-default feature sizes (L=1024, D=256, n_classes=1); a small MIL
    # bag N=1000 that is NOT a multiple of tile_n, exercising the ragged
    # last-block path (no wrapper-side padding).  tile_n=256 keeps this test
    # small while giving 4 grid steps; production would use 512-1024.
    N, L, D, C = 1000, 1024, 256, 1
    tile_n = 256

    key = jax.random.PRNGKey(0)
    kx, kp = jax.random.split(key)
    # Streamed input in bf16 (no per-call cast); params prepared/fused once.
    x = jax.random.normal(kx, (N, L), jnp.float32).astype(jnp.bfloat16)
    params_f32 = _init_params(kp, L, D, C)
    fused = prepare_attn_params(*params_f32)          # one-time fusion + bf16 cast

    A, x_out = attn_net_gated(x, fused, tile_n=tile_n)
    A = jax.block_until_ready(A)

    # Pure-JAX reference with the SAME bf16-rounded operands (f32 accumulate),
    # so differences come only from MXU accumulation order / EUP approximations.
    wab, bab, wct, bc_col = fused
    hi = lax.Precision.HIGHEST
    xf = x.astype(jnp.float32)
    h_ref = jnp.dot(xf, wab.astype(jnp.float32), precision=hi) + bab
    a_ref = jnp.tanh(h_ref[:, :D])
    b_ref = jax.nn.sigmoid(h_ref[:, D:])
    gated_ref = (a_ref * b_ref).astype(jnp.bfloat16).astype(jnp.float32)
    A_ref = (jnp.dot(gated_ref, wct.astype(jnp.float32).T, precision=hi)
             + bc_col.reshape(1, C))

    assert A.shape == (N, C)
    assert jnp.allclose(A, A_ref, atol=2e-3, rtol=2e-3), (
        float(jnp.max(jnp.abs(A - A_ref))))
    assert x_out is x

    print("KERNEL_OK")
</pallas_src>

<mosaic_0001>
module attributes {stable_mosaic.version = 11 : i64} {
  func.func @_gated_attn_kernel(%arg0: i32, %arg1: memref<256x1024xbf16, #tpu.memory_space<vmem>>, %arg2: memref<1024x512xbf16, #tpu.memory_space<vmem>>, %arg3: memref<1x512xf32, #tpu.memory_space<vmem>>, %arg4: memref<1x256xbf16, #tpu.memory_space<vmem>>, %arg5: memref<1x1xf32, #tpu.memory_space<vmem>>, %arg6: memref<1x256xf32, #tpu.memory_space<vmem>>) attributes {dimension_semantics = [#tpu.dimension_semantics<parallel>], iteration_bounds = array<i64: 4>, scalar_prefetch = 0 : i64, scratch_operands = 0 : i64, tpu.core_type = #tpu.core_type<tc>, window_params = [{transform_indices = @transform_0, window_bounds = array<i64: 256, 1024>}, {pipeline_mode = #tpu.pipeline_mode<synchronous>, transform_indices = @transform_1, window_bounds = array<i64: 1024, 512>}, {pipeline_mode = #tpu.pipeline_mode<synchronous>, transform_indices = @transform_2, window_bounds = array<i64: 1, 512>}, {pipeline_mode = #tpu.pipeline_mode<synchronous>, transform_indices = @transform_3, window_bounds = array<i64: 1, 256>}, {pipeline_mode = #tpu.pipeline_mode<synchronous>, transform_indices = @transform_4, window_bounds = array<i64: 1, 1>}, {transform_indices = @transform_5, window_bounds = array<i64: 1, 256>}]} {
    %c0 = arith.constant 0 : index
    %c0_0 = arith.constant 0 : index
    %0 = vector.load %arg1[%c0, %c0_0] : memref<256x1024xbf16, #tpu.memory_space<vmem>>, vector<256x1024xbf16>
    %c0_1 = arith.constant 0 : index
    %c0_2 = arith.constant 0 : index
    %1 = vector.load %arg2[%c0_1, %c0_2] : memref<1024x512xbf16, #tpu.memory_space<vmem>>, vector<1024x512xbf16>
    %cst = arith.constant dense<0.000000e+00> : vector<256x512xf32>
    %2 = tpu.matmul %0, %1, %cst {dimension_numbers = #tpu.dot_dimension_numbers<[1], [0], [0], [1], [0, 0, 1, 1], [], []>} : vector<256x1024xbf16>, vector<1024x512xbf16>, vector<256x512xf32> -> vector<256x512xf32>
    %c0_3 = arith.constant 0 : index
    %c0_4 = arith.constant 0 : index
    %3 = vector.load %arg3[%c0_3, %c0_4] : memref<1x512xf32, #tpu.memory_space<vmem>>, vector<1x512xf32>
    %4 = vector.broadcast %3 : vector<1x512xf32> to vector<256x512xf32>
    %5 = arith.addf %2, %4 : vector<256x512xf32>
    %6 = vector.extract_strided_slice %5 {offsets = [0, 0], sizes = [256, 256], strides = [1, 1]} : vector<256x512xf32> to vector<256x256xf32>
    %7 = math.tanh %6 : vector<256x256xf32>
    %8 = vector.extract_strided_slice %5 {offsets = [0, 256], sizes = [256, 256], strides = [1, 1]} : vector<256x512xf32> to vector<256x256xf32>
    %9 = arith.negf %8 : vector<256x256xf32>
    %10 = math.exp %9 : vector<256x256xf32>
    %cst_5 = arith.constant 1.000000e+00 : f32
    %11 = vector.broadcast %cst_5 : f32 to vector<256x256xf32>
    %12 = arith.addf %11, %10 : vector<256x256xf32>
    %13 = arith.divf %11, %12 : vector<256x256xf32>
    %14 = arith.mulf %7, %13 : vector<256x256xf32>
    %15 = arith.truncf %14 : vector<256x256xf32> to vector<256x256xbf16>
    %c0_6 = arith.constant 0 : index
    %c0_7 = arith.constant 0 : index
    %16 = vector.load %arg4[%c0_6, %c0_7] : memref<1x256xbf16, #tpu.memory_space<vmem>>, vector<1x256xbf16>
    %cst_8 = arith.constant dense<0.000000e+00> : vector<1x256xf32>
    %17 = tpu.matmul %16, %15, %cst_8 {dimension_numbers = #tpu.dot_dimension_numbers<[1], [1], [0], [0], [0, 0, 1, 0], [], []>} : vector<1x256xbf16>, vector<256x256xbf16>, vector<1x256xf32> -> vector<1x256xf32>
    %c0_9 = arith.constant 0 : index
    %c0_10 = arith.constant 0 : index
    %18 = vector.load %arg5[%c0_9, %c0_10] : memref<1x1xf32, #tpu.memory_space<vmem>>, vector<1x1xf32>
    %19 = vector.broadcast %18 : vector<1x1xf32> to vector<1x256xf32>
    %20 = arith.addf %17, %19 : vector<1x256xf32>
    %c0_11 = arith.constant 0 : index
    %c0_12 = arith.constant 0 : index
    %21 = vector.load %arg6[%c0_11, %c0_12] : memref<1x256xf32, #tpu.memory_space<vmem>>, vector<1x256xf32>
    tpu.vector_store %arg6[%c0_11, %c0_12], %20 {strides = array<i32>} : memref<1x256xf32, #tpu.memory_space<vmem>>, vector<1x256xf32>,
    return
  }
  func.func @transform_0(%arg0: i32) -> (i32, i32) {
    %c0_i32 = arith.constant 0 : i32
    %c0_i32_0 = arith.constant 0 : i32
    return %arg0, %c0_i32 : i32, i32
  }
  func.func @transform_1(%arg0: i32) -> (i32, i32) {
    %c0_i32 = arith.constant 0 : i32
    %c0_i32_0 = arith.constant 0 : i32
    %c0_i32_1 = arith.constant 0 : i32
    return %c0_i32, %c0_i32_0 : i32, i32
  }
  func.func @transform_2(%arg0: i32) -> (i32, i32) {
    %c0_i32 = arith.constant 0 : i32
    %c0_i32_0 = arith.constant 0 : i32
    %c0_i32_1 = arith.constant 0 : i32
    return %c0_i32, %c0_i32_0 : i32, i32
  }
  func.func @transform_3(%arg0: i32) -> (i32, i32) {
    %c0_i32 = arith.constant 0 : i32
    %c0_i32_0 = arith.constant 0 : i32
    %c0_i32_1 = arith.constant 0 : i32
    return %c0_i32, %c0_i32_0 : i32, i32
  }
  func.func @transform_4(%arg0: i32) -> (i32, i32) {
    %c0_i32 = arith.constant 0 : i32
    %c0_i32_0 = arith.constant 0 : i32
    %c0_i32_1 = arith.constant 0 : i32
    return %c0_i32, %c0_i32_0 : i32, i32
  }
  func.func @transform_5(%arg0: i32) -> (i32, i32) {
    %c0_i32 = arith.constant 0 : i32
    %c0_i32_0 = arith.constant 0 : i32
    return %c0_i32, %arg0 : i32, i32
  }
}

</mosaic_0001>

<llo_original>
// kernel: tpu_custom_call.1
$region0: #{tpu_custom_call.1}
  #allocation0 [shape = 'u32[]', space=smem, size = 0x4, offset = 0x4, fixed_abs, tag = 'smem constant byte address 0x4 - core index']
  #allocation1 [shape = 'u32[144,128]{1,0:T(1,128)}', space=vmem, size = 0x12000, scoped, tag = 'internal scratch']
  #allocation2 [shape = 'f32[1,1]{1,0:T(1,128)S(1)}', space=vmem, size = 0x200, scoped, tag = 'scoped memory for tpu_custom_call.1']
  %s0 = inlined_call_operand.hbm [shape: bf16[1000,1024], index: 0, kind: input, shape index: {}]
  %s1 = inlined_call_operand.hbm [shape: bf16[1024,512], index: 1, kind: input, shape index: {}]
  %s2 = inlined_call_operand.hbm [shape: f32[1,512], index: 2, kind: input, shape index: {}]
  %s3 = inlined_call_operand.hbm [shape: bf16[1,256], index: 3, kind: input, shape index: {}]
  %s4 = inlined_call_operand.<no memory space> [shape: f32[1,1], index: 4, kind: input, shape index: {}]
  %s5 = inlined_call_operand.hbm [shape: f32[1,1000], index: 5, kind: output, shape index: {}]
  %s6 = sld [smem:[#allocation0]]
  $region69: #{tpu_custom_call.1} parent=0
    _
  %s8 = ssub.s32 1, %s6
  %s9 = scalar_select 0, %s8, %s6
  %v10 = vstv %s4
  %11 = vst [vmem:[#allocation2] sm:$0x1] %v10
  $region1: #{tpu_custom_call.1} parent=0
    #allocation3 [shape = 'u8[1048576]{0}', space=vmem, size = 0x100000, scoped, tag = 'input window, operand 0']
    #allocation4 [shape = 's32[2]{0}', space=sflag, size = 0x8, scoped, tag = 'scoped memory for tpu_custom_call.1']
    #allocation5 [shape = 's32[2]{0}', space=sflag, size = 0x8, scoped, tag = 'scoped memory for tpu_custom_call.1']
    #allocation6 [shape = 'u8[1048576]{0}', space=vmem, size = 0x100000, scoped, tag = 'input window, operand 1, single buffered']
    #allocation7 [shape = 's32[1]{0}', space=sflag, size = 0x4, scoped, tag = 'scoped memory for tpu_custom_call.1']
    #allocation8 [shape = 'u8[2048]{0}', space=vmem, size = 0x800, scoped, tag = 'input window, operand 2, single buffered']
    #allocation9 [shape = 'u8[1024]{0}', space=vmem, size = 0x400, scoped, tag = 'input window, operand 3, single buffered']
    #allocation10 [shape = 's32[1]{0}', space=sflag, size = 0x4, scoped, tag = 'scoped memory for tpu_custom_call.1']
    #allocation11 [shape = 'u8[2048]{0}', space=vmem, size = 0x800, scoped, tag = 'output window, operand 0']
    %12 = vsyncpa [#allocation4], 0
    %s13 = scalar_lea.sflag [#allocation4], 1
    %14 = vsyncpa %s13, 0
    %15 = vsyncpa [#allocation7], 0
    %16 = vsyncpa [#allocation10], 0
    %17 = vsyncpa [#allocation5], 0
    %s18 = scalar_lea.sflag [#allocation5], 1
    %19 = vsyncpa %s18, 0
    loop: start=0, step=1, limit=6
    $region2: #{tpu_custom_call.1} parent=1 // loop_pre_header
      _
    $region3: #{tpu_custom_call.1} parent=1 // loop_header
      %s21 = sphi 0, %s25
      %p22 = scmp.ge.s32.totalorder %s21, 6
      %s31 = sphi 0, %s33
      %s34 = sphi 0, %s31
      %s35 = sphi 0, %s34
      %s51 = sphi 0, %s35
      %s55 = sphi 0, %s55
      %s57 = sphi 0, %s55
      %s58 = sphi 0, %s57
      %s72 = sphi 0, %s58
      %s76 = sphi 0, %s76
      %s78 = sphi 0, %s76
      %s79 = sphi 0, %s78
      %s93 = sphi 0, %s79
      %s97 = sphi 0, %s97
      %s99 = sphi 0, %s97
      %s100 = sphi 0, %s99
      %s114 = sphi 0, %s100
      %s118 = sphi 0, %s118
      %s120 = sphi 0, %s118
      %s121 = sphi 0, %s120
      %s135 = sphi 0, %s121
      %s141 = sphi 0, %s143
      %s144 = sphi 0, %s141
      %s145 = sphi 0, %s144
      %s161 = sphi 0, %s145
    $region4: #{tpu_custom_call.1} parent=1 // loop_header_branch
      %24 = sbr.rel (%p22) target = $region8
    $region5: #{tpu_custom_call.1} parent=1 // loop_body
      %s26 = ssub.s32 %s21, 1
      %s27 = ssub.s32 %s21, 2
      %s28 = sadd.s32 %s21, 1
      %s29 = ssub.s32 %s21, %s28
      %p30 = scmp.eq.s32.totalorder %s29, 0
      %s32 = sadd.s32 %s31, 1
      %s33 = scalar_select %p30, %s31, %s32
      %p36 = pneg %p30
      %p37 = scmp.eq.s32.totalorder %s21, 3
      %p38 = por %p36, %p37
      %p39 = scmp.ne.s32.totalorder %s31, %s34
      %p40 = scmp.eq.s32.totalorder %s21, 0
      %p41 = por %p39, %p40
      %p42 = scmp.ne.s32.totalorder %s31, %s34
      %p43 = scmp.eq.s32.totalorder %s26, 3
      %p44 = por %p42, %p43
      %p45 = scmp.ne.s32.totalorder %s34, %s35
      %p46 = scmp.eq.s32.totalorder %s26, 0
      %p47 = por %p45, %p46
      %p48 = scmp.ne.s32.totalorder %s34, %s35
      %p49 = scmp.eq.s32.totalorder %s27, 3
      %p50 = por %p48, %p49
      %p52 = scmp.ne.s32.totalorder %s35, %s51
      %p53 = scmp.eq.s32.totalorder %s27, 0
      %p54 = por %p52, %p53
      %s56 = sadd.s32 %s55, 1
      %p59 = scmp.eq.s32.totalorder %s21, 3
      %p60 = scmp.ne.s32.totalorder %s55, %s57
      %p61 = scmp.eq.s32.totalorder %s21, 0
      %p62 = por %p60, %p61
      %p63 = scmp.ne.s32.totalorder %s55, %s57
      %p64 = scmp.eq.s32.totalorder %s26, 3
      %p65 = por %p63, %p64
      %p66 = scmp.ne.s32.totalorder %s57, %s58
      %p67 = scmp.eq.s32.totalorder %s26, 0
      %p68 = por %p66, %p67
      %p69 = scmp.ne.s32.totalorder %s57, %s58
      %p70 = scmp.eq.s32.totalorder %s27, 3
      %p71 = por %p69, %p70
      %p73 = scmp.ne.s32.totalorder %s58, %s72
      %p74 = scmp.eq.s32.totalorder %s27, 0
      %p75 = por %p73, %p74
      %s77 = sadd.s32 %s76, 1
      %p80 = scmp.eq.s32.totalorder %s21, 3
      %p81 = scmp.ne.s32.totalorder %s76, %s78
      %p82 = scmp.eq.s32.totalorder %s21, 0
      %p83 = por %p81, %p82
      %p84 = scmp.ne.s32.totalorder %s76, %s78
      %p85 = scmp.eq.s32.totalorder %s26, 3
      %p86 = por %p84, %p85
      %p87 = scmp.ne.s32.totalorder %s78, %s79
      %p88 = scmp.eq.s32.totalorder %s26, 0
      %p89 = por %p87, %p88
      %p90 = scmp.ne.s32.totalorder %s78, %s79
      %p91 = scmp.eq.s32.totalorder %s27, 3
      %p92 = por %p90, %p91
      %p94 = scmp.ne.s32.totalorder %s79, %s93
      %p95 = scmp.eq.s32.totalorder %s27, 0
      %p96 = por %p94, %p95
      %s98 = sadd.s32 %s97, 1
      %p101 = scmp.eq.s32.totalorder %s21, 3
      %p102 = scmp.ne.s32.totalorder %s97, %s99
      %p103 = scmp.eq.s32.totalorder %s21, 0
      %p104 = por %p102, %p103
      %p105 = scmp.ne.s32.totalorder %s97, %s99
      %p106 = scmp.eq.s32.totalorder %s26, 3
      %p107 = por %p105, %p106
      %p108 = scmp.ne.s32.totalorder %s99, %s100
      %p109 = scmp.eq.s32.totalorder %s26, 0
      %p110 = por %p108, %p109
      %p111 = scmp.ne.s32.totalorder %s99, %s100
      %p112 = scmp.eq.s32.totalorder %s27, 3
      %p113 = por %p111, %p112
      %p115 = scmp.ne.s32.totalorder %s100, %s114
      %p116 = scmp.eq.s32.totalorder %s27, 0
      %p117 = por %p115, %p116
      %s119 = sadd.s32 %s118, 1
      %p122 = scmp.eq.s32.totalorder %s21, 3
      %p123 = scmp.ne.s32.totalorder %s118, %s120
      %p124 = scmp.eq.s32.totalorder %s21, 0
      %p125 = por %p123, %p124
      %p126 = scmp.ne.s32.totalorder %s118, %s120
      %p127 = scmp.eq.s32.totalorder %s26, 3
      %p128 = por %p126, %p127
      %p129 = scmp.ne.s32.totalorder %s120, %s121
      %p130 = scmp.eq.s32.totalorder %s26, 0
      %p131 = por %p129, %p130
      %p132 = scmp.ne.s32.totalorder %s120, %s121
      %p133 = scmp.eq.s32.totalorder %s27, 3
      %p134 = por %p132, %p133
      %p136 = scmp.ne.s32.totalorder %s121, %s135
      %p137 = scmp.eq.s32.totalorder %s27, 0
      %p138 = por %p136, %p137
      %s139 = ssub.s32 %s21, %s28
      %p140 = scmp.eq.s32.totalorder %s139, 0
      %s142 = sadd.s32 %s141, 1
      %s143 = scalar_select %p140, %s141, %s142
      %p146 = pneg %p140
      %p147 = scmp.eq.s32.totalorder %s21, 3
      %p148 = por %p146, %p147
      %p149 = scmp.ne.s32.totalorder %s141, %s144
      %p150 = scmp.eq.s32.totalorder %s21, 0
      %p151 = por %p149, %p150
      %p152 = scmp.ne.s32.totalorder %s141, %s144
      %p153 = scmp.eq.s32.totalorder %s26, 3
      %p154 = por %p152, %p153
      %p155 = scmp.ne.s32.totalorder %s144, %s145
      %p156 = scmp.eq.s32.totalorder %s26, 0
      %p157 = por %p155, %p156
      %p158 = scmp.ne.s32.totalorder %s144, %s145
      %p159 = scmp.eq.s32.totalorder %s27, 3
      %p160 = por %p158, %p159
      %p162 = scmp.ne.s32.totalorder %s145, %s161
      %p163 = scmp.eq.s32.totalorder %s27, 0
      %p164 = por %p162, %p163
      %p165 = scmp.le.s32.totalorder 1, %s21
      %p166 = scmp.lt.s32.totalorder %s21, 5
      %p167 = pnand %p165, %p166
      %p168 = pneg %p167
      // Predicated region
      $region9: #{tpu_custom_call.1} parent=5 // pred_check
        _
      $region10: #{tpu_custom_call.1} parent=5 // pred_check_branch
        %170 = sbr.rel (%p167) target = $region12
      $region11: #{tpu_custom_call.1} parent=5 // pred_region
        %s171 = ssub.s32 %s21, 1
        // Predicated region
        $region13: #{tpu_custom_call.1} parent=11 // pred_check
          %p172 = pneg %p68
        $region14: #{tpu_custom_call.1} parent=11 // pred_check_branch
          %174 = sbr.rel (%p172) target = $region16
        $region15: #{tpu_custom_call.1} parent=11 // pred_region
          %s176 = ssub.s32 32768, 32768
          %177 = vsyncadd [#allocation7], %s176
          %s178 = sshll.u32 [#allocation6], 4
          %s179 = int_to_ptr.vmem [resolvable:$true] %s178
          %184 = dma.hbm_to_vmem [thread:$0]  %s1, 32768, %s179, [#allocation7], 256, 256, 16
        $region16: #{tpu_custom_call.1} parent=11 // pred_fallthru
          _
        // Predicated region
        $region17: #{tpu_custom_call.1} parent=11 // pred_check
          %p185 = pneg %p89
        $region18: #{tpu_custom_call.1} parent=11 // pred_check_branch
          %187 = sbr.rel (%p185) target = $region20
        $region19: #{tpu_custom_call.1} parent=11 // pred_region
          %s189 = ssub.s32 64, 64
          %190 = vsyncadd [#allocation7], %s189
          %s192 = sshll.u32 [#allocation8], 4
          %s193 = int_to_ptr.vmem [resolvable:$true] %s192
          %195 = dma.hbm_to_vmem [thread:$0]  %s2, 64, %s193, [#allocation7]
        $region20: #{tpu_custom_call.1} parent=11 // pred_fallthru
          _
        // Predicated region
        $region21: #{tpu_custom_call.1} parent=11 // pred_check
          %p196 = pneg %p110
        $region22: #{tpu_custom_call.1} parent=11 // pred_check_branch
          %198 = sbr.rel (%p196) target = $region24
        $region23: #{tpu_custom_call.1} parent=11 // pred_region
          %s200 = ssub.s32 32, 32
          %201 = vsyncadd [#allocation10], %s200
          %s203 = sshll.u32 [#allocation9], 4
          %s204 = int_to_ptr.vmem [resolvable:$true] %s203
          %206 = dma.hbm_to_vmem [thread:$0]  %s3, 32, %s204, [#allocation10]
        $region24: #{tpu_custom_call.1} parent=11 // pred_fallthru
          _
        // Predicated region
        $region25: #{tpu_custom_call.1} parent=11 // pred_check
          %p207 = pneg %p131
        $region26: #{tpu_custom_call.1} parent=11 // pred_check_branch
          %209 = sbr.rel (%p207) target = $region28
        $region27: #{tpu_custom_call.1} parent=11 // pred_region
          _
        $region28: #{tpu_custom_call.1} parent=11 // pred_fallthru
          _
      $region12: #{tpu_custom_call.1} parent=5 // pred_fallthru
        _
      %p210 = scmp.lt.s32.totalorder %s21, 4
      // Predicated region
      $region29: #{tpu_custom_call.1} parent=5 // pred_check
        %p211 = pneg %p210
      $region30: #{tpu_custom_call.1} parent=5 // pred_check_branch
        %213 = sbr.rel (%p211) target = $region32
      $region31: #{tpu_custom_call.1} parent=5 // pred_region
        // Predicated region
        $region33: #{tpu_custom_call.1} parent=31 // pred_check
          %p214 = pneg %p41
        $region34: #{tpu_custom_call.1} parent=31 // pred_check_branch
          %216 = sbr.rel (%p214) target = $region36
        $region35: #{tpu_custom_call.1} parent=31 // pred_region
          %s217 = sand.u32 %s31, 1
          %s218 = scalar_lea.sflag [#allocation4], %s217
          %s219 = sand.u32 %s31, 1
          %s220 = smul.addr %s219, 1024
          %s221 = scalar_lea.vmem [#allocation3], %s220
          %s222 = smul.u32 32, %s21
          %s223 = ssub.s32 125, %s222
          %p224 = scmp.lt.s32.totalorder %s223, 32
          %s225 = scalar_select %p224, %s223, 32
          %s226 = smul.u32 64, %s225
          %s227 = smul.u32 %s226, 8
          %s229 = ssub.s32 16384, %s227
          %230 = vsyncadd %s218, %s229
          %p231 = scmp.ne.s32.totalorder 0, %s227
          %s232 = smul.addr %s222, 8
          %s233 = smul.addr %s232, 64
          %s234 = scalar_lea.hbm %s0, %s233
          %s235 = smul.u32 32, %s225
          %s236 = sshll.u32 %s221, 4
          %s237 = int_to_ptr.vmem [resolvable:$true] %s236
          %s238 = sshll.u32 %s235, 4
          %242 = dma.hbm_to_vmem [thread:$0]  (%p231), %s234, %s238, %s237, %s218, 512, 512, 32
        $region36: #{tpu_custom_call.1} parent=31 // pred_fallthru
          _
      $region32: #{tpu_custom_call.1} parent=5 // pred_fallthru
        _
      %p243 = scmp.le.s32.totalorder 1, %s21
      %p244 = scmp.lt.s32.totalorder %s21, 5
      %p245 = pnand %p243, %p244
      %p246 = pneg %p245
      // Predicated region
      $region37: #{tpu_custom_call.1} parent=5 // pred_check
        _
      $region38: #{tpu_custom_call.1} parent=5 // pred_check_branch
        %248 = sbr.rel (%p245) target = $region40
      $region39: #{tpu_custom_call.1} parent=5 // pred_region
        %s249 = ssub.s32 %s21, 1
        %s250 = sand.u32 %s34, 1
        %s251 = scalar_lea.sflag [#allocation4], %s250
        %s252 = sand.u32 %s34, 1
        %s253 = smul.addr %s252, 1024
        %s254 = scalar_lea.vmem [#allocation3], %s253
        // Predicated region
        $region41: #{tpu_custom_call.1} parent=39 // pred_check
          %p255 = pneg %p47
        $region42: #{tpu_custom_call.1} parent=39 // pred_check_branch
          %257 = sbr.rel (%p255) target = $region44
        $region43: #{tpu_custom_call.1} parent=39 // pred_region
          %258 = dma.done %s251, 16384
        $region44: #{tpu_custom_call.1} parent=39 // pred_fallthru
          _
        // Predicated region
        $region45: #{tpu_custom_call.1} parent=39 // pred_check
          %p259 = pneg %p68
        $region46: #{tpu_custom_call.1} parent=39 // pred_check_branch
          %261 = sbr.rel (%p259) target = $region48
        $region47: #{tpu_custom_call.1} parent=39 // pred_region
          %262 = dma.done [#allocation7], 32768
        $region48: #{tpu_custom_call.1} parent=39 // pred_fallthru
          _
        // Predicated region
        $region49: #{tpu_custom_call.1} parent=39 // pred_check
          %p263 = pneg %p89
        $region50: #{tpu_custom_call.1} parent=39 // pred_check_branch
          %265 = sbr.rel (%p263) target = $region52
        $region51: #{tpu_custom_call.1} parent=39 // pred_region
          %266 = dma.done [#allocation7], 64
        $region52: #{tpu_custom_call.1} parent=39 // pred_fallthru
          _
        // Predicated region
        $region53: #{tpu_custom_call.1} parent=39 // pred_check
          %p267 = pneg %p110
        $region54: #{tpu_custom_call.1} parent=39 // pred_check_branch
          %269 = sbr.rel (%p267) target = $region56
        $region55: #{tpu_custom_call.1} parent=39 // pred_region
          %270 = dma.done [#allocation10], 32
        $region56: #{tpu_custom_call.1} parent=39 // pred_fallthru
          _
        %s271 = sand.u32 %s34, 1
        %s272 = scalar_lea.sflag [#allocation4], %s271
        %s273 = sand.u32 %s34, 1
        %s274 = smul.addr %s273, 1024
        %s275 = scalar_lea.vmem [#allocation3], %s274
        %p276 = pneg %p47
        %p277 = pneg %p44
        %p278 = pneg %p68
        %p279 = pneg %p65
        %p280 = pneg %p89
        %p281 = pneg %p86
        %p282 = pneg %p110
        %p283 = pneg %p107
        %p284 = pneg %p131
        %p285 = pneg %p128
        %p286 = pneg %p157
        %p287 = pneg %p154
        %s288 = sand.u32 %s144, 1
        %s289 = scalar_lea.sflag [#allocation5], %s288
        %s290 = sand.u32 %s144, 1
        %s291 = smul.addr %s290, 2
        %s292 = scalar_lea.vmem [#allocation11], %s291
        %s293 = smul.u32 32, %s26
        %s294 = ssub.s32 125, %s293
        %p295 = scmp.lt.s32.totalorder %s294, 32
        %s296 = scalar_select %p295, %s294, 32
        %s297 = smul.u32 64, %s296
        %s298 = smul.u32 %s297, 8
        %s299 = smul.u32 2, %s26
        %v300 = vld [vmem:[%s254] sm:$0xff]
        %v301 = vld [vmem:[%s254 + $0x8] sm:$0xff]
        %v302 = vld [vmem:[%s254 + $0x10] sm:$0xff]
        %v303 = vld [vmem:[%s254 + $0x18] sm:$0xff]
        %v304 = vld [vmem:[%s254 + $0x20] sm:$0xff]
        %v305 = vld [vmem:[%s254 + $0x28] sm:$0xff]
        %v306 = vld [vmem:[%s254 + $0x30] sm:$0xff]
        %v307 = vld [vmem:[%s254 + $0x38] sm:$0xff]
        %v308 = vld [vmem:[%s254 + $0x40] sm:$0xff]
        %v309 = vld [vmem:[%s254 + $0x48] sm:$0xff]
        %v310 = vld [vmem:[%s254 + $0x50] sm:$0xff]
        %v311 = vld [vmem:[%s254 + $0x58] sm:$0xff]
        %v312 = vld [vmem:[%s254 + $0x60] sm:$0xff]
        %v313 = vld [vmem:[%s254 + $0x68] sm:$0xff]
        %v314 = vld [vmem:[%s254 + $0x70] sm:$0xff]
        %v315 = vld [vmem:[%s254 + $0x78] sm:$0xff]
        %v316 = vld [vmem:[%s254 + $0x80] sm:$0xff]
        %v317 = vld [vmem:[%s254 + $0x88] sm:$0xff]
        %v318 = vld [vmem:[%s254 + $0x90] sm:$0xff]
        %v319 = vld [vmem:[%s254 + $0x98] sm:$0xff]
        %v320 = vld [vmem:[%s254 + $0xa0] sm:$0xff]
        %v321 = vld [vmem:[%s254 + $0xa8] sm:$0xff]
        %v322 = vld [vmem:[%s254 + $0xb0] sm:$0xff]
        %v323 = vld [vmem:[%s254 + $0xb8] sm:$0xff]
        %v324 = vld [vmem:[%s254 + $0xc0] sm:$0xff]
        %v325 = vld [vmem:[%s254 + $0xc8] sm:$0xff]
        %v326 = vld [vmem:[%s254 + $0xd0] sm:$0xff]
        %v327 = vld [vmem:[%s254 + $0xd8] sm:$0xff]
        %v328 = vld [vmem:[%s254 + $0xe0] sm:$0xff]
        %v329 = vld [vmem:[%s254 + $0xe8] sm:$0xff]
        %v330 = vld [vmem:[%s254 + $0xf0] sm:$0xff]
        %v331 = vld [vmem:[%s254 + $0xf8] sm:$0xff]
        %v332 = vld [vmem:[%s254 + $0x100] sm:$0xff]
        %v333 = vld [vmem:[%s254 + $0x108] sm:$0xff]
        %v334 = vld [vmem:[%s254 + $0x110] sm:$0xff]
        %v335 = vld [vmem:[%s254 + $0x118] sm:$0xff]
        %v336 = vld [vmem:[%s254 + $0x120] sm:$0xff]
        %v337 = vld [vmem:[%s254 + $0x128] sm:$0xff]
        %v338 = vld [vmem:[%s254 + $0x130] sm:$0xff]
        %v339 = vld [vmem:[%s254 + $0x138] sm:$0xff]
        %v340 = vld [vmem:[%s254 + $0x140] sm:$0xff]
        %v341 = vld [vmem:[%s254 + $0x148] sm:$0xff]
        %v342 = vld [vmem:[%s254 + $0x150] sm:$0xff]
        %v343 = vld [vmem:[%s254 + $0x158] sm:$0xff]
        %v344 = vld [vmem:[%s254 + $0x160] sm:$0xff]
        %v345 = vld [vmem:[%s254 + $0x168] sm:$0xff]
        %v346 = vld [vmem:[%s254 + $0x170] sm:$0xff]
        %v347 = vld [vmem:[%s254 + $0x178] sm:$0xff]
        %v348 = vld [vmem:[%s254 + $0x180] sm:$0xff]
        %v349 = vld [vmem:[%s254 + $0x188] sm:$0xff]
        %v350 = vld [vmem:[%s254 + $0x190] sm:$0xff]
        %v351 = vld [vmem:[%s254 + $0x198] sm:$0xff]
        %v352 = vld [vmem:[%s254 + $0x1a0] sm:$0xff]
        %v353 = vld [vmem:[%s254 + $0x1a8] sm:$0xff]
        %v354 = vld [vmem:[%s254 + $0x1b0] sm:$0xff]
        %v355 = vld [vmem:[%s254 + $0x1b8] sm:$0xff]
        %v356 = vld [vmem:[%s254 + $0x1c0] sm:$0xff]
        %v357 = vld [vmem:[%s254 + $0x1c8] sm:$0xff]
        %v358 = vld [vmem:[%s254 + $0x1d0] sm:$0xff]
        %v359 = vld [vmem:[%s254 + $0x1d8] sm:$0xff]
        %v360 = vld [vmem:[%s254 + $0x1e0] sm:$0xff]
        %v361 = vld [vmem:[%s254 + $0x1e8] sm:$0xff]
        %v362 = vld [vmem:[%s254 + $0x1f0] sm:$0xff]
        %v363 = vld [vmem:[%s254 + $0x1f8] sm:$0xff]
        %v364 = vld [vmem:[%s254 + $0x200] sm:$0xff]
        %v365 = vld [vmem:[%s254 + $0x208] sm:$0xff]
        %v366 = vld [vmem:[%s254 + $0x210] sm:$0xff]
        %v367 = vld [vmem:[%s254 + $0x218] sm:$0xff]
        %v368 = vld [vmem:[%s254 + $0x220] sm:$0xff]
        %v369 = vld [vmem:[%s254 + $0x228] sm:$0xff]
        %v370 = vld [vmem:[%s254 + $0x230] sm:$0xff]
        %v371 = vld [vmem:[%s254 + $0x238] sm:$0xff]
        %v372 = vld [vmem:[%s254 + $0x240] sm:$0xff]
        %v373 = vld [vmem:[%s254 + $0x248] sm:$0xff]
        %v374 = vld [vmem:[%s254 + $0x250] sm:$0xff]
        %v375 = vld [vmem:[%s254 + $0x258] sm:$0xff]
        %v376 = vld [vmem:[%s254 + $0x260] sm:$0xff]
        %v377 = vld [vmem:[%s254 + $0x268] sm:$0xff]
        %v378 = vld [vmem:[%s254 + $0x270] sm:$0xff]
        %v379 = vld [vmem:[%s254 + $0x278] sm:$0xff]
        %v380 = vld [vmem:[%s254 + $0x280] sm:$0xff]
        %v381 = vld [vmem:[%s254 + $0x288] sm:$0xff]
        %v382 = vld [vmem:[%s254 + $0x290] sm:$0xff]
        %v383 = vld [vmem:[%s254 + $0x298] sm:$0xff]
        %v384 = vld [vmem:[%s254 + $0x2a0] sm:$0xff]
        %v385 = vld [vmem:[%s254 + $0x2a8] sm:$0xff]
        %v386 = vld [vmem:[%s254 + $0x2b0] sm:$0xff]
        %v387 = vld [vmem:[%s254 + $0x2b8] sm:$0xff]
        %v388 = vld [vmem:[%s254 + $0x2c0] sm:$0xff]
        %v389 = vld [vmem:[%s254 + $0x2c8] sm:$0xff]
        %v390 = vld [vmem:[%s254 + $0x2d0] sm:$0xff]
        %v391 = vld [vmem:[%s254 + $0x2d8] sm:$0xff]
        %v392 = vld [vmem:[%s254 + $0x2e0] sm:$0xff]
        %v393 = vld [vmem:[%s254 + $0x2e8] sm:$0xff]
        %v394 = vld [vmem:[%s254 + $0x2f0] sm:$0xff]
        %v395 = vld [vmem:[%s254 + $0x2f8] sm:$0xff]
        %v396 = vld [vmem:[%s254 + $0x300] sm:$0xff]
        %v397 = vld [vmem:[%s254 + $0x308] sm:$0xff]
        %v398 = vld [vmem:[%s254 + $0x310] sm:$0xff]
        %v399 = vld [vmem:[%s254 + $0x318] sm:$0xff]
        %v400 = vld [vmem:[%s254 + $0x320] sm:$0xff]
        %v401 = vld [vmem:[%s254 + $0x328] sm:$0xff]
        %v402 = vld [vmem:[%s254 + $0x330] sm:$0xff]
        %v403 = vld [vmem:[%s254 + $0x338] sm:$0xff]
        %v404 = vld [vmem:[%s254 + $0x340] sm:$0xff]
        %v405 = vld [vmem:[%s254 + $0x348] sm:$0xff]
        %v406 = vld [vmem:[%s254 + $0x350] sm:$0xff]
        %v407 = vld [vmem:[%s254 + $0x358] sm:$0xff]
        %v408 = vld [vmem:[%s254 + $0x360] sm:$0xff]
        %v409 = vld [vmem:[%s254 + $0x368] sm:$0xff]
        %v410 = vld [vmem:[%s254 + $0x370] sm:$0xff]
        %v411 = vld [vmem:[%s254 + $0x378] sm:$0xff]
        %v412 = vld [vmem:[%s254 + $0x380] sm:$0xff]
        %v413 = vld [vmem:[%s254 + $0x388] sm:$0xff]
        %v414 = vld [vmem:[%s254 + $0x390] sm:$0xff]
        %v415 = vld [vmem:[%s254 + $0x398] sm:$0xff]
        %v416 = vld [vmem:[%s254 + $0x3a0] sm:$0xff]
        %v417 = vld [vmem:[%s254 + $0x3a8] sm:$0xff]
        %v418 = vld [vmem:[%s254 + $0x3b0] sm:$0xff]
        %v419 = vld [vmem:[%s254 + $0x3b8] sm:$0xff]
        %v420 = vld [vmem:[%s254 + $0x3c0] sm:$0xff]
        %v421 = vld [vmem:[%s254 + $0x3c8] sm:$0xff]
        %v422 = vld [vmem:[%s254 + $0x3d0] sm:$0xff]
        %v423 = vld [vmem:[%s254 + $0x3d8] sm:$0xff]
        %v424 = vld [vmem:[%s254 + $0x3e0] sm:$0xff]
        %v425 = vld [vmem:[%s254 + $0x3e8] sm:$0xff]
        %v426 = vld [vmem:[%s254 + $0x3f0] sm:$0xff]
        %v427 = vld [vmem:[%s254 + $0x3f8] sm:$0xff]
        %v428 = vld [vmem:[#allocation6] sm:$0xff]
        %v429 = vld [vmem:[#allocation6 + $0x8] sm:$0xff]
        %v430 = vld [vmem:[#allocation6 + $0x10] sm:$0xff]
        %v431 = vld [vmem:[#allocation6 + $0x18] sm:$0xff]
        %v432 = vld [vmem:[#allocation6 + $0x20] sm:$0xff]
        %v433 = vld [vmem:[#allocation6 + $0x28] sm:$0xff]
        %v434 = vld [vmem:[#allocation6 + $0x30] sm:$0xff]
        %v435 = vld [vmem:[#allocation6 + $0x38] sm:$0xff]
        %v436 = vld [vmem:[#allocation6 + $0x40] sm:$0xff]
        %v437 = vld [vmem:[#allocation6 + $0x48] sm:$0xff]
        %v438 = vld [vmem:[#allocation6 + $0x50] sm:$0xff]
        %v439 = vld [vmem:[#allocation6 + $0x58] sm:$0xff]
        %v440 = vld [vmem:[#allocation6 + $0x60] sm:$0xff]
        %v441 = vld [vmem:[#allocation6 + $0x68] sm:$0xff]
        %v442 = vld [vmem:[#allocation6 + $0x70] sm:$0xff]
        %v443 = vld [vmem:[#allocation6 + $0x78] sm:$0xff]
        %v444 = vld [vmem:[#allocation6 + $0x80] sm:$0xff]
        %v445 = vld [vmem:[#allocation6 + $0x88] sm:$0xff]
        %v446 = vld [vmem:[#allocation6 + $0x90] sm:$0xff]
        %v447 = vld [vmem:[#allocation6 + $0x98] sm:$0xff]
        %v448 = vld [vmem:[#allocation6 + $0xa0] sm:$0xff]
        %v449 = vld [vmem:[#allocation6 + $0xa8] sm:$0xff]
        %v450 = vld [vmem:[#allocation6 + $0xb0] sm:$0xff]
        %v451 = vld [vmem:[#allocation6 + $0xb8] sm:$0xff]
        %v452 = vld [vmem:[#allocation6 + $0xc0] sm:$0xff]
        %v453 = vld [vmem:[#allocation6 + $0xc8] sm:$0xff]
        %v454 = vld [vmem:[#allocation6 + $0xd0] sm:$0xff]
        %v455 = vld [vmem:[#allocation6 + $0xd8] sm:$0xff]
        %v456 = vld [vmem:[#allocation6 + $0xe0] sm:$0xff]
        %v457 = vld [vmem:[#allocation6 + $0xe8] sm:$0xff]
        %v458 = vld [vmem:[#allocation6 + $0xf0] sm:$0xff]
        %v459 = vld [vmem:[#allocation6 + $0xf8] sm:$0xff]
        %v460 = vld [vmem:[#allocation6 + $0x100] sm:$0xff]
        %v461 = vld [vmem:[#allocation6 + $0x108] sm:$0xff]
        %v462 = vld [vmem:[#allocation6 + $0x110] sm:$0xff]
        %v463 = vld [vmem:[#allocation6 + $0x118] sm:$0xff]
        %v464 = vld [vmem:[#allocation6 + $0x120] sm:$0xff]
        %v465 = vld [vmem:[#allocation6 + $0x128] sm:$0xff]
        %v466 = vld [vmem:[#allocation6 + $0x130] sm:$0xff]
        %v467 = vld [vmem:[#allocation6 + $0x138] sm:$0xff]
        %v468 = vld [vmem:[#allocation6 + $0x140] sm:$0xff]
        %v469 = vld [vmem:[#allocation6 + $0x148] sm:$0xff]
        %v470 = vld [vmem:[#allocation6 + $0x150] sm:$0xff]
        %v471 = vld [vmem:[#allocation6 + $0x158] sm:$0xff]
        %v472 = vld [vmem:[#allocation6 + $0x160] sm:$0xff]
        %v473 = vld [vmem:[#allocation6 + $0x168] sm:$0xff]
        %v474 = vld [vmem:[#allocation6 + $0x170] sm:$0xff]
        %v475 = vld [vmem:[#allocation6 + $0x178] sm:$0xff]
        %v476 = vld [vmem:[#allocation6 + $0x180] sm:$0xff]
        %v477 = vld [vmem:[#allocation6 + $0x188] sm:$0xff]
        %v478 = vld [vmem:[#allocation6 + $0x190] sm:$0xff]
        %v479 = vld [vmem:[#allocation6 + $0x198] sm:$0xff]
        %v480 = vld [vmem:[#allocation6 + $0x1a0] sm:$0xff]
        %v481 = vld [vmem:[#allocation6 + $0x1a8] sm:$0xff]
        %v482 = vld [vmem:[#allocation6 + $0x1b0] sm:$0xff]
        %v483 = vld [vmem:[#allocation6 + $0x1b8] sm:$0xff]
        %v484 = vld [vmem:[#allocation6 + $0x1c0] sm:$0xff]
        %v485 = vld [vmem:[#allocation6 + $0x1c8] sm:$0xff]
        %v486 = vld [vmem:[#allocation6 + $0x1d0] sm:$0xff]
        %v487 = vld [vmem:[#allocation6 + $0x1d8] sm:$0xff]
        %v488 = vld [vmem:[#allocation6 + $0x1e0] sm:$0xff]
        %v489 = vld [vmem:[#allocation6 + $0x1e8] sm:$0xff]
        %v490 = vld [vmem:[#allocation6 + $0x1f0] sm:$0xff]
        %v491 = vld [vmem:[#allocation6 + $0x1f8] sm:$0xff]
        %v492 = vld [vmem:[#allocation6 + $0x200] sm:$0xff]
        %v493 = vld [vmem:[#allocation6 + $0x208] sm:$0xff]
        %v494 = vld [vmem:[#allocation6 + $0x210] sm:$0xff]
        %v495 = vld [vmem:[#allocation6 + $0x218] sm:$0xff]
        %v496 = vld [vmem:[#allocation6 + $0x220] sm:$0xff]
        %v497 = vld [vmem:[#allocation6 + $0x228] sm:$0xff]
        %v498 = vld [vmem:[#allocation6 + $0x230] sm:$0xff]
        %v499 = vld [vmem:[#allocation6 + $0x238] sm:$0xff]
        %v500 = vld [vmem:[#allocation6 + $0x240] sm:$0xff]
        %v501 = vld [vmem:[#allocation6 + $0x248] sm:$0xff]
        %v502 = vld [vmem:[#allocation6 + $0x250] sm:$0xff]
        %v503 = vld [vmem:[#allocation6 + $0x258] sm:$0xff]
        %v504 = vld [vmem:[#allocation6 + $0x260] sm:$0xff]
        %v505 = vld [vmem:[#allocation6 + $0x268] sm:$0xff]
        %v506 = vld [vmem:[#allocation6 + $0x270] sm:$0xff]
        %v507 = vld [vmem:[#allocation6 + $0x278] sm:$0xff]
        %v508 = vld [vmem:[#allocation6 + $0x280] sm:$0xff]
        %v509 = vld [vmem:[#allocation6 + $0x288] sm:$0xff]
        %v510 = vld [vmem:[#allocation6 + $0x290] sm:$0xff]
        %v511 = vld [vmem:[#allocation6 + $0x298] sm:$0xff]
        %v512 = vld [vmem:[#allocation6 + $0x2a0] sm:$0xff]
        %v513 = vld [vmem:[#allocation6 + $0x2a8] sm:$0xff]
        %v514 = vld [vmem:[#allocation6 + $0x2b0] sm:$0xff]
        %v515 = vld [vmem:[#allocation6 + $0x2b8] sm:$0xff]
        %v516 = vld [vmem:[#allocation6 + $0x2c0] sm:$0xff]
        %v517 = vld [vmem:[#allocation6 + $0x2c8] sm:$0xff]
        %v518 = vld [vmem:[#allocation6 + $0x2d0] sm:$0xff]
        %v519 = vld [vmem:[#allocation6 + $0x2d8] sm:$0xff]
        %v520 = vld [vmem:[#allocation6 + $0x2e0] sm:$0xff]
        %v521 = vld [vmem:[#allocation6 + $0x2e8] sm:$0xff]
        %v522 = vld [vmem:[#allocation6 + $0x2f0] sm:$0xff]
        %v523 = vld [vmem:[#allocation6 + $0x2f8] sm:$0xff]
        %v524 = vld [vmem:[#allocation6 + $0x300] sm:$0xff]
        %v525 = vld [vmem:[#allocation6 + $0x308] sm:$0xff]
        %v526 = vld [vmem:[#allocation6 + $0x310] sm:$0xff]
        %v527 = vld [vmem:[#allocation6 + $0x318] sm:$0xff]
        %v528 = vld [vmem:[#allocation6 + $0x320] sm:$0xff]
        %v529 = vld [vmem:[#allocation6 + $0x328] sm:$0xff]
        %v530 = vld [vmem:[#allocation6 + $0x330] sm:$0xff]
        %v531 = vld [vmem:[#allocation6 + $0x338] sm:$0xff]
        %v532 = vld [vmem:[#allocation6 + $0x340] sm:$0xff]
        %v533 = vld [vmem:[#allocation6 + $0x348] sm:$0xff]
        %v534 = vld [vmem:[#allocation6 + $0x350] sm:$0xff]
        %v535 = vld [vmem:[#allocation6 + $0x358] sm:$0xff]
        %v536 = vld [vmem:[#allocation6 + $0x360] sm:$0xff]
        %v537 = vld [vmem:[#allocation6 + $0x368] sm:$0xff]
        %v538 = vld [vmem:[#allocation6 + $0x370] sm:$0xff]
        %v539 = vld [vmem:[#allocation6 + $0x378] sm:$0xff]
        %v540 = vld [vmem:[#allocation6 + $0x380] sm:$0xff]
        %v541 = vld [vmem:[#allocation6 + $0x388] sm:$0xff]
        %v542 = vld [vmem:[#allocation6 + $0x390] sm:$0xff]
        %v543 = vld [vmem:[#allocation6 + $0x398] sm:$0xff]
        %v544 = vld [vmem:[#allocation6 + $0x3a0] sm:$0xff]
        %v545 = vld [vmem:[#allocation6 + $0x3a8] sm:$0xff]
        %v546 = vld [vmem:[#allocation6 + $0x3b0] sm:$0xff]
        %v547 = vld [vmem:[#allocation6 + $0x3b8] sm:$0xff]
        %v548 = vld [vmem:[#allocation6 + $0x3c0] sm:$0xff]
        %v549 = vld [vmem:[#allocation6 + $0x3c8] sm:$0xff]
        %v550 = vld [vmem:[#allocation6 + $0x3d0] sm:$0xff]
        %v551 = vld [vmem:[#allocation6 + $0x3d8] sm:$0xff]
        %v552 = vld [vmem:[#allocation6 + $0x3e0] sm:$0xff]
        %v553 = vld [vmem:[#allocation6 + $0x3e8] sm:$0xff]
        %v554 = vld [vmem:[#allocation6 + $0x3f0] sm:$0xff]
        %v555 = vld [vmem:[#allocation6 + $0x3f8] sm:$0xff]
        %v556 = vld [vmem:[#allocation6 + $0x400] sm:$0xff]
        %v557 = vld [vmem:[#allocation6 + $0x408] sm:$0xff]
        %v558 = vld [vmem:[#allocation6 + $0x410] sm:$0xff]
        %v559 = vld [vmem:[#allocation6 + $0x418] sm:$0xff]
        %v560 = vld [vmem:[#allocation6 + $0x420] sm:$0xff]
        %v561 = vld [vmem:[#allocation6 + $0x428] sm:$0xff]
        %v562 = vld [vmem:[#allocation6 + $0x430] sm:$0xff]
        %v563 = vld [vmem:[#allocation6 + $0x438] sm:$0xff]
        %v564 = vld [vmem:[#allocation6 + $0x440] sm:$0xff]
        %v565 = vld [vmem:[#allocation6 + $0x448] sm:$0xff]
        %v566 = vld [vmem:[#allocation6 + $0x450] sm:$0xff]
        %v567 = vld [vmem:[#allocation6 + $0x458] sm:$0xff]
        %v568 = vld [vmem:[#allocation6 + $0x460] sm:$0xff]
        %v569 = vld [vmem:[#allocation6 + $0x468] sm:$0xff]
        %v570 = vld [vmem:[#allocation6 + $0x470] sm:$0xff]
        %v571 = vld [vmem:[#allocation6 + $0x478] sm:$0xff]
        %v572 = vld [vmem:[#allocation6 + $0x480] sm:$0xff]
        %v573 = vld [vmem:[#allocation6 + $0x488] sm:$0xff]
        %v574 = vld [vmem:[#allocation6 + $0x490] sm:$0xff]
        %v575 = vld [vmem:[#allocation6 + $0x498] sm:$0xff]
        %v576 = vld [vmem:[#allocation6 + $0x4a0] sm:$0xff]
        %v577 = vld [vmem:[#allocation6 + $0x4a8] sm:$0xff]
        %v578 = vld [vmem:[#allocation6 + $0x4b0] sm:$0xff]
        %v579 = vld [vmem:[#allocation6 + $0x4b8] sm:$0xff]
        %v580 = vld [vmem:[#allocation6 + $0x4c0] sm:$0xff]
        %v581 = vld [vmem:[#allocation6 + $0x4c8] sm:$0xff]
        %v582 = vld [vmem:[#allocation6 + $0x4d0] sm:$0xff]
        %v583 = vld [vmem:[#allocation6 + $0x4d8] sm:$0xff]
        %v584 = vld [vmem:[#allocation6 + $0x4e0] sm:$0xff]
        %v585 = vld [vmem:[#allocation6 + $0x4e8] sm:$0xff]
        %v586 = vld [vmem:[#allocation6 + $0x4f0] sm:$0xff]
        %v587 = vld [vmem:[#allocation6 + $0x4f8] sm:$0xff]
        %v588 = vld [vmem:[#allocation6 + $0x500] sm:$0xff]
        %v589 = vld [vmem:[#allocation6 + $0x508] sm:$0xff]
        %v590 = vld [vmem:[#allocation6 + $0x510] sm:$0xff]
        %v591 = vld [vmem:[#allocation6 + $0x518] sm:$0xff]
        %v592 = vld [vmem:[#allocation6 + $0x520] sm:$0xff]
        %v593 = vld [vmem:[#allocation6 + $0x528] sm:$0xff]
        %v594 = vld [vmem:[#allocation6 + $0x530] sm:$0xff]
        %v595 = vld [vmem:[#allocation6 + $0x538] sm:$0xff]
        %v596 = vld [vmem:[#allocation6 + $0x540] sm:$0xff]
        %v597 = vld [vmem:[#allocation6 + $0x548] sm:$0xff]
        %v598 = vld [vmem:[#allocation6 + $0x550] sm:$0xff]
        %v599 = vld [vmem:[#allocation6 + $0x558] sm:$0xff]
        %v600 = vld [vmem:[#allocation6 + $0x560] sm:$0xff]
        %v601 = vld [vmem:[#allocation6 + $0x568] sm:$0xff]
        %v602 = vld [vmem:[#allocation6 + $0x570] sm:$0xff]
        %v603 = vld [vmem:[#allocation6 + $0x578] sm:$0xff]
        %v604 = vld [vmem:[#allocation6 + $0x580] sm:$0xff]
        %v605 = vld [vmem:[#allocation6 + $0x588] sm:$0xff]
        %v606 = vld [vmem:[#allocation6 + $0x590] sm:$0xff]
        %v607 = vld [vmem:[#allocation6 + $0x598] sm:$0xff]
        %v608 = vld [vmem:[#allocation6 + $0x5a0] sm:$0xff]
        %v609 = vld [vmem:[#allocation6 + $0x5a8] sm:$0xff]
        %v610 = vld [vmem:[#allocation6 + $0x5b0] sm:$0xff]
        %v611 = vld [vmem:[#allocation6 + $0x5b8] sm:$0xff]
        %v612 = vld [vmem:[#allocation6 + $0x5c0] sm:$0xff]
        %v613 = vld [vmem:[#allocation6 + $0x5c8] sm:$0xff]
        %v614 = vld [vmem:[#allocation6 + $0x5d0] sm:$0xff]
        %v615 = vld [vmem:[#allocation6 + $0x5d8] sm:$0xff]
        %v616 = vld [vmem:[#allocation6 + $0x5e0] sm:$0xff]
        %v617 = vld [vmem:[#allocation6 + $0x5e8] sm:$0xff]
        %v618 = vld [vmem:[#allocation6 + $0x5f0] sm:$0xff]
        %v619 = vld [vmem:[#allocation6 + $0x5f8] sm:$0xff]
        %v620 = vld [vmem:[#allocation6 + $0x600] sm:$0xff]
        %v621 = vld [vmem:[#allocation6 + $0x608] sm:$0xff]
        %v622 = vld [vmem:[#allocation6 + $0x610] sm:$0xff]
        %v623 = vld [vmem:[#allocation6 + $0x618] sm:$0xff]
        %v624 = vld [vmem:[#allocation6 + $0x620] sm:$0xff]
        %v625 = vld [vmem:[#allocation6 + $0x628] sm:$0xff]
        %v626 = vld [vmem:[#allocation6 + $0x630] sm:$0xff]
        %v627 = vld [vmem:[#allocation6 + $0x638] sm:$0xff]
        %v628 = vld [vmem:[#allocation6 + $0x640] sm:$0xff]
        %v629 = vld [vmem:[#allocation6 + $0x648] sm:$0xff]
        %v630 = vld [vmem:[#allocation6 + $0x650] sm:$0xff]
        %v631 = vld [vmem:[#allocation6 + $0x658] sm:$0xff]
        %v632 = vld [vmem:[#allocation6 + $0x660] sm:$0xff]
        %v633 = vld [vmem:[#allocation6 + $0x668] sm:$0xff]
        %v634 = vld [vmem:[#allocation6 + $0x670] sm:$0xff]
        %v635 = vld [vmem:[#allocation6 + $0x678] sm:$0xff]
        %v636 = vld [vmem:[#allocation6 + $0x680] sm:$0xff]
        %v637 = vld [vmem:[#allocation6 + $0x688] sm:$0xff]
        %v638 = vld [vmem:[#allocation6 + $0x690] sm:$0xff]
        %v639 = vld [vmem:[#allocation6 + $0x698] sm:$0xff]
        %v640 = vld [vmem:[#allocation6 + $0x6a0] sm:$0xff]
        %v641 = vld [vmem:[#allocation6 + $0x6a8] sm:$0xff]
        %v642 = vld [vmem:[#allocation6 + $0x6b0] sm:$0xff]
        %v643 = vld [vmem:[#allocation6 + $0x6b8] sm:$0xff]
        %v644 = vld [vmem:[#allocation6 + $0x6c0] sm:$0xff]
        %v645 = vld [vmem:[#allocation6 + $0x6c8] sm:$0xff]
        %v646 = vld [vmem:[#allocation6 + $0x6d0] sm:$0xff]
        %v647 = vld [vmem:[#allocation6 + $0x6d8] sm:$0xff]
        %v648 = vld [vmem:[#allocation6 + $0x6e0] sm:$0xff]
        %v649 = vld [vmem:[#allocation6 + $0x6e8] sm:$0xff]
        %v650 = vld [vmem:[#allocation6 + $0x6f0] sm:$0xff]
        %v651 = vld [vmem:[#allocation6 + $0x6f8] sm:$0xff]
        %v652 = vld [vmem:[#allocation6 + $0x700] sm:$0xff]
        %v653 = vld [vmem:[#allocation6 + $0x708] sm:$0xff]
        %v654 = vld [vmem:[#allocation6 + $0x710] sm:$0xff]
        %v655 = vld [vmem:[#allocation6 + $0x718] sm:$0xff]
        %v656 = vld [vmem:[#allocation6 + $0x720] sm:$0xff]
        %v657 = vld [vmem:[#allocation6 + $0x728] sm:$0xff]
        %v658 = vld [vmem:[#allocation6 + $0x730] sm:$0xff]
        %v659 = vld [vmem:[#allocation6 + $0x738] sm:$0xff]
        %v660 = vld [vmem:[#allocation6 + $0x740] sm:$0xff]
        %v661 = vld [vmem:[#allocation6 + $0x748] sm:$0xff]
        %v662 = vld [vmem:[#allocation6 + $0x750] sm:$0xff]
        %v663 = vld [vmem:[#allocation6 + $0x758] sm:$0xff]
        %v664 = vld [vmem:[#allocation6 + $0x760] sm:$0xff]
        %v665 = vld [vmem:[#allocation6 + $0x768] sm:$0xff]
        %v666 = vld [vmem:[#allocation6 + $0x770] sm:$0xff]
        %v667 = vld [vmem:[#allocation6 + $0x778] sm:$0xff]
        %v668 = vld [vmem:[#allocation6 + $0x780] sm:$0xff]
        %v669 = vld [vmem:[#allocation6 + $0x788] sm:$0xff]
        %v670 = vld [vmem:[#allocation6 + $0x790] sm:$0xff]
        %v671 = vld [vmem:[#allocation6 + $0x798] sm:$0xff]
        %v672 = vld [vmem:[#allocation6 + $0x7a0] sm:$0xff]
        %v673 = vld [vmem:[#allocation6 + $0x7a8] sm:$0xff]
        %v674 = vld [vmem:[#allocation6 + $0x7b0] sm:$0xff]
        %v675 = vld [vmem:[#allocation6 + $0x7b8] sm:$0xff]
        %v676 = vld [vmem:[#allocation6 + $0x7c0] sm:$0xff]
        %v677 = vld [vmem:[#allocation6 + $0x7c8] sm:$0xff]
        %v678 = vld [vmem:[#allocation6 + $0x7d0] sm:$0xff]
        %v679 = vld [vmem:[#allocation6 + $0x7d8] sm:$0xff]
        %v680 = vld [vmem:[#allocation6 + $0x7e0] sm:$0xff]
        %v681 = vld [vmem:[#allocation6 + $0x7e8] sm:$0xff]
        %v682 = vld [vmem:[#allocation6 + $0x7f0] sm:$0xff]
        %v683 = vld [vmem:[#allocation6 + $0x7f8] sm:$0xff]
        %v684 = vld [vmem:[#allocation8] sm:$0xf]
        %v686 = vlaneseq
        %v687 = vshrl.u32 %v686, 7
        %v688 = vsub.s32 0, %v687
        %v689 = vrot.slane %v684, %v688
        %v690 = vlaneseq
        %v691 = vshrl.u32 %v690, 7
        %v692 = vsub.s32 1, %v691
        %v693 = vrot.slane %v684, %v692
        %v694 = vlaneseq
        %v695 = vshrl.u32 %v694, 7
        %v696 = vsub.s32 2, %v695
        %v697 = vrot.slane %v684, %v696
        %v698 = vlaneseq
        %v699 = vshrl.u32 %v698, 7
        %v700 = vsub.s32 3, %v699
        %v701 = vrot.slane %v684, %v700
        %v834 = vunpack.c.l.b16 %v300
        %v835 = vunpack.c.h.b16 %v300
        %v836 = vunpack.c.l.b16 %v301
        %v837 = vunpack.c.h.b16 %v301
        %v838 = vunpack.c.l.b16 %v302
        %v839 = vunpack.c.h.b16 %v302
        %v840 = vunpack.c.l.b16 %v303
        %v841 = vunpack.c.h.b16 %v303
        %v842 = vunpack.c.l.b16 %v304
        %v843 = vunpack.c.h.b16 %v304
        %v844 = vunpack.c.l.b16 %v305
        %v845 = vunpack.c.h.b16 %v305
        %v846 = vunpack.c.l.b16 %v306
        %v847 = vunpack.c.h.b16 %v306
        %v848 = vunpack.c.l.b16 %v307
        %v849 = vunpack.c.h.b16 %v307
        %v850 = vunpack.c.l.b16 %v308
        %v851 = vunpack.c.h.b16 %v308
        %v852 = vunpack.c.l.b16 %v309
        %v853 = vunpack.c.h.b16 %v309
        %v854 = vunpack.c.l.b16 %v310
        %v855 = vunpack.c.h.b16 %v310
        %v856 = vunpack.c.l.b16 %v311
        %v857 = vunpack.c.h.b16 %v311
        %v858 = vunpack.c.l.b16 %v312
        %v859 = vunpack.c.h.b16 %v312
        %v860 = vunpack.c.l.b16 %v313
        %v861 = vunpack.c.h.b16 %v313
        %v862 = vunpack.c.l.b16 %v314
        %v863 = vunpack.c.h.b16 %v314
        %v864 = vunpack.c.l.b16 %v315
        %v865 = vunpack.c.h.b16 %v315
        %v866 = vunpack.c.l.b16 %v316
        %v867 = vunpack.c.h.b16 %v316
        %v868 = vunpack.c.l.b16 %v317
        %v869 = vunpack.c.h.b16 %v317
        %v870 = vunpack.c.l.b16 %v318
        %v871 = vunpack.c.h.b16 %v318
        %v872 = vunpack.c.l.b16 %v319
        %v873 = vunpack.c.h.b16 %v319
        %v874 = vunpack.c.l.b16 %v320
        %v875 = vunpack.c.h.b16 %v320
        %v876 = vunpack.c.l.b16 %v321
        %v877 = vunpack.c.h.b16 %v321
        %v878 = vunpack.c.l.b16 %v322
        %v879 = vunpack.c.h.b16 %v322
        %v880 = vunpack.c.l.b16 %v323
        %v881 = vunpack.c.h.b16 %v323
        %v882 = vunpack.c.l.b16 %v324
        %v883 = vunpack.c.h.b16 %v324
        %v884 = vunpack.c.l.b16 %v325
        %v885 = vunpack.c.h.b16 %v325
        %v886 = vunpack.c.l.b16 %v326
        %v887 = vunpack.c.h.b16 %v326
        %v888 = vunpack.c.l.b16 %v327
        %v889 = vunpack.c.h.b16 %v327
        %v890 = vunpack.c.l.b16 %v328
        %v891 = vunpack.c.h.b16 %v328
        %v892 = vunpack.c.l.b16 %v329
        %v893 = vunpack.c.h.b16 %v329
        %v894 = vunpack.c.l.b16 %v330
        %v895 = vunpack.c.h.b16 %v330
        %v896 = vunpack.c.l.b16 %v331
        %v897 = vunpack.c.h.b16 %v331
        %v898 = vunpack.c.l.b16 %v332
        %v899 = vunpack.c.h.b16 %v332
        %v900 = vunpack.c.l.b16 %v333
        %v901 = vunpack.c.h.b16 %v333
        %v902 = vunpack.c.l.b16 %v334
        %v903 = vunpack.c.h.b16 %v334
        %v904 = vunpack.c.l.b16 %v335
        %v905 = vunpack.c.h.b16 %v335
        %v906 = vunpack.c.l.b16 %v336
        %v907 = vunpack.c.h.b16 %v336
        %v908 = vunpack.c.l.b16 %v337
        %v909 = vunpack.c.h.b16 %v337
        %v910 = vunpack.c.l.b16 %v338
        %v911 = vunpack.c.h.b16 %v338
        %v912 = vunpack.c.l.b16 %v339
        %v913 = vunpack.c.h.b16 %v339
        %v914 = vunpack.c.l.b16 %v340
        %v915 = vunpack.c.h.b16 %v340
        %v916 = vunpack.c.l.b16 %v341
        %v917 = vunpack.c.h.b16 %v341
        %v918 = vunpack.c.l.b16 %v342
        %v919 = vunpack.c.h.b16 %v342
        %v920 = vunpack.c.l.b16 %v343
        %v921 = vunpack.c.h.b16 %v343
        %v922 = vunpack.c.l.b16 %v344
        %v923 = vunpack.c.h.b16 %v344
        %v924 = vunpack.c.l.b16 %v345
        %v925 = vunpack.c.h.b16 %v345
        %v926 = vunpack.c.l.b16 %v346
        %v927 = vunpack.c.h.b16 %v346
        %v928 = vunpack.c.l.b16 %v347
        %v929 = vunpack.c.h.b16 %v347
        %v930 = vunpack.c.l.b16 %v348
        %v931 = vunpack.c.h.b16 %v348
        %v932 = vunpack.c.l.b16 %v349
        %v933 = vunpack.c.h.b16 %v349
        %v934 = vunpack.c.l.b16 %v350
        %v935 = vunpack.c.h.b16 %v350
        %v936 = vunpack.c.l.b16 %v351
        %v937 = vunpack.c.h.b16 %v351
        %v938 = vunpack.c.l.b16 %v352
        %v939 = vunpack.c.h.b16 %v352
        %v940 = vunpack.c.l.b16 %v353
        %v941 = vunpack.c.h.b16 %v353
        %v942 = vunpack.c.l.b16 %v354
        %v943 = vunpack.c.h.b16 %v354
        %v944 = vunpack.c.l.b16 %v355
        %v945 = vunpack.c.h.b16 %v355
        %v946 = vunpack.c.l.b16 %v356
        %v947 = vunpack.c.h.b16 %v356
        %v948 = vunpack.c.l.b16 %v357
        %v949 = vunpack.c.h.b16 %v357
        %v950 = vunpack.c.l.b16 %v358
        %v951 = vunpack.c.h.b16 %v358
        %v952 = vunpack.c.l.b16 %v359
        %v953 = vunpack.c.h.b16 %v359
        %v954 = vunpack.c.l.b16 %v360
        %v955 = vunpack.c.h.b16 %v360
        %v956 = vunpack.c.l.b16 %v361
        %v957 = vunpack.c.h.b16 %v361
        %v958 = vunpack.c.l.b16 %v362
        %v959 = vunpack.c.h.b16 %v362
        %v960 = vunpack.c.l.b16 %v363
        %v961 = vunpack.c.h.b16 %v363
        %v962 = vunpack.c.l.b16 %v364
        %v963 = vunpack.c.h.b16 %v364
        %v964 = vunpack.c.l.b16 %v365
        %v965 = vunpack.c.h.b16 %v365
        %v966 = vunpack.c.l.b16 %v366
        %v967 = vunpack.c.h.b16 %v366
        %v968 = vunpack.c.l.b16 %v367
        %v969 = vunpack.c.h.b16 %v367
        %v970 = vunpack.c.l.b16 %v368
        %v971 = vunpack.c.h.b16 %v368
        %v972 = vunpack.c.l.b16 %v369
        %v973 = vunpack.c.h.b16 %v369
        %v974 = vunpack.c.l.b16 %v370
        %v975 = vunpack.c.h.b16 %v370
        %v976 = vunpack.c.l.b16 %v371
        %v977 = vunpack.c.h.b16 %v371
        %v978 = vunpack.c.l.b16 %v372
        %v979 = vunpack.c.h.b16 %v372
        %v980 = vunpack.c.l.b16 %v373
        %v981 = vunpack.c.h.b16 %v373
        %v982 = vunpack.c.l.b16 %v374
        %v983 = vunpack.c.h.b16 %v374
        %v984 = vunpack.c.l.b16 %v375
        %v985 = vunpack.c.h.b16 %v375
        %v986 = vunpack.c.l.b16 %v376
        %v987 = vunpack.c.h.b16 %v376
        %v988 = vunpack.c.l.b16 %v377
        %v989 = vunpack.c.h.b16 %v377
        %v990 = vunpack.c.l.b16 %v378
        %v991 = vunpack.c.h.b16 %v378
        %v992 = vunpack.c.l.b16 %v379
        %v993 = vunpack.c.h.b16 %v379
        %v994 = vunpack.c.l.b16 %v380
        %v995 = vunpack.c.h.b16 %v380
        %v996 = vunpack.c.l.b16 %v381
        %v997 = vunpack.c.h.b16 %v381
        %v998 = vunpack.c.l.b16 %v382
        %v999 = vunpack.c.h.b16 %v382
        %v1000 = vunpack.c.l.b16 %v383
        %v1001 = vunpack.c.h.b16 %v383
        %v1002 = vunpack.c.l.b16 %v384
        %v1003 = vunpack.c.h.b16 %v384
        %v1004 = vunpack.c.l.b16 %v385
        %v1005 = vunpack.c.h.b16 %v385
        %v1006 = vunpack.c.l.b16 %v386
        %v1007 = vunpack.c.h.b16 %v386
        %v1008 = vunpack.c.l.b16 %v387
        %v1009 = vunpack.c.h.b16 %v387
        %v1010 = vunpack.c.l.b16 %v388
        %v1011 = vunpack.c.h.b16 %v388
        %v1012 = vunpack.c.l.b16 %v389
        %v1013 = vunpack.c.h.b16 %v389
        %v1014 = vunpack.c.l.b16 %v390
        %v1015 = vunpack.c.h.b16 %v390
        %v1016 = vunpack.c.l.b16 %v391
        %v1017 = vunpack.c.h.b16 %v391
        %v1018 = vunpack.c.l.b16 %v392
        %v1019 = vunpack.c.h.b16 %v392
        %v1020 = vunpack.c.l.b16 %v393
        %v1021 = vunpack.c.h.b16 %v393
        %v1022 = vunpack.c.l.b16 %v394
        %v1023 = vunpack.c.h.b16 %v394
        %v1024 = vunpack.c.l.b16 %v395
        %v1025 = vunpack.c.h.b16 %v395
        %v1026 = vunpack.c.l.b16 %v396
        %v1027 = vunpack.c.h.b16 %v396
        %v1028 = vunpack.c.l.b16 %v397
        %v1029 = vunpack.c.h.b16 %v397
        %v1030 = vunpack.c.l.b16 %v398
        %v1031 = vunpack.c.h.b16 %v398
        %v1032 = vunpack.c.l.b16 %v399
        %v1033 = vunpack.c.h.b16 %v399
        %v1034 = vunpack.c.l.b16 %v400
        %v1035 = vunpack.c.h.b16 %v400
        %v1036 = vunpack.c.l.b16 %v401
        %v1037 = vunpack.c.h.b16 %v401
        %v1038 = vunpack.c.l.b16 %v402
        %v1039 = vunpack.c.h.b16 %v402
        %v1040 = vunpack.c.l.b16 %v403
        %v1041 = vunpack.c.h.b16 %v403
        %v1042 = vunpack.c.l.b16 %v404
        %v1043 = vunpack.c.h.b16 %v404
        %v1044 = vunpack.c.l.b16 %v405
        %v1045 = vunpack.c.h.b16 %v405
        %v1046 = vunpack.c.l.b16 %v406
        %v1047 = vunpack.c.h.b16 %v406
        %v1048 = vunpack.c.l.b16 %v407
        %v1049 = vunpack.c.h.b16 %v407
        %v1050 = vunpack.c.l.b16 %v408
        %v1051 = vunpack.c.h.b16 %v408
        %v1052 = vunpack.c.l.b16 %v409
        %v1053 = vunpack.c.h.b16 %v409
        %v1054 = vunpack.c.l.b16 %v410
        %v1055 = vunpack.c.h.b16 %v410
        %v1056 = vunpack.c.l.b16 %v411
        %v1057 = vunpack.c.h.b16 %v411
        %v1058 = vunpack.c.l.b16 %v412
        %v1059 = vunpack.c.h.b16 %v412
        %v1060 = vunpack.c.l.b16 %v413
        %v1061 = vunpack.c.h.b16 %v413
        %v1062 = vunpack.c.l.b16 %v414
        %v1063 = vunpack.c.h.b16 %v414
        %v1064 = vunpack.c.l.b16 %v415
        %v1065 = vunpack.c.h.b16 %v415
        %v1066 = vunpack.c.l.b16 %v416
        %v1067 = vunpack.c.h.b16 %v416
        %v1068 = vunpack.c.l.b16 %v417
        %v1069 = vunpack.c.h.b16 %v417
        %v1070 = vunpack.c.l.b16 %v418
        %v1071 = vunpack.c.h.b16 %v418
        %v1072 = vunpack.c.l.b16 %v419
        %v1073 = vunpack.c.h.b16 %v419
        %v1074 = vunpack.c.l.b16 %v420
        %v1075 = vunpack.c.h.b16 %v420
        %v1076 = vunpack.c.l.b16 %v421
        %v1077 = vunpack.c.h.b16 %v421
        %v1078 = vunpack.c.l.b16 %v422
        %v1079 = vunpack.c.h.b16 %v422
        %v1080 = vunpack.c.l.b16 %v423
        %v1081 = vunpack.c.h.b16 %v423
        %v1082 = vunpack.c.l.b16 %v424
        %v1083 = vunpack.c.h.b16 %v424
        %v1084 = vunpack.c.l.b16 %v425
        %v1085 = vunpack.c.h.b16 %v425
        %v1086 = vunpack.c.l.b16 %v426
        %v1087 = vunpack.c.h.b16 %v426
        %v1088 = vunpack.c.l.b16 %v427
        %v1089 = vunpack.c.h.b16 %v427
        %v1090 = vpack.c.b16 %v842, %v834
        %v1091 = vpack.c.b16 %v843, %v835
        %v1092 = vpack.c.b16 %v844, %v836
        %v1093 = vpack.c.b16 %v845, %v837
        %v1094 = vpack.c.b16 %v846, %v838
        %v1095 = vpack.c.b16 %v847, %v839
        %v1096 = vpack.c.b16 %v848, %v840
        %v1097 = vpack.c.b16 %v849, %v841
        %v1098 = vpack.c.b16 %v858, %v850
        %v1099 = vpack.c.b16 %v859, %v851
        %v1100 = vpack.c.b16 %v860, %v852
        %v1101 = vpack.c.b16 %v861, %v853
        %v1102 = vpack.c.b16 %v862, %v854
        %v1103 = vpack.c.b16 %v863, %v855
        %v1104 = vpack.c.b16 %v864, %v856
        %v1105 = vpack.c.b16 %v865, %v857
        %v1106 = vpack.c.b16 %v874, %v866
        %v1107 = vpack.c.b16 %v875, %v867
        %v1108 = vpack.c.b16 %v876, %v868
        %v1109 = vpack.c.b16 %v877, %v869
        %v1110 = vpack.c.b16 %v878, %v870
        %v1111 = vpack.c.b16 %v879, %v871
        %v1112 = vpack.c.b16 %v880, %v872
        %v1113 = vpack.c.b16 %v881, %v873
        %v1114 = vpack.c.b16 %v890, %v882
        %v1115 = vpack.c.b16 %v891, %v883
        %v1116 = vpack.c.b16 %v892, %v884
        %v1117 = vpack.c.b16 %v893, %v885
        %v1118 = vpack.c.b16 %v894, %v886
        %v1119 = vpack.c.b16 %v895, %v887
        %v1120 = vpack.c.b16 %v896, %v888
        %v1121 = vpack.c.b16 %v897, %v889
        %v1122 = vpack.c.b16 %v906, %v898
        %v1123 = vpack.c.b16 %v907, %v899
        %v1124 = vpack.c.b16 %v908, %v900
        %v1125 = vpack.c.b16 %v909, %v901
        %v1126 = vpack.c.b16 %v910, %v902
        %v1127 = vpack.c.b16 %v911, %v903
        %v1128 = vpack.c.b16 %v912, %v904
        %v1129 = vpack.c.b16 %v913, %v905
        %v1130 = vpack.c.b16 %v922, %v914
        %v1131 = vpack.c.b16 %v923, %v915
        %v1132 = vpack.c.b16 %v924, %v916
        %v1133 = vpack.c.b16 %v925, %v917
        %v1134 = vpack.c.b16 %v926, %v918
        %v1135 = vpack.c.b16 %v927, %v919
        %v1136 = vpack.c.b16 %v928, %v920
        %v1137 = vpack.c.b16 %v929, %v921
        %v1138 = vpack.c.b16 %v938, %v930
        %v1139 = vpack.c.b16 %v939, %v931
        %v1140 = vpack.c.b16 %v940, %v932
        %v1141 = vpack.c.b16 %v941, %v933
        %v1142 = vpack.c.b16 %v942, %v934
        %v1143 = vpack.c.b16 %v943, %v935
        %v1144 = vpack.c.b16 %v944, %v936
        %v1145 = vpack.c.b16 %v945, %v937
        %v1146 = vpack.c.b16 %v954, %v946
        %v1147 = vpack.c.b16 %v955, %v947
        %v1148 = vpack.c.b16 %v956, %v948
        %v1149 = vpack.c.b16 %v957, %v949
        %v1150 = vpack.c.b16 %v958, %v950
        %v1151 = vpack.c.b16 %v959, %v951
        %v1152 = vpack.c.b16 %v960, %v952
        %v1153 = vpack.c.b16 %v961, %v953
        %v1154 = vpack.c.b16 %v970, %v962
        %v1155 = vpack.c.b16 %v971, %v963
        %v1156 = vpack.c.b16 %v972, %v964
        %v1157 = vpack.c.b16 %v973, %v965
        %v1158 = vpack.c.b16 %v974, %v966
        %v1159 = vpack.c.b16 %v975, %v967
        %v1160 = vpack.c.b16 %v976, %v968
        %v1161 = vpack.c.b16 %v977, %v969
        %v1162 = vpack.c.b16 %v986, %v978
        %v1163 = vpack.c.b16 %v987, %v979
        %v1164 = vpack.c.b16 %v988, %v980
        %v1165 = vpack.c.b16 %v989, %v981
        %v1166 = vpack.c.b16 %v990, %v982
        %v1167 = vpack.c.b16 %v991, %v983
        %v1168 = vpack.c.b16 %v992, %v984
        %v1169 = vpack.c.b16 %v993, %v985
        %v1170 = vpack.c.b16 %v1002, %v994
        %v1171 = vpack.c.b16 %v1003, %v995
        %v1172 = vpack.c.b16 %v1004, %v996
        %v1173 = vpack.c.b16 %v1005, %v997
        %v1174 = vpack.c.b16 %v1006, %v998
        %v1175 = vpack.c.b16 %v1007, %v999
        %v1176 = vpack.c.b16 %v1008, %v1000
        %v1177 = vpack.c.b16 %v1009, %v1001
        %v1178 = vpack.c.b16 %v1018, %v1010
        %v1179 = vpack.c.b16 %v1019, %v1011
        %v1180 = vpack.c.b16 %v1020, %v1012
        %v1181 = vpack.c.b16 %v1021, %v1013
        %v1182 = vpack.c.b16 %v1022, %v1014
        %v1183 = vpack.c.b16 %v1023, %v1015
        %v1184 = vpack.c.b16 %v1024, %v1016
        %v1185 = vpack.c.b16 %v1025, %v1017
        %v1186 = vpack.c.b16 %v1034, %v1026
        %v1187 = vpack.c.b16 %v1035, %v1027
        %v1188 = vpack.c.b16 %v1036, %v1028
        %v1189 = vpack.c.b16 %v1037, %v1029
        %v1190 = vpack.c.b16 %v1038, %v1030
        %v1191 = vpack.c.b16 %v1039, %v1031
        %v1192 = vpack.c.b16 %v1040, %v1032
        %v1193 = vpack.c.b16 %v1041, %v1033
        %v1194 = vpack.c.b16 %v1050, %v1042
        %v1195 = vpack.c.b16 %v1051, %v1043
        %v1196 = vpack.c.b16 %v1052, %v1044
        %v1197 = vpack.c.b16 %v1053, %v1045
        %v1198 = vpack.c.b16 %v1054, %v1046
        %v1199 = vpack.c.b16 %v1055, %v1047
        %v1200 = vpack.c.b16 %v1056, %v1048
        %v1201 = vpack.c.b16 %v1057, %v1049
        %v1202 = vpack.c.b16 %v1066, %v1058
        %v1203 = vpack.c.b16 %v1067, %v1059
        %v1204 = vpack.c.b16 %v1068, %v1060
        %v1205 = vpack.c.b16 %v1069, %v1061
        %v1206 = vpack.c.b16 %v1070, %v1062
        %v1207 = vpack.c.b16 %v1071, %v1063
        %v1208 = vpack.c.b16 %v1072, %v1064
        %v1209 = vpack.c.b16 %v1073, %v1065
        %v1210 = vpack.c.b16 %v1082, %v1074
        %v1211 = vpack.c.b16 %v1083, %v1075
        %v1212 = vpack.c.b16 %v1084, %v1076
        %v1213 = vpack.c.b16 %v1085, %v1077
        %v1214 = vpack.c.b16 %v1086, %v1078
        %v1215 = vpack.c.b16 %v1087, %v1079
        %v1216 = vpack.c.b16 %v1088, %v1080
        %v1217 = vpack.c.b16 %v1089, %v1081
        %v1602 = vunpack.c.l.b16 %v428
        %v1603 = vunpack.c.h.b16 %v428
        %v1604 = vunpack.c.l.b16 %v429
        %v1605 = vunpack.c.h.b16 %v429
        %v1606 = vunpack.c.l.b16 %v430
        %v1607 = vunpack.c.h.b16 %v430
        %v1608 = vunpack.c.l.b16 %v431
        %v1609 = vunpack.c.h.b16 %v431
        %v1610 = vunpack.c.l.b16 %v432
        %v1611 = vunpack.c.h.b16 %v432
        %v1612 = vunpack.c.l.b16 %v433
        %v1613 = vunpack.c.h.b16 %v433
        %v1614 = vunpack.c.l.b16 %v434
        %v1615 = vunpack.c.h.b16 %v434
        %v1616 = vunpack.c.l.b16 %v435
        %v1617 = vunpack.c.h.b16 %v435
        %v1618 = vunpack.c.l.b16 %v436
        %v1619 = vunpack.c.h.b16 %v436
        %v1620 = vunpack.c.l.b16 %v437
        %v1621 = vunpack.c.h.b16 %v437
        %v1622 = vunpack.c.l.b16 %v438
        %v1623 = vunpack.c.h.b16 %v438
        %v1624 = vunpack.c.l.b16 %v439
        %v1625 = vunpack.c.h.b16 %v439
        %v1626 = vunpack.c.l.b16 %v440
        %v1627 = vunpack.c.h.b16 %v440
        %v1628 = vunpack.c.l.b16 %v441
        %v1629 = vunpack.c.h.b16 %v441
        %v1630 = vunpack.c.l.b16 %v442
        %v1631 = vunpack.c.h.b16 %v442
        %v1632 = vunpack.c.l.b16 %v443
        %v1633 = vunpack.c.h.b16 %v443
        %v1634 = vunpack.c.l.b16 %v444
        %v1635 = vunpack.c.h.b16 %v444
        %v1636 = vunpack.c.l.b16 %v445
        %v1637 = vunpack.c.h.b16 %v445
        %v1638 = vunpack.c.l.b16 %v446
        %v1639 = vunpack.c.h.b16 %v446
        %v1640 = vunpack.c.l.b16 %v447
        %v1641 = vunpack.c.h.b16 %v447
        %v1642 = vunpack.c.l.b16 %v448
        %v1643 = vunpack.c.h.b16 %v448
        %v1644 = vunpack.c.l.b16 %v449
        %v1645 = vunpack.c.h.b16 %v449
        %v1646 = vunpack.c.l.b16 %v450
        %v1647 = vunpack.c.h.b16 %v450
        %v1648 = vunpack.c.l.b16 %v451
        %v1649 = vunpack.c.h.b16 %v451
        %v1650 = vunpack.c.l.b16 %v452
        %v1651 = vunpack.c.h.b16 %v452
        %v1652 = vunpack.c.l.b16 %v453
        %v1653 = vunpack.c.h.b16 %v453
        %v1654 = vunpack.c.l.b16 %v454
        %v1655 = vunpack.c.h.b16 %v454
        %v1656 = vunpack.c.l.b16 %v455
        %v1657 = vunpack.c.h.b16 %v455
        %v1658 = vunpack.c.l.b16 %v456
        %v1659 = vunpack.c.h.b16 %v456
        %v1660 = vunpack.c.l.b16 %v457
        %v1661 = vunpack.c.h.b16 %v457
        %v1662 = vunpack.c.l.b16 %v458
        %v1663 = vunpack.c.h.b16 %v458
        %v1664 = vunpack.c.l.b16 %v459
        %v1665 = vunpack.c.h.b16 %v459
        %v1666 = vunpack.c.l.b16 %v460
        %v1667 = vunpack.c.h.b16 %v460
        %v1668 = vunpack.c.l.b16 %v461
        %v1669 = vunpack.c.h.b16 %v461
        %v1670 = vunpack.c.l.b16 %v462
        %v1671 = vunpack.c.h.b16 %v462
        %v1672 = vunpack.c.l.b16 %v463
        %v1673 = vunpack.c.h.b16 %v463
        %v1674 = vunpack.c.l.b16 %v464
        %v1675 = vunpack.c.h.b16 %v464
        %v1676 = vunpack.c.l.b16 %v465
        %v1677 = vunpack.c.h.b16 %v465
        %v1678 = vunpack.c.l.b16 %v466
        %v1679 = vunpack.c.h.b16 %v466
        %v1680 = vunpack.c.l.b16 %v467
        %v1681 = vunpack.c.h.b16 %v467
        %v1682 = vunpack.c.l.b16 %v468
        %v1683 = vunpack.c.h.b16 %v468
        %v1684 = vunpack.c.l.b16 %v469
        %v1685 = vunpack.c.h.b16 %v469
        %v1686 = vunpack.c.l.b16 %v470
        %v1687 = vunpack.c.h.b16 %v470
        %v1688 = vunpack.c.l.b16 %v471
        %v1689 = vunpack.c.h.b16 %v471
        %v1690 = vunpack.c.l.b16 %v472
        %v1691 = vunpack.c.h.b16 %v472
        %v1692 = vunpack.c.l.b16 %v473
        %v1693 = vunpack.c.h.b16 %v473
        %v1694 = vunpack.c.l.b16 %v474
        %v1695 = vunpack.c.h.b16 %v474
        %v1696 = vunpack.c.l.b16 %v475
        %v1697 = vunpack.c.h.b16 %v475
        %v1698 = vunpack.c.l.b16 %v476
        %v1699 = vunpack.c.h.b16 %v476
        %v1700 = vunpack.c.l.b16 %v477
        %v1701 = vunpack.c.h.b16 %v477
        %v1702 = vunpack.c.l.b16 %v478
        %v1703 = vunpack.c.h.b16 %v478
        %v1704 = vunpack.c.l.b16 %v479
        %v1705 = vunpack.c.h.b16 %v479
        %v1706 = vunpack.c.l.b16 %v480
        %v1707 = vunpack.c.h.b16 %v480
        %v1708 = vunpack.c.l.b16 %v481
        %v1709 = vunpack.c.h.b16 %v481
        %v1710 = vunpack.c.l.b16 %v482
        %v1711 = vunpack.c.h.b16 %v482
        %v1712 = vunpack.c.l.b16 %v483
        %v1713 = vunpack.c.h.b16 %v483
        %v1714 = vunpack.c.l.b16 %v484
        %v1715 = vunpack.c.h.b16 %v484
        %v1716 = vunpack.c.l.b16 %v485
        %v1717 = vunpack.c.h.b16 %v485
        %v1718 = vunpack.c.l.b16 %v486
        %v1719 = vunpack.c.h.b16 %v486
        %v1720 = vunpack.c.l.b16 %v487
        %v1721 = vunpack.c.h.b16 %v487
        %v1722 = vunpack.c.l.b16 %v488
        %v1723 = vunpack.c.h.b16 %v488
        %v1724 = vunpack.c.l.b16 %v489
        %v1725 = vunpack.c.h.b16 %v489
        %v1726 = vunpack.c.l.b16 %v490
        %v1727 = vunpack.c.h.b16 %v490
        %v1728 = vunpack.c.l.b16 %v491
        %v1729 = vunpack.c.h.b16 %v491
        %v1730 = vunpack.c.l.b16 %v492
        %v1731 = vunpack.c.h.b16 %v492
        %v1732 = vunpack.c.l.b16 %v493
        %v1733 = vunpack.c.h.b16 %v493
        %v1734 = vunpack.c.l.b16 %v494
        %v1735 = vunpack.c.h.b16 %v494
        %v1736 = vunpack.c.l.b16 %v495
        %v1737 = vunpack.c.h.b16 %v495
        %v1738 = vunpack.c.l.b16 %v496
        %v1739 = vunpack.c.h.b16 %v496
        %v1740 = vunpack.c.l.b16 %v497
        %v1741 = vunpack.c.h.b16 %v497
        %v1742 = vunpack.c.l.b16 %v498
        %v1743 = vunpack.c.h.b16 %v498
        %v1744 = vunpack.c.l.b16 %v499
        %v1745 = vunpack.c.h.b16 %v499
        %v1746 = vunpack.c.l.b16 %v500
        %v1747 = vunpack.c.h.b16 %v500
        %v1748 = vunpack.c.l.b16 %v501
        %v1749 = vunpack.c.h.b16 %v501
        %v1750 = vunpack.c.l.b16 %v502
        %v1751 = vunpack.c.h.b16 %v502
        %v1752 = vunpack.c.l.b16 %v503
        %v1753 = vunpack.c.h.b16 %v503
        %v1754 = vunpack.c.l.b16 %v504
        %v1755 = vunpack.c.h.b16 %v504
        %v1756 = vunpack.c.l.b16 %v505
        %v1757 = vunpack.c.h.b16 %v505
        %v1758 = vunpack.c.l.b16 %v506
        %v1759 = vunpack.c.h.b16 %v506
        %v1760 = vunpack.c.l.b16 %v507
        %v1761 = vunpack.c.h.b16 %v507
        %v1762 = vunpack.c.l.b16 %v508
        %v1763 = vunpack.c.h.b16 %v508
        %v1764 = vunpack.c.l.b16 %v509
        %v1765 = vunpack.c.h.b16 %v509
        %v1766 = vunpack.c.l.b16 %v510
        %v1767 = vunpack.c.h.b16 %v510
        %v1768 = vunpack.c.l.b16 %v511
        %v1769 = vunpack.c.h.b16 %v511
        %v1770 = vunpack.c.l.b16 %v512
        %v1771 = vunpack.c.h.b16 %v512
        %v1772 = vunpack.c.l.b16 %v513
        %v1773 = vunpack.c.h.b16 %v513
        %v1774 = vunpack.c.l.b16 %v514
        %v1775 = vunpack.c.h.b16 %v514
        %v1776 = vunpack.c.l.b16 %v515
        %v1777 = vunpack.c.h.b16 %v515
        %v1778 = vunpack.c.l.b16 %v516
        %v1779 = vunpack.c.h.b16 %v516
        %v1780 = vunpack.c.l.b16 %v517
        %v1781 = vunpack.c.h.b16 %v517
        %v1782 = vunpack.c.l.b16 %v518
        %v1783 = vunpack.c.h.b16 %v518
        %v1784 = vunpack.c.l.b16 %v519
        %v1785 = vunpack.c.h.b16 %v519
        %v1786 = vunpack.c.l.b16 %v520
        %v1787 = vunpack.c.h.b16 %v520
        %v1788 = vunpack.c.l.b16 %v521
        %v1789 = vunpack.c.h.b16 %v521
        %v1790 = vunpack.c.l.b16 %v522
        %v1791 = vunpack.c.h.b16 %v522
        %v1792 = vunpack.c.l.b16 %v523
        %v1793 = vunpack.c.h.b16 %v523
        %v1794 = vunpack.c.l.b16 %v524
        %v1795 = vunpack.c.h.b16 %v524
        %v1796 = vunpack.c.l.b16 %v525
        %v1797 = vunpack.c.h.b16 %v525
        %v1798 = vunpack.c.l.b16 %v526
        %v1799 = vunpack.c.h.b16 %v526
        %v1800 = vunpack.c.l.b16 %v527
        %v1801 = vunpack.c.h.b16 %v527
        %v1802 = vunpack.c.l.b16 %v528
        %v1803 = vunpack.c.h.b16 %v528
        %v1804 = vunpack.c.l.b16 %v529
        %v1805 = vunpack.c.h.b16 %v529
        %v1806 = vunpack.c.l.b16 %v530
        %v1807 = vunpack.c.h.b16 %v530
        %v1808 = vunpack.c.l.b16 %v531
        %v1809 = vunpack.c.h.b16 %v531
        %v1810 = vunpack.c.l.b16 %v532
        %v1811 = vunpack.c.h.b16 %v532
        %v1812 = vunpack.c.l.b16 %v533
        %v1813 = vunpack.c.h.b16 %v533
        %v1814 = vunpack.c.l.b16 %v534
        %v1815 = vunpack.c.h.b16 %v534
        %v1816 = vunpack.c.l.b16 %v535
        %v1817 = vunpack.c.h.b16 %v535
        %v1818 = vunpack.c.l.b16 %v536
        %v1819 = vunpack.c.h.b16 %v536
        %v1820 = vunpack.c.l.b16 %v537
        %v1821 = vunpack.c.h.b16 %v537
        %v1822 = vunpack.c.l.b16 %v538
        %v1823 = vunpack.c.h.b16 %v538
        %v1824 = vunpack.c.l.b16 %v539
        %v1825 = vunpack.c.h.b16 %v539
        %v1826 = vunpack.c.l.b16 %v540
        %v1827 = vunpack.c.h.b16 %v540
        %v1828 = vunpack.c.l.b16 %v541
        %v1829 = vunpack.c.h.b16 %v541
        %v1830 = vunpack.c.l.b16 %v542
        %v1831 = vunpack.c.h.b16 %v542
        %v1832 = vunpack.c.l.b16 %v543
        %v1833 = vunpack.c.h.b16 %v543
        %v1834 = vunpack.c.l.b16 %v544
        %v1835 = vunpack.c.h.b16 %v544
        %v1836 = vunpack.c.l.b16 %v545
        %v1837 = vunpack.c.h.b16 %v545
        %v1838 = vunpack.c.l.b16 %v546
        %v1839 = vunpack.c.h.b16 %v546
        %v1840 = vunpack.c.l.b16 %v547
        %v1841 = vunpack.c.h.b16 %v547
        %v1842 = vunpack.c.l.b16 %v548
        %v1843 = vunpack.c.h.b16 %v548
        %v1844 = vunpack.c.l.b16 %v549
        %v1845 = vunpack.c.h.b16 %v549
        %v1846 = vunpack.c.l.b16 %v550
        %v1847 = vunpack.c.h.b16 %v550
        %v1848 = vunpack.c.l.b16 %v551
        %v1849 = vunpack.c.h.b16 %v551
        %v1850 = vunpack.c.l.b16 %v552
        %v1851 = vunpack.c.h.b16 %v552
        %v1852 = vunpack.c.l.b16 %v553
        %v1853 = vunpack.c.h.b16 %v553
        %v1854 = vunpack.c.l.b16 %v554
        %v1855 = vunpack.c.h.b16 %v554
        %v1856 = vunpack.c.l.b16 %v555
        %v1857 = vunpack.c.h.b16 %v555
        %v1858 = vunpack.c.l.b16 %v556
        %v1859 = vunpack.c.h.b16 %v556
        %v1860 = vunpack.c.l.b16 %v557
        %v1861 = vunpack.c.h.b16 %v557
        %v1862 = vunpack.c.l.b16 %v558
        %v1863 = vunpack.c.h.b16 %v558
        %v1864 = vunpack.c.l.b16 %v559
        %v1865 = vunpack.c.h.b16 %v559
        %v1866 = vunpack.c.l.b16 %v560
        %v1867 = vunpack.c.h.b16 %v560
        %v1868 = vunpack.c.l.b16 %v561
        %v1869 = vunpack.c.h.b16 %v561
        %v1870 = vunpack.c.l.b16 %v562
        %v1871 = vunpack.c.h.b16 %v562
        %v1872 = vunpack.c.l.b16 %v563
        %v1873 = vunpack.c.h.b16 %v563
        %v1874 = vunpack.c.l.b16 %v564
        %v1875 = vunpack.c.h.b16 %v564
        %v1876 = vunpack.c.l.b16 %v565
        %v1877 = vunpack.c.h.b16 %v565
        %v1878 = vunpack.c.l.b16 %v566
        %v1879 = vunpack.c.h.b16 %v566
        %v1880 = vunpack.c.l.b16 %v567
        %v1881 = vunpack.c.h.b16 %v567
        %v1882 = vunpack.c.l.b16 %v568
        %v1883 = vunpack.c.h.b16 %v568
        %v1884 = vunpack.c.l.b16 %v569
        %v1885 = vunpack.c.h.b16 %v569
        %v1886 = vunpack.c.l.b16 %v570
        %v1887 = vunpack.c.h.b16 %v570
        %v1888 = vunpack.c.l.b16 %v571
        %v1889 = vunpack.c.h.b16 %v571
        %v1890 = vunpack.c.l.b16 %v572
        %v1891 = vunpack.c.h.b16 %v572
        %v1892 = vunpack.c.l.b16 %v573
        %v1893 = vunpack.c.h.b16 %v573
        %v1894 = vunpack.c.l.b16 %v574
        %v1895 = vunpack.c.h.b16 %v574
        %v1896 = vunpack.c.l.b16 %v575
        %v1897 = vunpack.c.h.b16 %v575
        %v1898 = vunpack.c.l.b16 %v576
        %v1899 = vunpack.c.h.b16 %v576
        %v1900 = vunpack.c.l.b16 %v577
        %v1901 = vunpack.c.h.b16 %v577
        %v1902 = vunpack.c.l.b16 %v578
        %v1903 = vunpack.c.h.b16 %v578
        %v1904 = vunpack.c.l.b16 %v579
        %v1905 = vunpack.c.h.b16 %v579
        %v1906 = vunpack.c.l.b16 %v580
        %v1907 = vunpack.c.h.b16 %v580
        %v1908 = vunpack.c.l.b16 %v581
        %v1909 = vunpack.c.h.b16 %v581
        %v1910 = vunpack.c.l.b16 %v582
        %v1911 = vunpack.c.h.b16 %v582
        %v1912 = vunpack.c.l.b16 %v583
        %v1913 = vunpack.c.h.b16 %v583
        %v1914 = vunpack.c.l.b16 %v584
        %v1915 = vunpack.c.h.b16 %v584
        %v1916 = vunpack.c.l.b16 %v585
        %v1917 = vunpack.c.h.b16 %v585
        %v1918 = vunpack.c.l.b16 %v586
        %v1919 = vunpack.c.h.b16 %v586
        %v1920 = vunpack.c.l.b16 %v587
        %v1921 = vunpack.c.h.b16 %v587
        %v1922 = vunpack.c.l.b16 %v588
        %v1923 = vunpack.c.h.b16 %v588
        %v1924 = vunpack.c.l.b16 %v589
        %v1925 = vunpack.c.h.b16 %v589
        %v1926 = vunpack.c.l.b16 %v590
        %v1927 = vunpack.c.h.b16 %v590
        %v1928 = vunpack.c.l.b16 %v591
        %v1929 = vunpack.c.h.b16 %v591
        %v1930 = vunpack.c.l.b16 %v592
        %v1931 = vunpack.c.h.b16 %v592
        %v1932 = vunpack.c.l.b16 %v593
        %v1933 = vunpack.c.h.b16 %v593
        %v1934 = vunpack.c.l.b16 %v594
        %v1935 = vunpack.c.h.b16 %v594
        %v1936 = vunpack.c.l.b16 %v595
        %v1937 = vunpack.c.h.b16 %v595
        %v1938 = vunpack.c.l.b16 %v596
        %v1939 = vunpack.c.h.b16 %v596
        %v1940 = vunpack.c.l.b16 %v597
        %v1941 = vunpack.c.h.b16 %v597
        %v1942 = vunpack.c.l.b16 %v598
        %v1943 = vunpack.c.h.b16 %v598
        %v1944 = vunpack.c.l.b16 %v599
        %v1945 = vunpack.c.h.b16 %v599
        %v1946 = vunpack.c.l.b16 %v600
        %v1947 = vunpack.c.h.b16 %v600
        %v1948 = vunpack.c.l.b16 %v601
        %v1949 = vunpack.c.h.b16 %v601
        %v1950 = vunpack.c.l.b16 %v602
        %v1951 = vunpack.c.h.b16 %v602
        %v1952 = vunpack.c.l.b16 %v603
        %v1953 = vunpack.c.h.b16 %v603
        %v1954 = vunpack.c.l.b16 %v604
        %v1955 = vunpack.c.h.b16 %v604
        %v1956 = vunpack.c.l.b16 %v605
        %v1957 = vunpack.c.h.b16 %v605
        %v1958 = vunpack.c.l.b16 %v606
        %v1959 = vunpack.c.h.b16 %v606
        %v1960 = vunpack.c.l.b16 %v607
        %v1961 = vunpack.c.h.b16 %v607
        %v1962 = vunpack.c.l.b16 %v608
        %v1963 = vunpack.c.h.b16 %v608
        %v1964 = vunpack.c.l.b16 %v609
        %v1965 = vunpack.c.h.b16 %v609
        %v1966 = vunpack.c.l.b16 %v610
        %v1967 = vunpack.c.h.b16 %v610
        %v1968 = vunpack.c.l.b16 %v611
        %v1969 = vunpack.c.h.b16 %v611
        %v1970 = vunpack.c.l.b16 %v612
        %v1971 = vunpack.c.h.b16 %v612
        %v1972 = vunpack.c.l.b16 %v613
        %v1973 = vunpack.c.h.b16 %v613
        %v1974 = vunpack.c.l.b16 %v614
        %v1975 = vunpack.c.h.b16 %v614
        %v1976 = vunpack.c.l.b16 %v615
        %v1977 = vunpack.c.h.b16 %v615
        %v1978 = vunpack.c.l.b16 %v616
        %v1979 = vunpack.c.h.b16 %v616
        %v1980 = vunpack.c.l.b16 %v617
        %v1981 = vunpack.c.h.b16 %v617
        %v1982 = vunpack.c.l.b16 %v618
        %v1983 = vunpack.c.h.b16 %v618
        %v1984 = vunpack.c.l.b16 %v619
        %v1985 = vunpack.c.h.b16 %v619
        %v1986 = vunpack.c.l.b16 %v620
        %v1987 = vunpack.c.h.b16 %v620
        %v1988 = vunpack.c.l.b16 %v621
        %v1989 = vunpack.c.h.b16 %v621
        %v1990 = vunpack.c.l.b16 %v622
        %v1991 = vunpack.c.h.b16 %v622
        %v1992 = vunpack.c.l.b16 %v623
        %v1993 = vunpack.c.h.b16 %v623
        %v1994 = vunpack.c.l.b16 %v624
        %v1995 = vunpack.c.h.b16 %v624
        %v1996 = vunpack.c.l.b16 %v625
        %v1997 = vunpack.c.h.b16 %v625
        %v1998 = vunpack.c.l.b16 %v626
        %v1999 = vunpack.c.h.b16 %v626
        %v2000 = vunpack.c.l.b16 %v627
        %v2001 = vunpack.c.h.b16 %v627
        %v2002 = vunpack.c.l.b16 %v628
        %v2003 = vunpack.c.h.b16 %v628
        %v2004 = vunpack.c.l.b16 %v629
        %v2005 = vunpack.c.h.b16 %v629
        %v2006 = vunpack.c.l.b16 %v630
        %v2007 = vunpack.c.h.b16 %v630
        %v2008 = vunpack.c.l.b16 %v631
        %v2009 = vunpack.c.h.b16 %v631
        %v2010 = vunpack.c.l.b16 %v632
        %v2011 = vunpack.c.h.b16 %v632
        %v2012 = vunpack.c.l.b16 %v633
        %v2013 = vunpack.c.h.b16 %v633
        %v2014 = vunpack.c.l.b16 %v634
        %v2015 = vunpack.c.h.b16 %v634
        %v2016 = vunpack.c.l.b16 %v635
        %v2017 = vunpack.c.h.b16 %v635
        %v2018 = vunpack.c.l.b16 %v636
        %v2019 = vunpack.c.h.b16 %v636
        %v2020 = vunpack.c.l.b16 %v637
        %v2021 = vunpack.c.h.b16 %v637
        %v2022 = vunpack.c.l.b16 %v638
        %v2023 = vunpack.c.h.b16 %v638
        %v2024 = vunpack.c.l.b16 %v639
        %v2025 = vunpack.c.h.b16 %v639
        %v2026 = vunpack.c.l.b16 %v640
        %v2027 = vunpack.c.h.b16 %v640
        %v2028 = vunpack.c.l.b16 %v641
        %v2029 = vunpack.c.h.b16 %v641
        %v2030 = vunpack.c.l.b16 %v642
        %v2031 = vunpack.c.h.b16 %v642
        %v2032 = vunpack.c.l.b16 %v643
        %v2033 = vunpack.c.h.b16 %v643
        %v2034 = vunpack.c.l.b16 %v644
        %v2035 = vunpack.c.h.b16 %v644
        %v2036 = vunpack.c.l.b16 %v645
        %v2037 = vunpack.c.h.b16 %v645
        %v2038 = vunpack.c.l.b16 %v646
        %v2039 = vunpack.c.h.b16 %v646
        %v2040 = vunpack.c.l.b16 %v647
        %v2041 = vunpack.c.h.b16 %v647
        %v2042 = vunpack.c.l.b16 %v648
        %v2043 = vunpack.c.h.b16 %v648
        %v2044 = vunpack.c.l.b16 %v649
        %v2045 = vunpack.c.h.b16 %v649
        %v2046 = vunpack.c.l.b16 %v650
        %v2047 = vunpack.c.h.b16 %v650
        %v2048 = vunpack.c.l.b16 %v651
        %v2049 = vunpack.c.h.b16 %v651
        %v2050 = vunpack.c.l.b16 %v652
        %v2051 = vunpack.c.h.b16 %v652
        %v2052 = vunpack.c.l.b16 %v653
        %v2053 = vunpack.c.h.b16 %v653
        %v2054 = vunpack.c.l.b16 %v654
        %v2055 = vunpack.c.h.b16 %v654
        %v2056 = vunpack.c.l.b16 %v655
        %v2057 = vunpack.c.h.b16 %v655
        %v2058 = vunpack.c.l.b16 %v656
        %v2059 = vunpack.c.h.b16 %v656
        %v2060 = vunpack.c.l.b16 %v657
        %v2061 = vunpack.c.h.b16 %v657
        %v2062 = vunpack.c.l.b16 %v658
        %v2063 = vunpack.c.h.b16 %v658
        %v2064 = vunpack.c.l.b16 %v659
        %v2065 = vunpack.c.h.b16 %v659
        %v2066 = vunpack.c.l.b16 %v660
        %v2067 = vunpack.c.h.b16 %v660
        %v2068 = vunpack.c.l.b16 %v661
        %v2069 = vunpack.c.h.b16 %v661
        %v2070 = vunpack.c.l.b16 %v662
        %v2071 = vunpack.c.h.b16 %v662
        %v2072 = vunpack.c.l.b16 %v663
        %v2073 = vunpack.c.h.b16 %v663
        %v2074 = vunpack.c.l.b16 %v664
        %v2075 = vunpack.c.h.b16 %v664
        %v2076 = vunpack.c.l.b16 %v665
        %v2077 = vunpack.c.h.b16 %v665
        %v2078 = vunpack.c.l.b16 %v666
        %v2079 = vunpack.c.h.b16 %v666
        %v2080 = vunpack.c.l.b16 %v667
        %v2081 = vunpack.c.h.b16 %v667
        %v2082 = vunpack.c.l.b16 %v668
        %v2083 = vunpack.c.h.b16 %v668
        %v2084 = vunpack.c.l.b16 %v669
        %v2085 = vunpack.c.h.b16 %v669
        %v2086 = vunpack.c.l.b16 %v670
        %v2087 = vunpack.c.h.b16 %v670
        %v2088 = vunpack.c.l.b16 %v671
        %v2089 = vunpack.c.h.b16 %v671
        %v2090 = vunpack.c.l.b16 %v672
        %v2091 = vunpack.c.h.b16 %v672
        %v2092 = vunpack.c.l.b16 %v673
        %v2093 = vunpack.c.h.b16 %v673
        %v2094 = vunpack.c.l.b16 %v674
        %v2095 = vunpack.c.h.b16 %v674
        %v2096 = vunpack.c.l.b16 %v675
        %v2097 = vunpack.c.h.b16 %v675
        %v2098 = vunpack.c.l.b16 %v676
        %v2099 = vunpack.c.h.b16 %v676
        %v2100 = vunpack.c.l.b16 %v677
        %v2101 = vunpack.c.h.b16 %v677
        %v2102 = vunpack.c.l.b16 %v678
        %v2103 = vunpack.c.h.b16 %v678
        %v2104 = vunpack.c.l.b16 %v679
        %v2105 = vunpack.c.h.b16 %v679
        %v2106 = vunpack.c.l.b16 %v680
        %v2107 = vunpack.c.h.b16 %v680
        %v2108 = vunpack.c.l.b16 %v681
        %v2109 = vunpack.c.h.b16 %v681
        %v2110 = vunpack.c.l.b16 %v682
        %v2111 = vunpack.c.h.b16 %v682
        %v2112 = vunpack.c.l.b16 %v683
        %v2113 = vunpack.c.h.b16 %v683
        %v2114 = vpack.c.b16 %v1606, %v1602
        %v2115 = vpack.c.b16 %v1607, %v1603
        %v2116 = vpack.c.b16 %v1608, %v1604
        %v2117 = vpack.c.b16 %v1609, %v1605
        %v2118 = vpack.c.b16 %v1614, %v1610
        %v2119 = vpack.c.b16 %v1615, %v1611
        %v2120 = vpack.c.b16 %v1616, %v1612
        %v2121 = vpack.c.b16 %v1617, %v1613
        %v2122 = vpack.c.b16 %v1622, %v1618
        %v2123 = vpack.c.b16 %v1623, %v1619
        %v2124 = vpack.c.b16 %v1624, %v1620
        %v2125 = vpack.c.b16 %v1625, %v1621
        %v2126 = vpack.c.b16 %v1630, %v1626
        %v2127 = vpack.c.b16 %v1631, %v1627
        %v2128 = vpack.c.b16 %v1632, %v1628
        %v2129 = vpack.c.b16 %v1633, %v1629
        %v2130 = vpack.c.b16 %v1638, %v1634
        %v2131 = vpack.c.b16 %v1639, %v1635
        %v2132 = vpack.c.b16 %v1640, %v1636
        %v2133 = vpack.c.b16 %v1641, %v1637
        %v2134 = vpack.c.b16 %v1646, %v1642
        %v2135 = vpack.c.b16 %v1647, %v1643
        %v2136 = vpack.c.b16 %v1648, %v1644
        %v2137 = vpack.c.b16 %v1649, %v1645
        %v2138 = vpack.c.b16 %v1654, %v1650
        %v2139 = vpack.c.b16 %v1655, %v1651
        %v2140 = vpack.c.b16 %v1656, %v1652
        %v2141 = vpack.c.b16 %v1657, %v1653
        %v2142 = vpack.c.b16 %v1662, %v1658
        %v2143 = vpack.c.b16 %v1663, %v1659
        %v2144 = vpack.c.b16 %v1664, %v1660
        %v2145 = vpack.c.b16 %v1665, %v1661
        %v2146 = vpack.c.b16 %v1670, %v1666
        %v2147 = vpack.c.b16 %v1671, %v1667
        %v2148 = vpack.c.b16 %v1672, %v1668
        %v2149 = vpack.c.b16 %v1673, %v1669
        %v2150 = vpack.c.b16 %v1678, %v1674
        %v2151 = vpack.c.b16 %v1679, %v1675
        %v2152 = vpack.c.b16 %v1680, %v1676
        %v2153 = vpack.c.b16 %v1681, %v1677
        %v2154 = vpack.c.b16 %v1686, %v1682
        %v2155 = vpack.c.b16 %v1687, %v1683
        %v2156 = vpack.c.b16 %v1688, %v1684
        %v2157 = vpack.c.b16 %v1689, %v1685
        %v2158 = vpack.c.b16 %v1694, %v1690
        %v2159 = vpack.c.b16 %v1695, %v1691
        %v2160 = vpack.c.b16 %v1696, %v1692
        %v2161 = vpack.c.b16 %v1697, %v1693
        %v2162 = vpack.c.b16 %v1702, %v1698
        %v2163 = vpack.c.b16 %v1703, %v1699
        %v2164 = vpack.c.b16 %v1704, %v1700
        %v2165 = vpack.c.b16 %v1705, %v1701
        %v2166 = vpack.c.b16 %v1710, %v1706
        %v2167 = vpack.c.b16 %v1711, %v1707
        %v2168 = vpack.c.b16 %v1712, %v1708
        %v2169 = vpack.c.b16 %v1713, %v1709
        %v2170 = vpack.c.b16 %v1718, %v1714
        %v2171 = vpack.c.b16 %v1719, %v1715
        %v2172 = vpack.c.b16 %v1720, %v1716
        %v2173 = vpack.c.b16 %v1721, %v1717
        %v2174 = vpack.c.b16 %v1726, %v1722
        %v2175 = vpack.c.b16 %v1727, %v1723
        %v2176 = vpack.c.b16 %v1728, %v1724
        %v2177 = vpack.c.b16 %v1729, %v1725
        %v2178 = vpack.c.b16 %v1734, %v1730
        %v2179 = vpack.c.b16 %v1735, %v1731
        %v2180 = vpack.c.b16 %v1736, %v1732
        %v2181 = vpack.c.b16 %v1737, %v1733
        %v2182 = vpack.c.b16 %v1742, %v1738
        %v2183 = vpack.c.b16 %v1743, %v1739
        %v2184 = vpack.c.b16 %v1744, %v1740
        %v2185 = vpack.c.b16 %v1745, %v1741
        %v2186 = vpack.c.b16 %v1750, %v1746
        %v2187 = vpack.c.b16 %v1751, %v1747
        %v2188 = vpack.c.b16 %v1752, %v1748
        %v2189 = vpack.c.b16 %v1753, %v1749
        %v2190 = vpack.c.b16 %v1758, %v1754
        %v2191 = vpack.c.b16 %v1759, %v1755
        %v2192 = vpack.c.b16 %v1760, %v1756
        %v2193 = vpack.c.b16 %v1761, %v1757
        %v2194 = vpack.c.b16 %v1766, %v1762
        %v2195 = vpack.c.b16 %v1767, %v1763
        %v2196 = vpack.c.b16 %v1768, %v1764
        %v2197 = vpack.c.b16 %v1769, %v1765
        %v2198 = vpack.c.b16 %v1774, %v1770
        %v2199 = vpack.c.b16 %v1775, %v1771
        %v2200 = vpack.c.b16 %v1776, %v1772
        %v2201 = vpack.c.b16 %v1777, %v1773
        %v2202 = vpack.c.b16 %v1782, %v1778
        %v2203 = vpack.c.b16 %v1783, %v1779
        %v2204 = vpack.c.b16 %v1784, %v1780
        %v2205 = vpack.c.b16 %v1785, %v1781
        %v2206 = vpack.c.b16 %v1790, %v1786
        %v2207 = vpack.c.b16 %v1791, %v1787
        %v2208 = vpack.c.b16 %v1792, %v1788
        %v2209 = vpack.c.b16 %v1793, %v1789
        %v2210 = vpack.c.b16 %v1798, %v1794
        %v2211 = vpack.c.b16 %v1799, %v1795
        %v2212 = vpack.c.b16 %v1800, %v1796
        %v2213 = vpack.c.b16 %v1801, %v1797
        %v2214 = vpack.c.b16 %v1806, %v1802
        %v2215 = vpack.c.b16 %v1807, %v1803
        %v2216 = vpack.c.b16 %v1808, %v1804
        %v2217 = vpack.c.b16 %v1809, %v1805
        %v2218 = vpack.c.b16 %v1814, %v1810
        %v2219 = vpack.c.b16 %v1815, %v1811
        %v2220 = vpack.c.b16 %v1816, %v1812
        %v2221 = vpack.c.b16 %v1817, %v1813
        %v2222 = vpack.c.b16 %v1822, %v1818
        %v2223 = vpack.c.b16 %v1823, %v1819
        %v2224 = vpack.c.b16 %v1824, %v1820
        %v2225 = vpack.c.b16 %v1825, %v1821
        %v2226 = vpack.c.b16 %v1830, %v1826
        %v2227 = vpack.c.b16 %v1831, %v1827
        %v2228 = vpack.c.b16 %v1832, %v1828
        %v2229 = vpack.c.b16 %v1833, %v1829
        %v2230 = vpack.c.b16 %v1838, %v1834
        %v2231 = vpack.c.b16 %v1839, %v1835
        %v2232 = vpack.c.b16 %v1840, %v1836
        %v2233 = vpack.c.b16 %v1841, %v1837
        %v2234 = vpack.c.b16 %v1846, %v1842
        %v2235 = vpack.c.b16 %v1847, %v1843
        %v2236 = vpack.c.b16 %v1848, %v1844
        %v2237 = vpack.c.b16 %v1849, %v1845
        %v2238 = vpack.c.b16 %v1854, %v1850
        %v2239 = vpack.c.b16 %v1855, %v1851
        %v2240 = vpack.c.b16 %v1856, %v1852
        %v2241 = vpack.c.b16 %v1857, %v1853
        %v2242 = vpack.c.b16 %v1862, %v1858
        %v2243 = vpack.c.b16 %v1863, %v1859
        %v2244 = vpack.c.b16 %v1864, %v1860
        %v2245 = vpack.c.b16 %v1865, %v1861
        %v2246 = vpack.c.b16 %v1870, %v1866
        %v2247 = vpack.c.b16 %v1871, %v1867
        %v2248 = vpack.c.b16 %v1872, %v1868
        %v2249 = vpack.c.b16 %v1873, %v1869
        %v2250 = vpack.c.b16 %v1878, %v1874
        %v2251 = vpack.c.b16 %v1879, %v1875
        %v2252 = vpack.c.b16 %v1880, %v1876
        %v2253 = vpack.c.b16 %v1881, %v1877
        %v2254 = vpack.c.b16 %v1886, %v1882
        %v2255 = vpack.c.b16 %v1887, %v1883
        %v2256 = vpack.c.b16 %v1888, %v1884
        %v2257 = vpack.c.b16 %v1889, %v1885
        %v2258 = vpack.c.b16 %v1894, %v1890
        %v2259 = vpack.c.b16 %v1895, %v1891
        %v2260 = vpack.c.b16 %v1896, %v1892
        %v2261 = vpack.c.b16 %v1897, %v1893
        %v2262 = vpack.c.b16 %v1902, %v1898
        %v2263 = vpack.c.b16 %v1903, %v1899
        %v2264 = vpack.c.b16 %v1904, %v1900
        %v2265 = vpack.c.b16 %v1905, %v1901
        %v2266 = vpack.c.b16 %v1910, %v1906
        %v2267 = vpack.c.b16 %v1911, %v1907
        %v2268 = vpack.c.b16 %v1912, %v1908
        %v2269 = vpack.c.b16 %v1913, %v1909
        %v2270 = vpack.c.b16 %v1918, %v1914
        %v2271 = vpack.c.b16 %v1919, %v1915
        %v2272 = vpack.c.b16 %v1920, %v1916
        %v2273 = vpack.c.b16 %v1921, %v1917
        %v2274 = vpack.c.b16 %v1926, %v1922
        %v2275 = vpack.c.b16 %v1927, %v1923
        %v2276 = vpack.c.b16 %v1928, %v1924
        %v2277 = vpack.c.b16 %v1929, %v1925
        %v2278 = vpack.c.b16 %v1934, %v1930
        %v2279 = vpack.c.b16 %v1935, %v1931
        %v2280 = vpack.c.b16 %v1936, %v1932
        %v2281 = vpack.c.b16 %v1937, %v1933
        %v2282 = vpack.c.b16 %v1942, %v1938
        %v2283 = vpack.c.b16 %v1943, %v1939
        %v2284 = vpack.c.b16 %v1944, %v1940
        %v2285 = vpack.c.b16 %v1945, %v1941
        %v2286 = vpack.c.b16 %v1950, %v1946
        %v2287 = vpack.c.b16 %v1951, %v1947
        %v2288 = vpack.c.b16 %v1952, %v1948
        %v2289 = vpack.c.b16 %v1953, %v1949
        %v2290 = vpack.c.b16 %v1958, %v1954
        %v2291 = vpack.c.b16 %v1959, %v1955
        %v2292 = vpack.c.b16 %v1960, %v1956
        %v2293 = vpack.c.b16 %v1961, %v1957
        %v2294 = vpack.c.b16 %v1966, %v1962
        %v2295 = vpack.c.b16 %v1967, %v1963
        %v2296 = vpack.c.b16 %v1968, %v1964
        %v2297 = vpack.c.b16 %v1969, %v1965
        %v2298 = vpack.c.b16 %v1974, %v1970
        %v2299 = vpack.c.b16 %v1975, %v1971
        %v2300 = vpack.c.b16 %v1976, %v1972
        %v2301 = vpack.c.b16 %v1977, %v1973
        %v2302 = vpack.c.b16 %v1982, %v1978
        %v2303 = vpack.c.b16 %v1983, %v1979
        %v2304 = vpack.c.b16 %v1984, %v1980
        %v2305 = vpack.c.b16 %v1985, %v1981
        %v2306 = vpack.c.b16 %v1990, %v1986
        %v2307 = vpack.c.b16 %v1991, %v1987
        %v2308 = vpack.c.b16 %v1992, %v1988
        %v2309 = vpack.c.b16 %v1993, %v1989
        %v2310 = vpack.c.b16 %v1998, %v1994
        %v2311 = vpack.c.b16 %v1999, %v1995
        %v2312 = vpack.c.b16 %v2000, %v1996
        %v2313 = vpack.c.b16 %v2001, %v1997
        %v2314 = vpack.c.b16 %v2006, %v2002
        %v2315 = vpack.c.b16 %v2007, %v2003
        %v2316 = vpack.c.b16 %v2008, %v2004
        %v2317 = vpack.c.b16 %v2009, %v2005
        %v2318 = vpack.c.b16 %v2014, %v2010
        %v2319 = vpack.c.b16 %v2015, %v2011
        %v2320 = vpack.c.b16 %v2016, %v2012
        %v2321 = vpack.c.b16 %v2017, %v2013
        %v2322 = vpack.c.b16 %v2022, %v2018
        %v2323 = vpack.c.b16 %v2023, %v2019
        %v2324 = vpack.c.b16 %v2024, %v2020
        %v2325 = vpack.c.b16 %v2025, %v2021
        %v2326 = vpack.c.b16 %v2030, %v2026
        %v2327 = vpack.c.b16 %v2031, %v2027
        %v2328 = vpack.c.b16 %v2032, %v2028
        %v2329 = vpack.c.b16 %v2033, %v2029
        %v2330 = vpack.c.b16 %v2038, %v2034
        %v2331 = vpack.c.b16 %v2039, %v2035
        %v2332 = vpack.c.b16 %v2040, %v2036
        %v2333 = vpack.c.b16 %v2041, %v2037
        %v2334 = vpack.c.b16 %v2046, %v2042
        %v2335 = vpack.c.b16 %v2047, %v2043
        %v2336 = vpack.c.b16 %v2048, %v2044
        %v2337 = vpack.c.b16 %v2049, %v2045
        %v2338 = vpack.c.b16 %v2054, %v2050
        %v2339 = vpack.c.b16 %v2055, %v2051
        %v2340 = vpack.c.b16 %v2056, %v2052
        %v2341 = vpack.c.b16 %v2057, %v2053
        %v2342 = vpack.c.b16 %v2062, %v2058
        %v2343 = vpack.c.b16 %v2063, %v2059
        %v2344 = vpack.c.b16 %v2064, %v2060
        %v2345 = vpack.c.b16 %v2065, %v2061
        %v2346 = vpack.c.b16 %v2070, %v2066
        %v2347 = vpack.c.b16 %v2071, %v2067
        %v2348 = vpack.c.b16 %v2072, %v2068
        %v2349 = vpack.c.b16 %v2073, %v2069
        %v2350 = vpack.c.b16 %v2078, %v2074
        %v2351 = vpack.c.b16 %v2079, %v2075
        %v2352 = vpack.c.b16 %v2080, %v2076
        %v2353 = vpack.c.b16 %v2081, %v2077
        %v2354 = vpack.c.b16 %v2086, %v2082
        %v2355 = vpack.c.b16 %v2087, %v2083
        %v2356 = vpack.c.b16 %v2088, %v2084
        %v2357 = vpack.c.b16 %v2089, %v2085
        %v2358 = vpack.c.b16 %v2094, %v2090
        %v2359 = vpack.c.b16 %v2095, %v2091
        %v2360 = vpack.c.b16 %v2096, %v2092
        %v2361 = vpack.c.b16 %v2097, %v2093
        %v2362 = vpack.c.b16 %v2102, %v2098
        %v2363 = vpack.c.b16 %v2103, %v2099
        %v2364 = vpack.c.b16 %v2104, %v2100
        %v2365 = vpack.c.b16 %v2105, %v2101
        %v2366 = vpack.c.b16 %v2110, %v2106
        %v2367 = vpack.c.b16 %v2111, %v2107
        %v2368 = vpack.c.b16 %v2112, %v2108
        %v2369 = vpack.c.b16 %v2113, %v2109
        %2626 = vmatprep.subr.bf16.mxu0 %v2143
        %2627 = vmatpush1.bf16.msra.mxu0 %v2142
        %2628 = vmatprep.subr.bf16.mxu0 %v2139
        %2629 = vmatpush1.bf16.msra.mxu0 %v2138
        %2630 = vmatprep.subr.bf16.mxu0 %v2135
        %2631 = vmatpush1.bf16.msra.mxu0 %v2134
        %2632 = vmatprep.subr.bf16.mxu0 %v2131
        %2633 = vmatpush1.bf16.msra.mxu0 %v2130
        %2634 = vmatprep.subr.bf16.mxu0 %v2127
        %2635 = vmatpush1.bf16.msra.mxu0 %v2126
        %2636 = vmatprep.subr.bf16.mxu0 %v2123
        %2637 = vmatpush1.bf16.msra.mxu0 %v2122
        %2638 = vmatprep.subr.bf16.mxu0 %v2119
        %2639 = vmatpush1.bf16.msra.mxu0 %v2118
        %2640 = vmatprep.subr.bf16.mxu0 %v2115
        %2641 = vmatpush1.bf16.msra.mxu0 %v2114
        %2642 = vmatprep.subr.bf16.mxu0 %v2175
        %2643 = vmatpush2.bf16.msra.mxu0 %v2174
        %2644 = vmatprep.subr.bf16.mxu0 %v2171
        %2645 = vmatpush2.bf16.msra.mxu0 %v2170
        %2646 = vmatprep.subr.bf16.mxu0 %v2167
        %2647 = vmatpush2.bf16.msra.mxu0 %v2166
        %2648 = vmatprep.subr.bf16.mxu0 %v2163
        %2649 = vmatpush2.bf16.msra.mxu0 %v2162
        %2650 = vmatprep.subr.bf16.mxu0 %v2159
        %2651 = vmatpush2.bf16.msra.mxu0 %v2158
        %2652 = vmatprep.subr.bf16.mxu0 %v2155
        %2653 = vmatpush2.bf16.msra.mxu0 %v2154
        %2654 = vmatprep.subr.bf16.mxu0 %v2151
        %2655 = vmatpush2.bf16.msra.mxu0 %v2150
        %2656 = vmatprep.subr.bf16.mxu0 %v2147
        %2657 = vmatpush2.bf16.msra.mxu0 %v2146
        %2658 = vmatprep.mubr.bf16.mxu0 %v1091
        %2659 = vmatmul.mubr.bf16.gmra.mxu0 %v1090
        %v2660 = vpop.f32.mrf.mxu0
        %v2661 = vadd.f32 %v689, %v2660
        %v2662 = vpop.f32.mrf.mxu0
        %v2663 = vadd.f32 %v693, %v2662
        %v2664 = vpop.f32.mrf.mxu0
        %v2665 = vadd.f32 %v689, %v2664
        %v2666 = vpop.f32.mrf.mxu0
        %v2667 = vadd.f32 %v693, %v2666
        %2668 = vmatprep.mubr.bf16.mxu0 %v1099
        %2669 = vmatmul.mubr.bf16.gmra.mxu0 %v1098
        %v2670 = vpop.f32.mrf.mxu0
        %v2671 = vadd.f32 %v689, %v2670
        %v2672 = vpop.f32.mrf.mxu0
        %v2673 = vadd.f32 %v693, %v2672
        %v2674 = vpop.f32.mrf.mxu0
        %v2675 = vadd.f32 %v689, %v2674
        %v2676 = vpop.f32.mrf.mxu0
        %v2677 = vadd.f32 %v693, %v2676
        %2678 = vmatprep.mubr.bf16.mxu0 %v1107
        %2679 = vmatmul.mubr.bf16.gmra.mxu0 %v1106
        %v2680 = vpop.f32.mrf.mxu0
        %v2681 = vadd.f32 %v689, %v2680
        %v2682 = vpop.f32.mrf.mxu0
        %v2683 = vadd.f32 %v693, %v2682
        %v2684 = vpop.f32.mrf.mxu0
        %v2685 = vadd.f32 %v689, %v2684
        %v2686 = vpop.f32.mrf.mxu0
        %v2687 = vadd.f32 %v693, %v2686
        %2688 = vmatprep.mubr.bf16.mxu0 %v1115
        %2689 = vmatmul.mubr.bf16.gmra.mxu0 %v1114
        %v2690 = vpop.f32.mrf.mxu0
        %v2691 = vadd.f32 %v689, %v2690
        %v2692 = vpop.f32.mrf.mxu0
        %v2693 = vadd.f32 %v693, %v2692
        %v2694 = vpop.f32.mrf.mxu0
        %v2695 = vadd.f32 %v689, %v2694
        %v2696 = vpop.f32.mrf.mxu0
        %v2697 = vadd.f32 %v693, %v2696
        %2698 = vmatprep.mubr.bf16.mxu0 %v1123
        %2699 = vmatmul.mubr.bf16.gmra.mxu0 %v1122
        %v2700 = vpop.f32.mrf.mxu0
        %v2701 = vadd.f32 %v689, %v2700
        %v2702 = vpop.f32.mrf.mxu0
        %v2703 = vadd.f32 %v693, %v2702
        %v2704 = vpop.f32.mrf.mxu0
        %v2705 = vadd.f32 %v689, %v2704
        %v2706 = vpop.f32.mrf.mxu0
        %v2707 = vadd.f32 %v693, %v2706
        %2708 = vmatprep.mubr.bf16.mxu0 %v1131
        %2709 = vmatmul.mubr.bf16.gmra.mxu0 %v1130
        %v2710 = vpop.f32.mrf.mxu0
        %v2711 = vadd.f32 %v689, %v2710
        %v2712 = vpop.f32.mrf.mxu0
        %v2713 = vadd.f32 %v693, %v2712
        %v2714 = vpop.f32.mrf.mxu0
        %v2715 = vadd.f32 %v689, %v2714
        %v2716 = vpop.f32.mrf.mxu0
        %v2717 = vadd.f32 %v693, %v2716
        %2718 = vmatprep.mubr.bf16.mxu0 %v1139
        %2719 = vmatmul.mubr.bf16.gmra.mxu0 %v1138
        %v2720 = vpop.f32.mrf.mxu0
        %v2721 = vadd.f32 %v689, %v2720
        %v2722 = vpop.f32.mrf.mxu0
        %v2723 = vadd.f32 %v693, %v2722
        %v2724 = vpop.f32.mrf.mxu0
        %v2725 = vadd.f32 %v689, %v2724
        %v2726 = vpop.f32.mrf.mxu0
        %v2727 = vadd.f32 %v693, %v2726
        %2728 = vmatprep.mubr.bf16.mxu0 %v1147
        %2729 = vmatmul.mubr.bf16.gmra.mxu0 %v1146
        %v2730 = vpop.f32.mrf.mxu0
        %v2731 = vadd.f32 %v689, %v2730
        %v2732 = vpop.f32.mrf.mxu0
        %v2733 = vadd.f32 %v693, %v2732
        %v2734 = vpop.f32.mrf.mxu0
        %v2735 = vadd.f32 %v689, %v2734
        %v2736 = vpop.f32.mrf.mxu0
        %v2737 = vadd.f32 %v693, %v2736
        %2738 = vmatprep.mubr.bf16.mxu0 %v1155
        %2739 = vmatmul.mubr.bf16.gmra.mxu0 %v1154
        %v2740 = vpop.f32.mrf.mxu0
        %v2741 = vadd.f32 %v689, %v2740
        %v2742 = vpop.f32.mrf.mxu0
        %v2743 = vadd.f32 %v693, %v2742
        %v2744 = vpop.f32.mrf.mxu0
        %v2745 = vadd.f32 %v689, %v2744
        %v2746 = vpop.f32.mrf.mxu0
        %v2747 = vadd.f32 %v693, %v2746
        %2748 = vmatprep.mubr.bf16.mxu0 %v1163
        %2749 = vmatmul.mubr.bf16.gmra.mxu0 %v1162
        %v2750 = vpop.f32.mrf.mxu0
        %v2751 = vadd.f32 %v689, %v2750
        %v2752 = vpop.f32.mrf.mxu0
        %v2753 = vadd.f32 %v693, %v2752
        %v2754 = vpop.f32.mrf.mxu0
        %v2755 = vadd.f32 %v689, %v2754
        %v2756 = vpop.f32.mrf.mxu0
        %v2757 = vadd.f32 %v693, %v2756
        %2758 = vmatprep.mubr.bf16.mxu0 %v1171
        %2759 = vmatmul.mubr.bf16.gmra.mxu0 %v1170
        %v2760 = vpop.f32.mrf.mxu0
        %v2761 = vadd.f32 %v689, %v2760
        %v2762 = vpop.f32.mrf.mxu0
        %v2763 = vadd.f32 %v693, %v2762
        %v2764 = vpop.f32.mrf.mxu0
        %v2765 = vadd.f32 %v689, %v2764
        %v2766 = vpop.f32.mrf.mxu0
        %v2767 = vadd.f32 %v693, %v2766
        %2768 = vmatprep.mubr.bf16.mxu0 %v1179
        %2769 = vmatmul.mubr.bf16.gmra.mxu0 %v1178
        %v2770 = vpop.f32.mrf.mxu0
        %v2771 = vadd.f32 %v689, %v2770
        %v2772 = vpop.f32.mrf.mxu0
        %v2773 = vadd.f32 %v693, %v2772
        %v2774 = vpop.f32.mrf.mxu0
        %v2775 = vadd.f32 %v689, %v2774
        %v2776 = vpop.f32.mrf.mxu0
        %v2777 = vadd.f32 %v693, %v2776
        %2778 = vmatprep.mubr.bf16.mxu0 %v1187
        %2779 = vmatmul.mubr.bf16.gmra.mxu0 %v1186
        %v2780 = vpop.f32.mrf.mxu0
        %v2781 = vadd.f32 %v689, %v2780
        %v2782 = vpop.f32.mrf.mxu0
        %v2783 = vadd.f32 %v693, %v2782
        %v2784 = vpop.f32.mrf.mxu0
        %v2785 = vadd.f32 %v689, %v2784
        %v2786 = vpop.f32.mrf.mxu0
        %v2787 = vadd.f32 %v693, %v2786
        %2788 = vmatprep.mubr.bf16.mxu0 %v1195
        %2789 = vmatmul.mubr.bf16.gmra.mxu0 %v1194
        %v2790 = vpop.f32.mrf.mxu0
        %v2791 = vadd.f32 %v689, %v2790
        %v2792 = vpop.f32.mrf.mxu0
        %v2793 = vadd.f32 %v693, %v2792
        %v2794 = vpop.f32.mrf.mxu0
        %v2795 = vadd.f32 %v689, %v2794
        %v2796 = vpop.f32.mrf.mxu0
        %v2797 = vadd.f32 %v693, %v2796
        %2798 = vmatprep.mubr.bf16.mxu0 %v1203
        %2799 = vmatmul.mubr.bf16.gmra.mxu0 %v1202
        %v2800 = vpop.f32.mrf.mxu0
        %v2801 = vadd.f32 %v689, %v2800
        %v2802 = vpop.f32.mrf.mxu0
        %v2803 = vadd.f32 %v693, %v2802
        %v2804 = vpop.f32.mrf.mxu0
        %v2805 = vadd.f32 %v689, %v2804
        %v2806 = vpop.f32.mrf.mxu0
        %v2807 = vadd.f32 %v693, %v2806
        %2808 = vmatprep.mubr.bf16.mxu0 %v1211
        %2809 = vmatmul.mubr.bf16.gmra.mxu0 %v1210
        %v2810 = vpop.f32.mrf.mxu0
        %v2811 = vadd.f32 %v689, %v2810
        %v2812 = vpop.f32.mrf.mxu0
        %v2813 = vadd.f32 %v693, %v2812
        %v2814 = vpop.f32.mrf.mxu0
        %v2815 = vadd.f32 %v689, %v2814
        %v2816 = vpop.f32.mrf.mxu0
        %v2817 = vadd.f32 %v693, %v2816
        %2818 = vdwg.mxu0
        %2819 = vmatprep.subr.bf16.mxu0 %v2207
        %2820 = vmatpush1.bf16.msra.mxu0 %v2206
        %2821 = vmatprep.subr.bf16.mxu0 %v2203
        %2822 = vmatpush1.bf16.msra.mxu0 %v2202
        %2823 = vmatprep.subr.bf16.mxu0 %v2199
        %2824 = vmatpush1.bf16.msra.mxu0 %v2198
        %2825 = vmatprep.subr.bf16.mxu0 %v2195
        %2826 = vmatpush1.bf16.msra.mxu0 %v2194
        %2827 = vmatprep.subr.bf16.mxu0 %v2191
        %2828 = vmatpush1.bf16.msra.mxu0 %v2190
        %2829 = vmatprep.subr.bf16.mxu0 %v2187
        %2830 = vmatpush1.bf16.msra.mxu0 %v2186
        %2831 = vmatprep.subr.bf16.mxu0 %v2183
        %2832 = vmatpush1.bf16.msra.mxu0 %v2182
        %2833 = vmatprep.subr.bf16.mxu0 %v2179
        %2834 = vmatpush1.bf16.msra.mxu0 %v2178
        %2835 = vmatprep.subr.bf16.mxu0 %v2239
        %2836 = vmatpush2.bf16.msra.mxu0 %v2238
        %2837 = vmatprep.subr.bf16.mxu0 %v2235
        %2838 = vmatpush2.bf16.msra.mxu0 %v2234
        %2839 = vmatprep.subr.bf16.mxu0 %v2231
        %2840 = vmatpush2.bf16.msra.mxu0 %v2230
        %2841 = vmatprep.subr.bf16.mxu0 %v2227
        %2842 = vmatpush2.bf16.msra.mxu0 %v2226
        %2843 = vmatprep.subr.bf16.mxu0 %v2223
        %2844 = vmatpush2.bf16.msra.mxu0 %v2222
        %2845 = vmatprep.subr.bf16.mxu0 %v2219
        %2846 = vmatpush2.bf16.msra.mxu0 %v2218
        %2847 = vmatprep.subr.bf16.mxu0 %v2215
        %2848 = vmatpush2.bf16.msra.mxu0 %v2214
        %2849 = vmatprep.subr.bf16.mxu0 %v2211
        %2850 = vmatpush2.bf16.msra.mxu0 %v2210
        %2851 = vmatprep.mubr.bf16.mxu0 %v1093
        %2852 = vmatmul.mubr.bf16.gmra.mxu0 %v1092
        %v2853 = vpop.f32.mrf.mxu0
        %v2854 = vadd.f32 %v2661, %v2853
        %v2855 = vpop.f32.mrf.mxu0
        %v2856 = vadd.f32 %v2663, %v2855
        %v2857 = vpop.f32.mrf.mxu0
        %v2858 = vadd.f32 %v2665, %v2857
        %v2859 = vpop.f32.mrf.mxu0
        %v2860 = vadd.f32 %v2667, %v2859
        %2861 = vmatprep.mubr.bf16.mxu0 %v1101
        %2862 = vmatmul.mubr.bf16.gmra.mxu0 %v1100
        %v2863 = vpop.f32.mrf.mxu0
        %v2864 = vadd.f32 %v2671, %v2863
        %v2865 = vpop.f32.mrf.mxu0
        %v2866 = vadd.f32 %v2673, %v2865
        %v2867 = vpop.f32.mrf.mxu0
        %v2868 = vadd.f32 %v2675, %v2867
        %v2869 = vpop.f32.mrf.mxu0
        %v2870 = vadd.f32 %v2677, %v2869
        %2871 = vmatprep.mubr.bf16.mxu0 %v1109
        %2872 = vmatmul.mubr.bf16.gmra.mxu0 %v1108
        %v2873 = vpop.f32.mrf.mxu0
        %v2874 = vadd.f32 %v2681, %v2873
        %v2875 = vpop.f32.mrf.mxu0
        %v2876 = vadd.f32 %v2683, %v2875
        %v2877 = vpop.f32.mrf.mxu0
        %v2878 = vadd.f32 %v2685, %v2877
        %v2879 = vpop.f32.mrf.mxu0
        %v2880 = vadd.f32 %v2687, %v2879
        %2881 = vmatprep.mubr.bf16.mxu0 %v1117
        %2882 = vmatmul.mubr.bf16.gmra.mxu0 %v1116
        %v2883 = vpop.f32.mrf.mxu0
        %v2884 = vadd.f32 %v2691, %v2883
        %v2885 = vpop.f32.mrf.mxu0
        %v2886 = vadd.f32 %v2693, %v2885
        %v2887 = vpop.f32.mrf.mxu0
        %v2888 = vadd.f32 %v2695, %v2887
        %v2889 = vpop.f32.mrf.mxu0
        %v2890 = vadd.f32 %v2697, %v2889
        %2891 = vmatprep.mubr.bf16.mxu0 %v1125
        %2892 = vmatmul.mubr.bf16.gmra.mxu0 %v1124
        %v2893 = vpop.f32.mrf.mxu0
        %v2894 = vadd.f32 %v2701, %v2893
        %v2895 = vpop.f32.mrf.mxu0
        %v2896 = vadd.f32 %v2703, %v2895
        %v2897 = vpop.f32.mrf.mxu0
        %v2898 = vadd.f32 %v2705, %v2897
        %v2899 = vpop.f32.mrf.mxu0
        %v2900 = vadd.f32 %v2707, %v2899
        %2901 = vmatprep.mubr.bf16.mxu0 %v1133
        %2902 = vmatmul.mubr.bf16.gmra.mxu0 %v1132
        %v2903 = vpop.f32.mrf.mxu0
        %v2904 = vadd.f32 %v2711, %v2903
        %v2905 = vpop.f32.mrf.mxu0
        %v2906 = vadd.f32 %v2713, %v2905
        %v2907 = vpop.f32.mrf.mxu0
        %v2908 = vadd.f32 %v2715, %v2907
        %v2909 = vpop.f32.mrf.mxu0
        %v2910 = vadd.f32 %v2717, %v2909
        %2911 = vmatprep.mubr.bf16.mxu0 %v1141
        %2912 = vmatmul.mubr.bf16.gmra.mxu0 %v1140
        %v2913 = vpop.f32.mrf.mxu0
        %v2914 = vadd.f32 %v2721, %v2913
        %v2915 = vpop.f32.mrf.mxu0
        %v2916 = vadd.f32 %v2723, %v2915
        %v2917 = vpop.f32.mrf.mxu0
        %v2918 = vadd.f32 %v2725, %v2917
        %v2919 = vpop.f32.mrf.mxu0
        %v2920 = vadd.f32 %v2727, %v2919
        %2921 = vmatprep.mubr.bf16.mxu0 %v1149
        %2922 = vmatmul.mubr.bf16.gmra.mxu0 %v1148
        %v2923 = vpop.f32.mrf.mxu0
        %v2924 = vadd.f32 %v2731, %v2923
        %v2925 = vpop.f32.mrf.mxu0
        %v2926 = vadd.f32 %v2733, %v2925
        %v2927 = vpop.f32.mrf.mxu0
        %v2928 = vadd.f32 %v2735, %v2927
        %v2929 = vpop.f32.mrf.mxu0
        %v2930 = vadd.f32 %v2737, %v2929
        %2931 = vmatprep.mubr.bf16.mxu0 %v1157
        %2932 = vmatmul.mubr.bf16.gmra.mxu0 %v1156
        %v2933 = vpop.f32.mrf.mxu0
        %v2934 = vadd.f32 %v2741, %v2933
        %v2935 = vpop.f32.mrf.mxu0
        %v2936 = vadd.f32 %v2743, %v2935
        %v2937 = vpop.f32.mrf.mxu0
        %v2938 = vadd.f32 %v2745, %v2937
        %v2939 = vpop.f32.mrf.mxu0
        %v2940 = vadd.f32 %v2747, %v2939
        %2941 = vmatprep.mubr.bf16.mxu0 %v1165
        %2942 = vmatmul.mubr.bf16.gmra.mxu0 %v1164
        %v2943 = vpop.f32.mrf.mxu0
        %v2944 = vadd.f32 %v2751, %v2943
        %v2945 = vpop.f32.mrf.mxu0
        %v2946 = vadd.f32 %v2753, %v2945
        %v2947 = vpop.f32.mrf.mxu0
        %v2948 = vadd.f32 %v2755, %v2947
        %v2949 = vpop.f32.mrf.mxu0
        %v2950 = vadd.f32 %v2757, %v2949
        %2951 = vmatprep.mubr.bf16.mxu0 %v1173
        %2952 = vmatmul.mubr.bf16.gmra.mxu0 %v1172
        %v2953 = vpop.f32.mrf.mxu0
        %v2954 = vadd.f32 %v2761, %v2953
        %v2955 = vpop.f32.mrf.mxu0
        %v2956 = vadd.f32 %v2763, %v2955
        %v2957 = vpop.f32.mrf.mxu0
        %v2958 = vadd.f32 %v2765, %v2957
        %v2959 = vpop.f32.mrf.mxu0
        %v2960 = vadd.f32 %v2767, %v2959
        %2961 = vmatprep.mubr.bf16.mxu0 %v1181
        %2962 = vmatmul.mubr.bf16.gmra.mxu0 %v1180
        %v2963 = vpop.f32.mrf.mxu0
        %v2964 = vadd.f32 %v2771, %v2963
        %v2965 = vpop.f32.mrf.mxu0
        %v2966 = vadd.f32 %v2773, %v2965
        %v2967 = vpop.f32.mrf.mxu0
        %v2968 = vadd.f32 %v2775, %v2967
        %v2969 = vpop.f32.mrf.mxu0
        %v2970 = vadd.f32 %v2777, %v2969
        %2971 = vmatprep.mubr.bf16.mxu0 %v1189
        %2972 = vmatmul.mubr.bf16.gmra.mxu0 %v1188
        %v2973 = vpop.f32.mrf.mxu0
        %v2974 = vadd.f32 %v2781, %v2973
        %v2975 = vpop.f32.mrf.mxu0
        %v2976 = vadd.f32 %v2783, %v2975
        %v2977 = vpop.f32.mrf.mxu0
        %v2978 = vadd.f32 %v2785, %v2977
        %v2979 = vpop.f32.mrf.mxu0
        %v2980 = vadd.f32 %v2787, %v2979
        %2981 = vmatprep.mubr.bf16.mxu0 %v1197
        %2982 = vmatmul.mubr.bf16.gmra.mxu0 %v1196
        %v2983 = vpop.f32.mrf.mxu0
        %v2984 = vadd.f32 %v2791, %v2983
        %v2985 = vpop.f32.mrf.mxu0
        %v2986 = vadd.f32 %v2793, %v2985
        %v2987 = vpop.f32.mrf.mxu0
        %v2988 = vadd.f32 %v2795, %v2987
        %v2989 = vpop.f32.mrf.mxu0
        %v2990 = vadd.f32 %v2797, %v2989
        %2991 = vmatprep.mubr.bf16.mxu0 %v1205
        %2992 = vmatmul.mubr.bf16.gmra.mxu0 %v1204
        %v2993 = vpop.f32.mrf.mxu0
        %v2994 = vadd.f32 %v2801, %v2993
        %v2995 = vpop.f32.mrf.mxu0
        %v2996 = vadd.f32 %v2803, %v2995
        %v2997 = vpop.f32.mrf.mxu0
        %v2998 = vadd.f32 %v2805, %v2997
        %v2999 = vpop.f32.mrf.mxu0
        %v3000 = vadd.f32 %v2807, %v2999
        %3001 = vmatprep.mubr.bf16.mxu0 %v1213
        %3002 = vmatmul.mubr.bf16.gmra.mxu0 %v1212
        %v3003 = vpop.f32.mrf.mxu0
        %v3004 = vadd.f32 %v2811, %v3003
        %v3005 = vpop.f32.mrf.mxu0
        %v3006 = vadd.f32 %v2813, %v3005
        %v3007 = vpop.f32.mrf.mxu0
        %v3008 = vadd.f32 %v2815, %v3007
        %v3009 = vpop.f32.mrf.mxu0
        %v3010 = vadd.f32 %v2817, %v3009
        %3011 = vdwg.mxu0
        %3012 = vmatprep.subr.bf16.mxu0 %v2271
        %3013 = vmatpush1.bf16.msra.mxu0 %v2270
        %3014 = vmatprep.subr.bf16.mxu0 %v2267
        %3015 = vmatpush1.bf16.msra.mxu0 %v2266
        %3016 = vmatprep.subr.bf16.mxu0 %v2263
        %3017 = vmatpush1.bf16.msra.mxu0 %v2262
        %3018 = vmatprep.subr.bf16.mxu0 %v2259
        %3019 = vmatpush1.bf16.msra.mxu0 %v2258
        %3020 = vmatprep.subr.bf16.mxu0 %v2255
        %3021 = vmatpush1.bf16.msra.mxu0 %v2254
        %3022 = vmatprep.subr.bf16.mxu0 %v2251
        %3023 = vmatpush1.bf16.msra.mxu0 %v2250
        %3024 = vmatprep.subr.bf16.mxu0 %v2247
        %3025 = vmatpush1.bf16.msra.mxu0 %v2246
        %3026 = vmatprep.subr.bf16.mxu0 %v2243
        %3027 = vmatpush1.bf16.msra.mxu0 %v2242
        %3028 = vmatprep.subr.bf16.mxu0 %v2303
        %3029 = vmatpush2.bf16.msra.mxu0 %v2302
        %3030 = vmatprep.subr.bf16.mxu0 %v2299
        %3031 = vmatpush2.bf16.msra.mxu0 %v2298
        %3032 = vmatprep.subr.bf16.mxu0 %v2295
        %3033 = vmatpush2.bf16.msra.mxu0 %v2294
        %3034 = vmatprep.subr.bf16.mxu0 %v2291
        %3035 = vmatpush2.bf16.msra.mxu0 %v2290
        %3036 = vmatprep.subr.bf16.mxu0 %v2287
        %3037 = vmatpush2.bf16.msra.mxu0 %v2286
        %3038 = vmatprep.subr.bf16.mxu0 %v2283
        %3039 = vmatpush2.bf16.msra.mxu0 %v2282
        %3040 = vmatprep.subr.bf16.mxu0 %v2279
        %3041 = vmatpush2.bf16.msra.mxu0 %v2278
        %3042 = vmatprep.subr.bf16.mxu0 %v2275
        %3043 = vmatpush2.bf16.msra.mxu0 %v2274
        %3044 = vmatprep.mubr.bf16.mxu0 %v1095
        %3045 = vmatmul.mubr.bf16.gmra.mxu0 %v1094
        %v3046 = vpop.f32.mrf.mxu0
        %v3047 = vadd.f32 %v2854, %v3046
        %v3048 = vpop.f32.mrf.mxu0
        %v3049 = vadd.f32 %v2856, %v3048
        %v3050 = vpop.f32.mrf.mxu0
        %v3051 = vadd.f32 %v2858, %v3050
        %v3052 = vpop.f32.mrf.mxu0
        %v3053 = vadd.f32 %v2860, %v3052
        %3054 = vmatprep.mubr.bf16.mxu0 %v1103
        %3055 = vmatmul.mubr.bf16.gmra.mxu0 %v1102
        %v3056 = vpop.f32.mrf.mxu0
        %v3057 = vadd.f32 %v2864, %v3056
        %v3058 = vpop.f32.mrf.mxu0
        %v3059 = vadd.f32 %v2866, %v3058
        %v3060 = vpop.f32.mrf.mxu0
        %v3061 = vadd.f32 %v2868, %v3060
        %v3062 = vpop.f32.mrf.mxu0
        %v3063 = vadd.f32 %v2870, %v3062
        %3064 = vmatprep.mubr.bf16.mxu0 %v1111
        %3065 = vmatmul.mubr.bf16.gmra.mxu0 %v1110
        %v3066 = vpop.f32.mrf.mxu0
        %v3067 = vadd.f32 %v2874, %v3066
        %v3068 = vpop.f32.mrf.mxu0
        %v3069 = vadd.f32 %v2876, %v3068
        %v3070 = vpop.f32.mrf.mxu0
        %v3071 = vadd.f32 %v2878, %v3070
        %v3072 = vpop.f32.mrf.mxu0
        %v3073 = vadd.f32 %v2880, %v3072
        %3074 = vmatprep.mubr.bf16.mxu0 %v1119
        %3075 = vmatmul.mubr.bf16.gmra.mxu0 %v1118
        %v3076 = vpop.f32.mrf.mxu0
        %v3077 = vadd.f32 %v2884, %v3076
        %v3078 = vpop.f32.mrf.mxu0
        %v3079 = vadd.f32 %v2886, %v3078
        %v3080 = vpop.f32.mrf.mxu0
        %v3081 = vadd.f32 %v2888, %v3080
        %v3082 = vpop.f32.mrf.mxu0
        %v3083 = vadd.f32 %v2890, %v3082
        %3084 = vmatprep.mubr.bf16.mxu0 %v1127
        %3085 = vmatmul.mubr.bf16.gmra.mxu0 %v1126
        %v3086 = vpop.f32.mrf.mxu0
        %v3087 = vadd.f32 %v2894, %v3086
        %v3088 = vpop.f32.mrf.mxu0
        %v3089 = vadd.f32 %v2896, %v3088
        %v3090 = vpop.f32.mrf.mxu0
        %v3091 = vadd.f32 %v2898, %v3090
        %v3092 = vpop.f32.mrf.mxu0
        %v3093 = vadd.f32 %v2900, %v3092
        %3094 = vmatprep.mubr.bf16.mxu0 %v1135
        %3095 = vmatmul.mubr.bf16.gmra.mxu0 %v1134
        %v3096 = vpop.f32.mrf.mxu0
        %v3097 = vadd.f32 %v2904, %v3096
        %v3098 = vpop.f32.mrf.mxu0
        %v3099 = vadd.f32 %v2906, %v3098
        %v3100 = vpop.f32.mrf.mxu0
        %v3101 = vadd.f32 %v2908, %v3100
        %v3102 = vpop.f32.mrf.mxu0
        %v3103 = vadd.f32 %v2910, %v3102
        %3104 = vmatprep.mubr.bf16.mxu0 %v1143
        %3105 = vmatmul.mubr.bf16.gmra.mxu0 %v1142
        %v3106 = vpop.f32.mrf.mxu0
        %v3107 = vadd.f32 %v2914, %v3106
        %v3108 = vpop.f32.mrf.mxu0
        %v3109 = vadd.f32 %v2916, %v3108
        %v3110 = vpop.f32.mrf.mxu0
        %v3111 = vadd.f32 %v2918, %v3110
        %v3112 = vpop.f32.mrf.mxu0
        %v3113 = vadd.f32 %v2920, %v3112
        %3114 = vmatprep.mubr.bf16.mxu0 %v1151
        %3115 = vmatmul.mubr.bf16.gmra.mxu0 %v1150
        %v3116 = vpop.f32.mrf.mxu0
        %v3117 = vadd.f32 %v2924, %v3116
        %v3118 = vpop.f32.mrf.mxu0
        %v3119 = vadd.f32 %v2926, %v3118
        %v3120 = vpop.f32.mrf.mxu0
        %v3121 = vadd.f32 %v2928, %v3120
        %v3122 = vpop.f32.mrf.mxu0
        %v3123 = vadd.f32 %v2930, %v3122
        %3124 = vmatprep.mubr.bf16.mxu0 %v1159
        %3125 = vmatmul.mubr.bf16.gmra.mxu0 %v1158
        %v3126 = vpop.f32.mrf.mxu0
        %v3127 = vadd.f32 %v2934, %v3126
        %v3128 = vpop.f32.mrf.mxu0
        %v3129 = vadd.f32 %v2936, %v3128
        %v3130 = vpop.f32.mrf.mxu0
        %v3131 = vadd.f32 %v2938, %v3130
        %v3132 = vpop.f32.mrf.mxu0
        %v3133 = vadd.f32 %v2940, %v3132
        %3134 = vmatprep.mubr.bf16.mxu0 %v1167
        %3135 = vmatmul.mubr.bf16.gmra.mxu0 %v1166
        %v3136 = vpop.f32.mrf.mxu0
        %v3137 = vadd.f32 %v2944, %v3136
        %v3138 = vpop.f32.mrf.mxu0
        %v3139 = vadd.f32 %v2946, %v3138
        %v3140 = vpop.f32.mrf.mxu0
        %v3141 = vadd.f32 %v2948, %v3140
        %v3142 = vpop.f32.mrf.mxu0
        %v3143 = vadd.f32 %v2950, %v3142
        %3144 = vmatprep.mubr.bf16.mxu0 %v1175
        %3145 = vmatmul.mubr.bf16.gmra.mxu0 %v1174
        %v3146 = vpop.f32.mrf.mxu0
        %v3147 = vadd.f32 %v2954, %v3146
        %v3148 = vpop.f32.mrf.mxu0
        %v3149 = vadd.f32 %v2956, %v3148
        %v3150 = vpop.f32.mrf.mxu0
        %v3151 = vadd.f32 %v2958, %v3150
        %v3152 = vpop.f32.mrf.mxu0
        %v3153 = vadd.f32 %v2960, %v3152
        %3154 = vmatprep.mubr.bf16.mxu0 %v1183
        %3155 = vmatmul.mubr.bf16.gmra.mxu0 %v1182
        %v3156 = vpop.f32.mrf.mxu0
        %v3157 = vadd.f32 %v2964, %v3156
        %v3158 = vpop.f32.mrf.mxu0
        %v3159 = vadd.f32 %v2966, %v3158
        %v3160 = vpop.f32.mrf.mxu0
        %v3161 = vadd.f32 %v2968, %v3160
        %v3162 = vpop.f32.mrf.mxu0
        %v3163 = vadd.f32 %v2970, %v3162
        %3164 = vmatprep.mubr.bf16.mxu0 %v1191
        %3165 = vmatmul.mubr.bf16.gmra.mxu0 %v1190
        %v3166 = vpop.f32.mrf.mxu0
        %v3167 = vadd.f32 %v2974, %v3166
        %v3168 = vpop.f32.mrf.mxu0
        %v3169 = vadd.f32 %v2976, %v3168
        %v3170 = vpop.f32.mrf.mxu0
        %v3171 = vadd.f32 %v2978, %v3170
        %v3172 = vpop.f32.mrf.mxu0
        %v3173 = vadd.f32 %v2980, %v3172
        %3174 = vmatprep.mubr.bf16.mxu0 %v1199
        %3175 = vmatmul.mubr.bf16.gmra.mxu0 %v1198
        %v3176 = vpop.f32.mrf.mxu0
        %v3177 = vadd.f32 %v2984, %v3176
        %v3178 = vpop.f32.mrf.mxu0
        %v3179 = vadd.f32 %v2986, %v3178
        %v3180 = vpop.f32.mrf.mxu0
        %v3181 = vadd.f32 %v2988, %v3180
        %v3182 = vpop.f32.mrf.mxu0
        %v3183 = vadd.f32 %v2990, %v3182
        %3184 = vmatprep.mubr.bf16.mxu0 %v1207
        %3185 = vmatmul.mubr.bf16.gmra.mxu0 %v1206
        %v3186 = vpop.f32.mrf.mxu0
        %v3187 = vadd.f32 %v2994, %v3186
        %v3188 = vpop.f32.mrf.mxu0
        %v3189 = vadd.f32 %v2996, %v3188
        %v3190 = vpop.f32.mrf.mxu0
        %v3191 = vadd.f32 %v2998, %v3190
        %v3192 = vpop.f32.mrf.mxu0
        %v3193 = vadd.f32 %v3000, %v3192
        %3194 = vmatprep.mubr.bf16.mxu0 %v1215
        %3195 = vmatmul.mubr.bf16.gmra.mxu0 %v1214
        %v3196 = vpop.f32.mrf.mxu0
        %v3197 = vadd.f32 %v3004, %v3196
        %v3198 = vpop.f32.mrf.mxu0
        %v3199 = vadd.f32 %v3006, %v3198
        %v3200 = vpop.f32.mrf.mxu0
        %v3201 = vadd.f32 %v3008, %v3200
        %v3202 = vpop.f32.mrf.mxu0
        %v3203 = vadd.f32 %v3010, %v3202
        %3204 = vdwg.mxu0
        %3205 = vmatprep.subr.bf16.mxu0 %v2335
        %3206 = vmatpush1.bf16.msra.mxu0 %v2334
        %3207 = vmatprep.subr.bf16.mxu0 %v2331
        %3208 = vmatpush1.bf16.msra.mxu0 %v2330
        %3209 = vmatprep.subr.bf16.mxu0 %v2327
        %3210 = vmatpush1.bf16.msra.mxu0 %v2326
        %3211 = vmatprep.subr.bf16.mxu0 %v2323
        %3212 = vmatpush1.bf16.msra.mxu0 %v2322
        %3213 = vmatprep.subr.bf16.mxu0 %v2319
        %3214 = vmatpush1.bf16.msra.mxu0 %v2318
        %3215 = vmatprep.subr.bf16.mxu0 %v2315
        %3216 = vmatpush1.bf16.msra.mxu0 %v2314
        %3217 = vmatprep.subr.bf16.mxu0 %v2311
        %3218 = vmatpush1.bf16.msra.mxu0 %v2310
        %3219 = vmatprep.subr.bf16.mxu0 %v2307
        %3220 = vmatpush1.bf16.msra.mxu0 %v2306
        %3221 = vmatprep.subr.bf16.mxu0 %v2367
        %3222 = vmatpush2.bf16.msra.mxu0 %v2366
        %3223 = vmatprep.subr.bf16.mxu0 %v2363
        %3224 = vmatpush2.bf16.msra.mxu0 %v2362
        %3225 = vmatprep.subr.bf16.mxu0 %v2359
        %3226 = vmatpush2.bf16.msra.mxu0 %v2358
        %3227 = vmatprep.subr.bf16.mxu0 %v2355
        %3228 = vmatpush2.bf16.msra.mxu0 %v2354
        %3229 = vmatprep.subr.bf16.mxu0 %v2351
        %3230 = vmatpush2.bf16.msra.mxu0 %v2350
        %3231 = vmatprep.subr.bf16.mxu0 %v2347
        %3232 = vmatpush2.bf16.msra.mxu0 %v2346
        %3233 = vmatprep.subr.bf16.mxu0 %v2343
        %3234 = vmatpush2.bf16.msra.mxu0 %v2342
        %3235 = vmatprep.subr.bf16.mxu0 %v2339
        %3236 = vmatpush2.bf16.msra.mxu0 %v2338
        %3237 = vmatprep.mubr.bf16.mxu0 %v1097
        %3238 = vmatmul.mubr.bf16.gmra.mxu0 %v1096
        %v3239 = vpop.f32.mrf.mxu0
        %v3240 = vadd.f32 %v3047, %v3239
        %v3241 = vpop.f32.mrf.mxu0
        %v3242 = vadd.f32 %v3049, %v3241
        %v3243 = vpop.f32.mrf.mxu0
        %v3244 = vadd.f32 %v3051, %v3243
        %v3245 = vpop.f32.mrf.mxu0
        %v3246 = vadd.f32 %v3053, %v3245
        %3247 = vmatprep.mubr.bf16.mxu0 %v1105
        %3248 = vmatmul.mubr.bf16.gmra.mxu0 %v1104
        %v3249 = vpop.f32.mrf.mxu0
        %v3250 = vadd.f32 %v3057, %v3249
        %v3251 = vpop.f32.mrf.mxu0
        %v3252 = vadd.f32 %v3059, %v3251
        %v3253 = vpop.f32.mrf.mxu0
        %v3254 = vadd.f32 %v3061, %v3253
        %v3255 = vpop.f32.mrf.mxu0
        %v3256 = vadd.f32 %v3063, %v3255
        %3257 = vmatprep.mubr.bf16.mxu0 %v1113
        %3258 = vmatmul.mubr.bf16.gmra.mxu0 %v1112
        %v3259 = vpop.f32.mrf.mxu0
        %v3260 = vadd.f32 %v3067, %v3259
        %v3261 = vpop.f32.mrf.mxu0
        %v3262 = vadd.f32 %v3069, %v3261
        %v3263 = vpop.f32.mrf.mxu0
        %v3264 = vadd.f32 %v3071, %v3263
        %v3265 = vpop.f32.mrf.mxu0
        %v3266 = vadd.f32 %v3073, %v3265
        %3267 = vmatprep.mubr.bf16.mxu0 %v1121
        %3268 = vmatmul.mubr.bf16.gmra.mxu0 %v1120
        %v3269 = vpop.f32.mrf.mxu0
        %v3270 = vadd.f32 %v3077, %v3269
        %v3271 = vpop.f32.mrf.mxu0
        %v3272 = vadd.f32 %v3079, %v3271
        %v3273 = vpop.f32.mrf.mxu0
        %v3274 = vadd.f32 %v3081, %v3273
        %v3275 = vpop.f32.mrf.mxu0
        %v3276 = vadd.f32 %v3083, %v3275
        %3277 = vmatprep.mubr.bf16.mxu0 %v1129
        %3278 = vmatmul.mubr.bf16.gmra.mxu0 %v1128
        %v3279 = vpop.f32.mrf.mxu0
        %v3280 = vadd.f32 %v3087, %v3279
        %v3281 = vpop.f32.mrf.mxu0
        %v3282 = vadd.f32 %v3089, %v3281
        %v3283 = vpop.f32.mrf.mxu0
        %v3284 = vadd.f32 %v3091, %v3283
        %v3285 = vpop.f32.mrf.mxu0
        %v3286 = vadd.f32 %v3093, %v3285
        %3287 = vmatprep.mubr.bf16.mxu0 %v1137
        %3288 = vmatmul.mubr.bf16.gmra.mxu0 %v1136
        %v3289 = vpop.f32.mrf.mxu0
        %v3290 = vadd.f32 %v3097, %v3289
        %v3291 = vpop.f32.mrf.mxu0
        %v3292 = vadd.f32 %v3099, %v3291
        %v3293 = vpop.f32.mrf.mxu0
        %v3294 = vadd.f32 %v3101, %v3293
        %v3295 = vpop.f32.mrf.mxu0
        %v3296 = vadd.f32 %v3103, %v3295
        %3297 = vmatprep.mubr.bf16.mxu0 %v1145
        %3298 = vmatmul.mubr.bf16.gmra.mxu0 %v1144
        %v3299 = vpop.f32.mrf.mxu0
        %v3300 = vadd.f32 %v3107, %v3299
        %v3301 = vpop.f32.mrf.mxu0
        %v3302 = vadd.f32 %v3109, %v3301
        %v3303 = vpop.f32.mrf.mxu0
        %v3304 = vadd.f32 %v3111, %v3303
        %v3305 = vpop.f32.mrf.mxu0
        %v3306 = vadd.f32 %v3113, %v3305
        %3307 = vmatprep.mubr.bf16.mxu0 %v1153
        %3308 = vmatmul.mubr.bf16.gmra.mxu0 %v1152
        %v3309 = vpop.f32.mrf.mxu0
        %v3310 = vadd.f32 %v3117, %v3309
        %v3311 = vpop.f32.mrf.mxu0
        %v3312 = vadd.f32 %v3119, %v3311
        %v3313 = vpop.f32.mrf.mxu0
        %v3314 = vadd.f32 %v3121, %v3313
        %v3315 = vpop.f32.mrf.mxu0
        %v3316 = vadd.f32 %v3123, %v3315
        %3317 = vmatprep.mubr.bf16.mxu0 %v1161
        %3318 = vmatmul.mubr.bf16.gmra.mxu0 %v1160
        %v3319 = vpop.f32.mrf.mxu0
        %v3320 = vadd.f32 %v3127, %v3319
        %v3321 = vpop.f32.mrf.mxu0
        %v3322 = vadd.f32 %v3129, %v3321
        %v3323 = vpop.f32.mrf.mxu0
        %v3324 = vadd.f32 %v3131, %v3323
        %v3325 = vpop.f32.mrf.mxu0
        %v3326 = vadd.f32 %v3133, %v3325
        %3327 = vmatprep.mubr.bf16.mxu0 %v1169
        %3328 = vmatmul.mubr.bf16.gmra.mxu0 %v1168
        %v3329 = vpop.f32.mrf.mxu0
        %v3330 = vadd.f32 %v3137, %v3329
        %v3331 = vpop.f32.mrf.mxu0
        %v3332 = vadd.f32 %v3139, %v3331
        %v3333 = vpop.f32.mrf.mxu0
        %v3334 = vadd.f32 %v3141, %v3333
        %v3335 = vpop.f32.mrf.mxu0
        %v3336 = vadd.f32 %v3143, %v3335
        %3337 = vmatprep.mubr.bf16.mxu0 %v1177
        %3338 = vmatmul.mubr.bf16.gmra.mxu0 %v1176
        %v3339 = vpop.f32.mrf.mxu0
        %v3340 = vadd.f32 %v3147, %v3339
        %v3341 = vpop.f32.mrf.mxu0
        %v3342 = vadd.f32 %v3149, %v3341
        %v3343 = vpop.f32.mrf.mxu0
        %v3344 = vadd.f32 %v3151, %v3343
        %v3345 = vpop.f32.mrf.mxu0
        %v3346 = vadd.f32 %v3153, %v3345
        %3347 = vmatprep.mubr.bf16.mxu0 %v1185
        %3348 = vmatmul.mubr.bf16.gmra.mxu0 %v1184
        %v3349 = vpop.f32.mrf.mxu0
        %v3350 = vadd.f32 %v3157, %v3349
        %v3351 = vpop.f32.mrf.mxu0
        %v3352 = vadd.f32 %v3159, %v3351
        %v3353 = vpop.f32.mrf.mxu0
        %v3354 = vadd.f32 %v3161, %v3353
        %v3355 = vpop.f32.mrf.mxu0
        %v3356 = vadd.f32 %v3163, %v3355
        %3357 = vmatprep.mubr.bf16.mxu0 %v1193
        %3358 = vmatmul.mubr.bf16.gmra.mxu0 %v1192
        %v3359 = vpop.f32.mrf.mxu0
        %v3360 = vadd.f32 %v3167, %v3359
        %v3361 = vpop.f32.mrf.mxu0
        %v3362 = vadd.f32 %v3169, %v3361
        %v3363 = vpop.f32.mrf.mxu0
        %v3364 = vadd.f32 %v3171, %v3363
        %v3365 = vpop.f32.mrf.mxu0
        %v3366 = vadd.f32 %v3173, %v3365
        %3367 = vmatprep.mubr.bf16.mxu0 %v1201
        %3368 = vmatmul.mubr.bf16.gmra.mxu0 %v1200
        %v3369 = vpop.f32.mrf.mxu0
        %v3370 = vadd.f32 %v3177, %v3369
        %v3371 = vpop.f32.mrf.mxu0
        %v3372 = vadd.f32 %v3179, %v3371
        %v3373 = vpop.f32.mrf.mxu0
        %v3374 = vadd.f32 %v3181, %v3373
        %v3375 = vpop.f32.mrf.mxu0
        %v3376 = vadd.f32 %v3183, %v3375
        %3377 = vmatprep.mubr.bf16.mxu0 %v1209
        %3378 = vmatmul.mubr.bf16.gmra.mxu0 %v1208
        %v3379 = vpop.f32.mrf.mxu0
        %v3380 = vadd.f32 %v3187, %v3379
        %v3381 = vpop.f32.mrf.mxu0
        %v3382 = vadd.f32 %v3189, %v3381
        %v3383 = vpop.f32.mrf.mxu0
        %v3384 = vadd.f32 %v3191, %v3383
        %v3385 = vpop.f32.mrf.mxu0
        %v3386 = vadd.f32 %v3193, %v3385
        %3387 = vmatprep.mubr.bf16.mxu0 %v1217
        %3388 = vmatmul.mubr.bf16.gmra.mxu0 %v1216
        %v3389 = vpop.f32.mrf.mxu0
        %v3390 = vadd.f32 %v3197, %v3389
        %v3391 = vpop.f32.mrf.mxu0
        %v3392 = vadd.f32 %v3199, %v3391
        %v3393 = vpop.f32.mrf.mxu0
        %v3394 = vadd.f32 %v3201, %v3393
        %v3395 = vpop.f32.mrf.mxu0
        %v3396 = vadd.f32 %v3203, %v3395
        %3397 = vdwg.mxu0
        %3398 = vmatprep.subr.bf16.mxu0 %v2145
        %3399 = vmatpush1.bf16.msra.mxu0 %v2144
        %3400 = vmatprep.subr.bf16.mxu0 %v2141
        %3401 = vmatpush1.bf16.msra.mxu0 %v2140
        %3402 = vmatprep.subr.bf16.mxu0 %v2137
        %3403 = vmatpush1.bf16.msra.mxu0 %v2136
        %3404 = vmatprep.subr.bf16.mxu0 %v2133
        %3405 = vmatpush1.bf16.msra.mxu0 %v2132
        %3406 = vmatprep.subr.bf16.mxu0 %v2129
        %3407 = vmatpush1.bf16.msra.mxu0 %v2128
        %3408 = vmatprep.subr.bf16.mxu0 %v2125
        %3409 = vmatpush1.bf16.msra.mxu0 %v2124
        %3410 = vmatprep.subr.bf16.mxu0 %v2121
        %3411 = vmatpush1.bf16.msra.mxu0 %v2120
        %3412 = vmatprep.subr.bf16.mxu0 %v2117
        %3413 = vmatpush1.bf16.msra.mxu0 %v2116
        %3414 = vmatprep.subr.bf16.mxu0 %v2177
        %3415 = vmatpush2.bf16.msra.mxu0 %v2176
        %3416 = vmatprep.subr.bf16.mxu0 %v2173
        %3417 = vmatpush2.bf16.msra.mxu0 %v2172
        %3418 = vmatprep.subr.bf16.mxu0 %v2169
        %3419 = vmatpush2.bf16.msra.mxu0 %v2168
        %3420 = vmatprep.subr.bf16.mxu0 %v2165
        %3421 = vmatpush2.bf16.msra.mxu0 %v2164
        %3422 = vmatprep.subr.bf16.mxu0 %v2161
        %3423 = vmatpush2.bf16.msra.mxu0 %v2160
        %3424 = vmatprep.subr.bf16.mxu0 %v2157
        %3425 = vmatpush2.bf16.msra.mxu0 %v2156
        %3426 = vmatprep.subr.bf16.mxu0 %v2153
        %3427 = vmatpush2.bf16.msra.mxu0 %v2152
        %3428 = vmatprep.subr.bf16.mxu0 %v2149
        %3429 = vmatpush2.bf16.msra.mxu0 %v2148
        %3430 = vmatprep.mubr.bf16.mxu0 %v1091
        %3431 = vmatmul.mubr.bf16.gmra.mxu0 %v1090
        %v3432 = vpop.f32.mrf.mxu0
        %v3433 = vadd.f32 %v697, %v3432
        %v3434 = vpop.f32.mrf.mxu0
        %v3435 = vadd.f32 %v701, %v3434
        %v3436 = vpop.f32.mrf.mxu0
        %v3437 = vadd.f32 %v697, %v3436
        %v3438 = vpop.f32.mrf.mxu0
        %v3439 = vadd.f32 %v701, %v3438
        %3440 = vmatprep.mubr.bf16.mxu0 %v1099
        %3441 = vmatmul.mubr.bf16.gmra.mxu0 %v1098
        %v3442 = vpop.f32.mrf.mxu0
        %v3443 = vadd.f32 %v697, %v3442
        %v3444 = vpop.f32.mrf.mxu0
        %v3445 = vadd.f32 %v701, %v3444
        %v3446 = vpop.f32.mrf.mxu0
        %v3447 = vadd.f32 %v697, %v3446
        %v3448 = vpop.f32.mrf.mxu0
        %v3449 = vadd.f32 %v701, %v3448
        %3450 = vmatprep.mubr.bf16.mxu0 %v1107
        %3451 = vmatmul.mubr.bf16.gmra.mxu0 %v1106
        %v3452 = vpop.f32.mrf.mxu0
        %v3453 = vadd.f32 %v697, %v3452
        %v3454 = vpop.f32.mrf.mxu0
        %v3455 = vadd.f32 %v701, %v3454
        %v3456 = vpop.f32.mrf.mxu0
        %v3457 = vadd.f32 %v697, %v3456
        %v3458 = vpop.f32.mrf.mxu0
        %v3459 = vadd.f32 %v701, %v3458
        %3460 = vmatprep.mubr.bf16.mxu0 %v1115
        %3461 = vmatmul.mubr.bf16.gmra.mxu0 %v1114
        %v3462 = vpop.f32.mrf.mxu0
        %v3463 = vadd.f32 %v697, %v3462
        %v3464 = vpop.f32.mrf.mxu0
        %v3465 = vadd.f32 %v701, %v3464
        %v3466 = vpop.f32.mrf.mxu0
        %v3467 = vadd.f32 %v697, %v3466
        %v3468 = vpop.f32.mrf.mxu0
        %v3469 = vadd.f32 %v701, %v3468
        %3470 = vmatprep.mubr.bf16.mxu0 %v1123
        %3471 = vmatmul.mubr.bf16.gmra.mxu0 %v1122
        %v3472 = vpop.f32.mrf.mxu0
        %v3473 = vadd.f32 %v697, %v3472
        %v3474 = vpop.f32.mrf.mxu0
        %v3475 = vadd.f32 %v701, %v3474
        %v3476 = vpop.f32.mrf.mxu0
        %v3477 = vadd.f32 %v697, %v3476
        %v3478 = vpop.f32.mrf.mxu0
        %v3479 = vadd.f32 %v701, %v3478
        %3480 = vmatprep.mubr.bf16.mxu0 %v1131
        %3481 = vmatmul.mubr.bf16.gmra.mxu0 %v1130
        %v3482 = vpop.f32.mrf.mxu0
        %v3483 = vadd.f32 %v697, %v3482
        %v3484 = vpop.f32.mrf.mxu0
        %v3485 = vadd.f32 %v701, %v3484
        %v3486 = vpop.f32.mrf.mxu0
        %v3487 = vadd.f32 %v697, %v3486
        %v3488 = vpop.f32.mrf.mxu0
        %v3489 = vadd.f32 %v701, %v3488
        %3490 = vmatprep.mubr.bf16.mxu0 %v1139
        %3491 = vmatmul.mubr.bf16.gmra.mxu0 %v1138
        %v3492 = vpop.f32.mrf.mxu0
        %v3493 = vadd.f32 %v697, %v3492
        %v3494 = vpop.f32.mrf.mxu0
        %v3495 = vadd.f32 %v701, %v3494
        %v3496 = vpop.f32.mrf.mxu0
        %v3497 = vadd.f32 %v697, %v3496
        %v3498 = vpop.f32.mrf.mxu0
        %v3499 = vadd.f32 %v701, %v3498
        %3500 = vmatprep.mubr.bf16.mxu0 %v1147
        %3501 = vmatmul.mubr.bf16.gmra.mxu0 %v1146
        %v3502 = vpop.f32.mrf.mxu0
        %v3503 = vadd.f32 %v697, %v3502
        %v3504 = vpop.f32.mrf.mxu0
        %v3505 = vadd.f32 %v701, %v3504
        %v3506 = vpop.f32.mrf.mxu0
        %v3507 = vadd.f32 %v697, %v3506
        %v3508 = vpop.f32.mrf.mxu0
        %v3509 = vadd.f32 %v701, %v3508
        %3510 = vmatprep.mubr.bf16.mxu0 %v1155
        %3511 = vmatmul.mubr.bf16.gmra.mxu0 %v1154
        %v3512 = vpop.f32.mrf.mxu0
        %v3513 = vadd.f32 %v697, %v3512
        %v3514 = vpop.f32.mrf.mxu0
        %v3515 = vadd.f32 %v701, %v3514
        %v3516 = vpop.f32.mrf.mxu0
        %v3517 = vadd.f32 %v697, %v3516
        %v3518 = vpop.f32.mrf.mxu0
        %v3519 = vadd.f32 %v701, %v3518
        %3520 = vmatprep.mubr.bf16.mxu0 %v1163
        %3521 = vmatmul.mubr.bf16.gmra.mxu0 %v1162
        %v3522 = vpop.f32.mrf.mxu0
        %v3523 = vadd.f32 %v697, %v3522
        %v3524 = vpop.f32.mrf.mxu0
        %v3525 = vadd.f32 %v701, %v3524
        %v3526 = vpop.f32.mrf.mxu0
        %v3527 = vadd.f32 %v697, %v3526
        %v3528 = vpop.f32.mrf.mxu0
        %v3529 = vadd.f32 %v701, %v3528
        %3530 = vmatprep.mubr.bf16.mxu0 %v1171
        %3531 = vmatmul.mubr.bf16.gmra.mxu0 %v1170
        %v3532 = vpop.f32.mrf.mxu0
        %v3533 = vadd.f32 %v697, %v3532
        %v3534 = vpop.f32.mrf.mxu0
        %v3535 = vadd.f32 %v701, %v3534
        %v3536 = vpop.f32.mrf.mxu0
        %v3537 = vadd.f32 %v697, %v3536
        %v3538 = vpop.f32.mrf.mxu0
        %v3539 = vadd.f32 %v701, %v3538
        %3540 = vmatprep.mubr.bf16.mxu0 %v1179
        %3541 = vmatmul.mubr.bf16.gmra.mxu0 %v1178
        %v3542 = vpop.f32.mrf.mxu0
        %v3543 = vadd.f32 %v697, %v3542
        %v3544 = vpop.f32.mrf.mxu0
        %v3545 = vadd.f32 %v701, %v3544
        %v3546 = vpop.f32.mrf.mxu0
        %v3547 = vadd.f32 %v697, %v3546
        %v3548 = vpop.f32.mrf.mxu0
        %v3549 = vadd.f32 %v701, %v3548
        %3550 = vmatprep.mubr.bf16.mxu0 %v1187
        %3551 = vmatmul.mubr.bf16.gmra.mxu0 %v1186
        %v3552 = vpop.f32.mrf.mxu0
        %v3553 = vadd.f32 %v697, %v3552
        %v3554 = vpop.f32.mrf.mxu0
        %v3555 = vadd.f32 %v701, %v3554
        %v3556 = vpop.f32.mrf.mxu0
        %v3557 = vadd.f32 %v697, %v3556
        %v3558 = vpop.f32.mrf.mxu0
        %v3559 = vadd.f32 %v701, %v3558
        %3560 = vmatprep.mubr.bf16.mxu0 %v1195
        %3561 = vmatmul.mubr.bf16.gmra.mxu0 %v1194
        %v3562 = vpop.f32.mrf.mxu0
        %v3563 = vadd.f32 %v697, %v3562
        %v3564 = vpop.f32.mrf.mxu0
        %v3565 = vadd.f32 %v701, %v3564
        %v3566 = vpop.f32.mrf.mxu0
        %v3567 = vadd.f32 %v697, %v3566
        %v3568 = vpop.f32.mrf.mxu0
        %v3569 = vadd.f32 %v701, %v3568
        %3570 = vmatprep.mubr.bf16.mxu0 %v1203
        %3571 = vmatmul.mubr.bf16.gmra.mxu0 %v1202
        %v3572 = vpop.f32.mrf.mxu0
        %v3573 = vadd.f32 %v697, %v3572
        %v3574 = vpop.f32.mrf.mxu0
        %v3575 = vadd.f32 %v701, %v3574
        %v3576 = vpop.f32.mrf.mxu0
        %v3577 = vadd.f32 %v697, %v3576
        %v3578 = vpop.f32.mrf.mxu0
        %v3579 = vadd.f32 %v701, %v3578
        %3580 = vmatprep.mubr.bf16.mxu0 %v1211
        %3581 = vmatmul.mubr.bf16.gmra.mxu0 %v1210
        %v3582 = vpop.f32.mrf.mxu0
        %v3583 = vadd.f32 %v697, %v3582
        %v3584 = vpop.f32.mrf.mxu0
        %v3585 = vadd.f32 %v701, %v3584
        %v3586 = vpop.f32.mrf.mxu0
        %v3587 = vadd.f32 %v697, %v3586
        %v3588 = vpop.f32.mrf.mxu0
        %v3589 = vadd.f32 %v701, %v3588
        %3590 = vdwg.mxu0
        %3591 = vmatprep.subr.bf16.mxu0 %v2209
        %3592 = vmatpush1.bf16.msra.mxu0 %v2208
        %3593 = vmatprep.subr.bf16.mxu0 %v2205
        %3594 = vmatpush1.bf16.msra.mxu0 %v2204
        %3595 = vmatprep.subr.bf16.mxu0 %v2201
        %3596 = vmatpush1.bf16.msra.mxu0 %v2200
        %3597 = vmatprep.subr.bf16.mxu0 %v2197
        %3598 = vmatpush1.bf16.msra.mxu0 %v2196
        %3599 = vmatprep.subr.bf16.mxu0 %v2193
        %3600 = vmatpush1.bf16.msra.mxu0 %v2192
        %3601 = vmatprep.subr.bf16.mxu0 %v2189
        %3602 = vmatpush1.bf16.msra.mxu0 %v2188
        %3603 = vmatprep.subr.bf16.mxu0 %v2185
        %3604 = vmatpush1.bf16.msra.mxu0 %v2184
        %3605 = vmatprep.subr.bf16.mxu0 %v2181
        %3606 = vmatpush1.bf16.msra.mxu0 %v2180
        %3607 = vmatprep.subr.bf16.mxu0 %v2241
        %3608 = vmatpush2.bf16.msra.mxu0 %v2240
        %3609 = vmatprep.subr.bf16.mxu0 %v2237
        %3610 = vmatpush2.bf16.msra.mxu0 %v2236
        %3611 = vmatprep.subr.bf16.mxu0 %v2233
        %3612 = vmatpush2.bf16.msra.mxu0 %v2232
        %3613 = vmatprep.subr.bf16.mxu0 %v2229
        %3614 = vmatpush2.bf16.msra.mxu0 %v2228
        %3615 = vmatprep.subr.bf16.mxu0 %v2225
        %3616 = vmatpush2.bf16.msra.mxu0 %v2224
        %3617 = vmatprep.subr.bf16.mxu0 %v2221
        %3618 = vmatpush2.bf16.msra.mxu0 %v2220
        %3619 = vmatprep.subr.bf16.mxu0 %v2217
        %3620 = vmatpush2.bf16.msra.mxu0 %v2216
        %3621 = vmatprep.subr.bf16.mxu0 %v2213
        %3622 = vmatpush2.bf16.msra.mxu0 %v2212
        %3623 = vmatprep.mubr.bf16.mxu0 %v1093
        %3624 = vmatmul.mubr.bf16.gmra.mxu0 %v1092
        %v3625 = vpop.f32.mrf.mxu0
        %v3626 = vadd.f32 %v3433, %v3625
        %v3627 = vpop.f32.mrf.mxu0
        %v3628 = vadd.f32 %v3435, %v3627
        %v3629 = vpop.f32.mrf.mxu0
        %v3630 = vadd.f32 %v3437, %v3629
        %v3631 = vpop.f32.mrf.mxu0
        %v3632 = vadd.f32 %v3439, %v3631
        %3633 = vmatprep.mubr.bf16.mxu0 %v1101
        %3634 = vmatmul.mubr.bf16.gmra.mxu0 %v1100
        %v3635 = vpop.f32.mrf.mxu0
        %v3636 = vadd.f32 %v3443, %v3635
        %v3637 = vpop.f32.mrf.mxu0
        %v3638 = vadd.f32 %v3445, %v3637
        %v3639 = vpop.f32.mrf.mxu0
        %v3640 = vadd.f32 %v3447, %v3639
        %v3641 = vpop.f32.mrf.mxu0
        %v3642 = vadd.f32 %v3449, %v3641
        %3643 = vmatprep.mubr.bf16.mxu0 %v1109
        %3644 = vmatmul.mubr.bf16.gmra.mxu0 %v1108
        %v3645 = vpop.f32.mrf.mxu0
        %v3646 = vadd.f32 %v3453, %v3645
        %v3647 = vpop.f32.mrf.mxu0
        %v3648 = vadd.f32 %v3455, %v3647
        %v3649 = vpop.f32.mrf.mxu0
        %v3650 = vadd.f32 %v3457, %v3649
        %v3651 = vpop.f32.mrf.mxu0
        %v3652 = vadd.f32 %v3459, %v3651
        %3653 = vmatprep.mubr.bf16.mxu0 %v1117
        %3654 = vmatmul.mubr.bf16.gmra.mxu0 %v1116
        %v3655 = vpop.f32.mrf.mxu0
        %v3656 = vadd.f32 %v3463, %v3655
        %v3657 = vpop.f32.mrf.mxu0
        %v3658 = vadd.f32 %v3465, %v3657
        %v3659 = vpop.f32.mrf.mxu0
        %v3660 = vadd.f32 %v3467, %v3659
        %v3661 = vpop.f32.mrf.mxu0
        %v3662 = vadd.f32 %v3469, %v3661
        %3663 = vmatprep.mubr.bf16.mxu0 %v1125
        %3664 = vmatmul.mubr.bf16.gmra.mxu0 %v1124
        %v3665 = vpop.f32.mrf.mxu0
        %v3666 = vadd.f32 %v3473, %v3665
        %v3667 = vpop.f32.mrf.mxu0
        %v3668 = vadd.f32 %v3475, %v3667
        %v3669 = vpop.f32.mrf.mxu0
        %v3670 = vadd.f32 %v3477, %v3669
        %v3671 = vpop.f32.mrf.mxu0
        %v3672 = vadd.f32 %v3479, %v3671
        %3673 = vmatprep.mubr.bf16.mxu0 %v1133
        %3674 = vmatmul.mubr.bf16.gmra.mxu0 %v1132
        %v3675 = vpop.f32.mrf.mxu0
        %v3676 = vadd.f32 %v3483, %v3675
        %v3677 = vpop.f32.mrf.mxu0
        %v3678 = vadd.f32 %v3485, %v3677
        %v3679 = vpop.f32.mrf.mxu0
        %v3680 = vadd.f32 %v3487, %v3679
        %v3681 = vpop.f32.mrf.mxu0
        %v3682 = vadd.f32 %v3489, %v3681
        %3683 = vmatprep.mubr.bf16.mxu0 %v1141
        %3684 = vmatmul.mubr.bf16.gmra.mxu0 %v1140
        %v3685 = vpop.f32.mrf.mxu0
        %v3686 = vadd.f32 %v3493, %v3685
        %v3687 = vpop.f32.mrf.mxu0
        %v3688 = vadd.f32 %v3495, %v3687
        %v3689 = vpop.f32.mrf.mxu0
        %v3690 = vadd.f32 %v3497, %v3689
        %v3691 = vpop.f32.mrf.mxu0
        %v3692 = vadd.f32 %v3499, %v3691
        %3693 = vmatprep.mubr.bf16.mxu0 %v1149
        %3694 = vmatmul.mubr.bf16.gmra.mxu0 %v1148
        %v3695 = vpop.f32.mrf.mxu0
        %v3696 = vadd.f32 %v3503, %v3695
        %v3697 = vpop.f32.mrf.mxu0
        %v3698 = vadd.f32 %v3505, %v3697
        %v3699 = vpop.f32.mrf.mxu0
        %v3700 = vadd.f32 %v3507, %v3699
        %v3701 = vpop.f32.mrf.mxu0
        %v3702 = vadd.f32 %v3509, %v3701
        %3703 = vmatprep.mubr.bf16.mxu0 %v1157
        %3704 = vmatmul.mubr.bf16.gmra.mxu0 %v1156
        %v3705 = vpop.f32.mrf.mxu0
        %v3706 = vadd.f32 %v3513, %v3705
        %v3707 = vpop.f32.mrf.mxu0
        %v3708 = vadd.f32 %v3515, %v3707
        %v3709 = vpop.f32.mrf.mxu0
        %v3710 = vadd.f32 %v3517, %v3709
        %v3711 = vpop.f32.mrf.mxu0
        %v3712 = vadd.f32 %v3519, %v3711
        %3713 = vmatprep.mubr.bf16.mxu0 %v1165
        %3714 = vmatmul.mubr.bf16.gmra.mxu0 %v1164
        %v3715 = vpop.f32.mrf.mxu0
        %v3716 = vadd.f32 %v3523, %v3715
        %v3717 = vpop.f32.mrf.mxu0
        %v3718 = vadd.f32 %v3525, %v3717
        %v3719 = vpop.f32.mrf.mxu0
        %v3720 = vadd.f32 %v3527, %v3719
        %v3721 = vpop.f32.mrf.mxu0
        %v3722 = vadd.f32 %v3529, %v3721
        %3723 = vmatprep.mubr.bf16.mxu0 %v1173
        %3724 = vmatmul.mubr.bf16.gmra.mxu0 %v1172
        %v3725 = vpop.f32.mrf.mxu0
        %v3726 = vadd.f32 %v3533, %v3725
        %v3727 = vpop.f32.mrf.mxu0
        %v3728 = vadd.f32 %v3535, %v3727
        %v3729 = vpop.f32.mrf.mxu0
        %v3730 = vadd.f32 %v3537, %v3729
        %v3731 = vpop.f32.mrf.mxu0
        %v3732 = vadd.f32 %v3539, %v3731
        %3733 = vmatprep.mubr.bf16.mxu0 %v1181
        %3734 = vmatmul.mubr.bf16.gmra.mxu0 %v1180
        %v3735 = vpop.f32.mrf.mxu0
        %v3736 = vadd.f32 %v3543, %v3735
        %v3737 = vpop.f32.mrf.mxu0
        %v3738 = vadd.f32 %v3545, %v3737
        %v3739 = vpop.f32.mrf.mxu0
        %v3740 = vadd.f32 %v3547, %v3739
        %v3741 = vpop.f32.mrf.mxu0
        %v3742 = vadd.f32 %v3549, %v3741
        %3743 = vmatprep.mubr.bf16.mxu0 %v1189
        %3744 = vmatmul.mubr.bf16.gmra.mxu0 %v1188
        %v3745 = vpop.f32.mrf.mxu0
        %v3746 = vadd.f32 %v3553, %v3745
        %v3747 = vpop.f32.mrf.mxu0
        %v3748 = vadd.f32 %v3555, %v3747
        %v3749 = vpop.f32.mrf.mxu0
        %v3750 = vadd.f32 %v3557, %v3749
        %v3751 = vpop.f32.mrf.mxu0
        %v3752 = vadd.f32 %v3559, %v3751
        %3753 = vmatprep.mubr.bf16.mxu0 %v1197
        %3754 = vmatmul.mubr.bf16.gmra.mxu0 %v1196
        %v3755 = vpop.f32.mrf.mxu0
        %v3756 = vadd.f32 %v3563, %v3755
        %v3757 = vpop.f32.mrf.mxu0
        %v3758 = vadd.f32 %v3565, %v3757
        %v3759 = vpop.f32.mrf.mxu0
        %v3760 = vadd.f32 %v3567, %v3759
        %v3761 = vpop.f32.mrf.mxu0
        %v3762 = vadd.f32 %v3569, %v3761
        %3763 = vmatprep.mubr.bf16.mxu0 %v1205
        %3764 = vmatmul.mubr.bf16.gmra.mxu0 %v1204
        %v3765 = vpop.f32.mrf.mxu0
        %v3766 = vadd.f32 %v3573, %v3765
        %v3767 = vpop.f32.mrf.mxu0
        %v3768 = vadd.f32 %v3575, %v3767
        %v3769 = vpop.f32.mrf.mxu0
        %v3770 = vadd.f32 %v3577, %v3769
        %v3771 = vpop.f32.mrf.mxu0
        %v3772 = vadd.f32 %v3579, %v3771
        %3773 = vmatprep.mubr.bf16.mxu0 %v1213
        %3774 = vmatmul.mubr.bf16.gmra.mxu0 %v1212
        %v3775 = vpop.f32.mrf.mxu0
        %v3776 = vadd.f32 %v3583, %v3775
        %v3777 = vpop.f32.mrf.mxu0
        %v3778 = vadd.f32 %v3585, %v3777
        %v3779 = vpop.f32.mrf.mxu0
        %v3780 = vadd.f32 %v3587, %v3779
        %v3781 = vpop.f32.mrf.mxu0
        %v3782 = vadd.f32 %v3589, %v3781
        %3783 = vdwg.mxu0
        %3784 = vmatprep.subr.bf16.mxu0 %v2273
        %3785 = vmatpush1.bf16.msra.mxu0 %v2272
        %3786 = vmatprep.subr.bf16.mxu0 %v2269
        %3787 = vmatpush1.bf16.msra.mxu0 %v2268
        %3788 = vmatprep.subr.bf16.mxu0 %v2265
        %3789 = vmatpush1.bf16.msra.mxu0 %v2264
        %3790 = vmatprep.subr.bf16.mxu0 %v2261
        %3791 = vmatpush1.bf16.msra.mxu0 %v2260
        %3792 = vmatprep.subr.bf16.mxu0 %v2257
        %3793 = vmatpush1.bf16.msra.mxu0 %v2256
        %3794 = vmatprep.subr.bf16.mxu0 %v2253
        %3795 = vmatpush1.bf16.msra.mxu0 %v2252
        %3796 = vmatprep.subr.bf16.mxu0 %v2249
        %3797 = vmatpush1.bf16.msra.mxu0 %v2248
        %3798 = vmatprep.subr.bf16.mxu0 %v2245
        %3799 = vmatpush1.bf16.msra.mxu0 %v2244
        %3800 = vmatprep.subr.bf16.mxu0 %v2305
        %3801 = vmatpush2.bf16.msra.mxu0 %v2304
        %3802 = vmatprep.subr.bf16.mxu0 %v2301
        %3803 = vmatpush2.bf16.msra.mxu0 %v2300
        %3804 = vmatprep.subr.bf16.mxu0 %v2297
        %3805 = vmatpush2.bf16.msra.mxu0 %v2296
        %3806 = vmatprep.subr.bf16.mxu0 %v2293
        %3807 = vmatpush2.bf16.msra.mxu0 %v2292
        %3808 = vmatprep.subr.bf16.mxu0 %v2289
        %3809 = vmatpush2.bf16.msra.mxu0 %v2288
        %3810 = vmatprep.subr.bf16.mxu0 %v2285
        %3811 = vmatpush2.bf16.msra.mxu0 %v2284
        %3812 = vmatprep.subr.bf16.mxu0 %v2281
        %3813 = vmatpush2.bf16.msra.mxu0 %v2280
        %3814 = vmatprep.subr.bf16.mxu0 %v2277
        %3815 = vmatpush2.bf16.msra.mxu0 %v2276
        %3816 = vmatprep.mubr.bf16.mxu0 %v1095
        %3817 = vmatmul.mubr.bf16.gmra.mxu0 %v1094
        %v3818 = vpop.f32.mrf.mxu0
        %v3819 = vadd.f32 %v3626, %v3818
        %v3820 = vpop.f32.mrf.mxu0
        %v3821 = vadd.f32 %v3628, %v3820
        %v3822 = vpop.f32.mrf.mxu0
        %v3823 = vadd.f32 %v3630, %v3822
        %v3824 = vpop.f32.mrf.mxu0
        %v3825 = vadd.f32 %v3632, %v3824
        %3826 = vmatprep.mubr.bf16.mxu0 %v1103
        %3827 = vmatmul.mubr.bf16.gmra.mxu0 %v1102
        %v3828 = vpop.f32.mrf.mxu0
        %v3829 = vadd.f32 %v3636, %v3828
        %v3830 = vpop.f32.mrf.mxu0
        %v3831 = vadd.f32 %v3638, %v3830
        %v3832 = vpop.f32.mrf.mxu0
        %v3833 = vadd.f32 %v3640, %v3832
        %v3834 = vpop.f32.mrf.mxu0
        %v3835 = vadd.f32 %v3642, %v3834
        %3836 = vmatprep.mubr.bf16.mxu0 %v1111
        %3837 = vmatmul.mubr.bf16.gmra.mxu0 %v1110
        %v3838 = vpop.f32.mrf.mxu0
        %v3839 = vadd.f32 %v3646, %v3838
        %v3840 = vpop.f32.mrf.mxu0
        %v3841 = vadd.f32 %v3648, %v3840
        %v3842 = vpop.f32.mrf.mxu0
        %v3843 = vadd.f32 %v3650, %v3842
        %v3844 = vpop.f32.mrf.mxu0
        %v3845 = vadd.f32 %v3652, %v3844
        %3846 = vmatprep.mubr.bf16.mxu0 %v1119
        %3847 = vmatmul.mubr.bf16.gmra.mxu0 %v1118
        %v3848 = vpop.f32.mrf.mxu0
        %v3849 = vadd.f32 %v3656, %v3848
        %v3850 = vpop.f32.mrf.mxu0
        %v3851 = vadd.f32 %v3658, %v3850
        %v3852 = vpop.f32.mrf.mxu0
        %v3853 = vadd.f32 %v3660, %v3852
        %v3854 = vpop.f32.mrf.mxu0
        %v3855 = vadd.f32 %v3662, %v3854
        %3856 = vmatprep.mubr.bf16.mxu0 %v1127
        %3857 = vmatmul.mubr.bf16.gmra.mxu0 %v1126
        %v3858 = vpop.f32.mrf.mxu0
        %v3859 = vadd.f32 %v3666, %v3858
        %v3860 = vpop.f32.mrf.mxu0
        %v3861 = vadd.f32 %v3668, %v3860
        %v3862 = vpop.f32.mrf.mxu0
        %v3863 = vadd.f32 %v3670, %v3862
        %v3864 = vpop.f32.mrf.mxu0
        %v3865 = vadd.f32 %v3672, %v3864
        %3866 = vmatprep.mubr.bf16.mxu0 %v1135
        %3867 = vmatmul.mubr.bf16.gmra.mxu0 %v1134
        %v3868 = vpop.f32.mrf.mxu0
        %v3869 = vadd.f32 %v3676, %v3868
        %v3870 = vpop.f32.mrf.mxu0
        %v3871 = vadd.f32 %v3678, %v3870
        %v3872 = vpop.f32.mrf.mxu0
        %v3873 = vadd.f32 %v3680, %v3872
        %v3874 = vpop.f32.mrf.mxu0
        %v3875 = vadd.f32 %v3682, %v3874
        %3876 = vmatprep.mubr.bf16.mxu0 %v1143
        %3877 = vmatmul.mubr.bf16.gmra.mxu0 %v1142
        %v3878 = vpop.f32.mrf.mxu0
        %v3879 = vadd.f32 %v3686, %v3878
        %v3880 = vpop.f32.mrf.mxu0
        %v3881 = vadd.f32 %v3688, %v3880
        %v3882 = vpop.f32.mrf.mxu0
        %v3883 = vadd.f32 %v3690, %v3882
        %v3884 = vpop.f32.mrf.mxu0
        %v3885 = vadd.f32 %v3692, %v3884
        %3886 = vmatprep.mubr.bf16.mxu0 %v1151
        %3887 = vmatmul.mubr.bf16.gmra.mxu0 %v1150
        %v3888 = vpop.f32.mrf.mxu0
        %v3889 = vadd.f32 %v3696, %v3888
        %v3890 = vpop.f32.mrf.mxu0
        %v3891 = vadd.f32 %v3698, %v3890
        %v3892 = vpop.f32.mrf.mxu0
        %v3893 = vadd.f32 %v3700, %v3892
        %v3894 = vpop.f32.mrf.mxu0
        %v3895 = vadd.f32 %v3702, %v3894
        %3896 = vmatprep.mubr.bf16.mxu0 %v1159
        %3897 = vmatmul.mubr.bf16.gmra.mxu0 %v1158
        %v3898 = vpop.f32.mrf.mxu0
        %v3899 = vadd.f32 %v3706, %v3898
        %v3900 = vpop.f32.mrf.mxu0
        %v3901 = vadd.f32 %v3708, %v3900
        %v3902 = vpop.f32.mrf.mxu0
        %v3903 = vadd.f32 %v3710, %v3902
        %v3904 = vpop.f32.mrf.mxu0
        %v3905 = vadd.f32 %v3712, %v3904
        %3906 = vmatprep.mubr.bf16.mxu0 %v1167
        %3907 = vmatmul.mubr.bf16.gmra.mxu0 %v1166
        %v3908 = vpop.f32.mrf.mxu0
        %v3909 = vadd.f32 %v3716, %v3908
        %v3910 = vpop.f32.mrf.mxu0
        %v3911 = vadd.f32 %v3718, %v3910
        %v3912 = vpop.f32.mrf.mxu0
        %v3913 = vadd.f32 %v3720, %v3912
        %v3914 = vpop.f32.mrf.mxu0
        %v3915 = vadd.f32 %v3722, %v3914
        %3916 = vmatprep.mubr.bf16.mxu0 %v1175
        %3917 = vmatmul.mubr.bf16.gmra.mxu0 %v1174
        %v3918 = vpop.f32.mrf.mxu0
        %v3919 = vadd.f32 %v3726, %v3918
        %v3920 = vpop.f32.mrf.mxu0
        %v3921 = vadd.f32 %v3728, %v3920
        %v3922 = vpop.f32.mrf.mxu0
        %v3923 = vadd.f32 %v3730, %v3922
        %v3924 = vpop.f32.mrf.mxu0
        %v3925 = vadd.f32 %v3732, %v3924
        %3926 = vmatprep.mubr.bf16.mxu0 %v1183
        %3927 = vmatmul.mubr.bf16.gmra.mxu0 %v1182
        %v3928 = vpop.f32.mrf.mxu0
        %v3929 = vadd.f32 %v3736, %v3928
        %v3930 = vpop.f32.mrf.mxu0
        %v3931 = vadd.f32 %v3738, %v3930
        %v3932 = vpop.f32.mrf.mxu0
        %v3933 = vadd.f32 %v3740, %v3932
        %v3934 = vpop.f32.mrf.mxu0
        %v3935 = vadd.f32 %v3742, %v3934
        %3936 = vmatprep.mubr.bf16.mxu0 %v1191
        %3937 = vmatmul.mubr.bf16.gmra.mxu0 %v1190
        %v3938 = vpop.f32.mrf.mxu0
        %v3939 = vadd.f32 %v3746, %v3938
        %v3940 = vpop.f32.mrf.mxu0
        %v3941 = vadd.f32 %v3748, %v3940
        %v3942 = vpop.f32.mrf.mxu0
        %v3943 = vadd.f32 %v3750, %v3942
        %v3944 = vpop.f32.mrf.mxu0
        %v3945 = vadd.f32 %v3752, %v3944
        %3946 = vmatprep.mubr.bf16.mxu0 %v1199
        %3947 = vmatmul.mubr.bf16.gmra.mxu0 %v1198
        %v3948 = vpop.f32.mrf.mxu0
        %v3949 = vadd.f32 %v3756, %v3948
        %v3950 = vpop.f32.mrf.mxu0
        %v3951 = vadd.f32 %v3758, %v3950
        %v3952 = vpop.f32.mrf.mxu0
        %v3953 = vadd.f32 %v3760, %v3952
        %v3954 = vpop.f32.mrf.mxu0
        %v3955 = vadd.f32 %v3762, %v3954
        %3956 = vmatprep.mubr.bf16.mxu0 %v1207
        %3957 = vmatmul.mubr.bf16.gmra.mxu0 %v1206
        %v3958 = vpop.f32.mrf.mxu0
        %v3959 = vadd.f32 %v3766, %v3958
        %v3960 = vpop.f32.mrf.mxu0
        %v3961 = vadd.f32 %v3768, %v3960
        %v3962 = vpop.f32.mrf.mxu0
        %v3963 = vadd.f32 %v3770, %v3962
        %v3964 = vpop.f32.mrf.mxu0
        %v3965 = vadd.f32 %v3772, %v3964
        %3966 = vmatprep.mubr.bf16.mxu0 %v1215
        %3967 = vmatmul.mubr.bf16.gmra.mxu0 %v1214
        %v3968 = vpop.f32.mrf.mxu0
        %v3969 = vadd.f32 %v3776, %v3968
        %v3970 = vpop.f32.mrf.mxu0
        %v3971 = vadd.f32 %v3778, %v3970
        %v3972 = vpop.f32.mrf.mxu0
        %v3973 = vadd.f32 %v3780, %v3972
        %v3974 = vpop.f32.mrf.mxu0
        %v3975 = vadd.f32 %v3782, %v3974
        %3976 = vdwg.mxu0
        %3977 = vmatprep.subr.bf16.mxu0 %v2337
        %3978 = vmatpush1.bf16.msra.mxu0 %v2336
        %3979 = vmatprep.subr.bf16.mxu0 %v2333
        %3980 = vmatpush1.bf16.msra.mxu0 %v2332
        %3981 = vmatprep.subr.bf16.mxu0 %v2329
        %3982 = vmatpush1.bf16.msra.mxu0 %v2328
        %3983 = vmatprep.subr.bf16.mxu0 %v2325
        %3984 = vmatpush1.bf16.msra.mxu0 %v2324
        %3985 = vmatprep.subr.bf16.mxu0 %v2321
        %3986 = vmatpush1.bf16.msra.mxu0 %v2320
        %3987 = vmatprep.subr.bf16.mxu0 %v2317
        %3988 = vmatpush1.bf16.msra.mxu0 %v2316
        %3989 = vmatprep.subr.bf16.mxu0 %v2313
        %3990 = vmatpush1.bf16.msra.mxu0 %v2312
        %3991 = vmatprep.subr.bf16.mxu0 %v2309
        %3992 = vmatpush1.bf16.msra.mxu0 %v2308
        %3993 = vmatprep.subr.bf16.mxu0 %v2369
        %3994 = vmatpush2.bf16.msra.mxu0 %v2368
        %3995 = vmatprep.subr.bf16.mxu0 %v2365
        %3996 = vmatpush2.bf16.msra.mxu0 %v2364
        %3997 = vmatprep.subr.bf16.mxu0 %v2361
        %3998 = vmatpush2.bf16.msra.mxu0 %v2360
        %3999 = vmatprep.subr.bf16.mxu0 %v2357
        %4000 = vmatpush2.bf16.msra.mxu0 %v2356
        %4001 = vmatprep.subr.bf16.mxu0 %v2353
        %4002 = vmatpush2.bf16.msra.mxu0 %v2352
        %4003 = vmatprep.subr.bf16.mxu0 %v2349
        %4004 = vmatpush2.bf16.msra.mxu0 %v2348
        %4005 = vmatprep.subr.bf16.mxu0 %v2345
        %4006 = vmatpush2.bf16.msra.mxu0 %v2344
        %4007 = vmatprep.subr.bf16.mxu0 %v2341
        %4008 = vmatpush2.bf16.msra.mxu0 %v2340
        %4009 = vmatprep.mubr.bf16.mxu0 %v1097
        %4010 = vmatmul.mubr.bf16.gmra.mxu0 %v1096
        %v4011 = vpop.f32.mrf.mxu0
        %v4012 = vadd.f32 %v3819, %v4011
        %v4013 = vpop.f32.mrf.mxu0
        %v4014 = vadd.f32 %v3821, %v4013
        %v4015 = vpop.f32.mrf.mxu0
        %v4016 = vadd.f32 %v3823, %v4015
        %v4017 = vpop.f32.mrf.mxu0
        %v4018 = vadd.f32 %v3825, %v4017
        %4019 = vmatprep.mubr.bf16.mxu0 %v1105
        %4020 = vmatmul.mubr.bf16.gmra.mxu0 %v1104
        %v4021 = vpop.f32.mrf.mxu0
        %v4022 = vadd.f32 %v3829, %v4021
        %v4023 = vpop.f32.mrf.mxu0
        %v4024 = vadd.f32 %v3831, %v4023
        %v4025 = vpop.f32.mrf.mxu0
        %v4026 = vadd.f32 %v3833, %v4025
        %v4027 = vpop.f32.mrf.mxu0
        %v4028 = vadd.f32 %v3835, %v4027
        %4029 = vmatprep.mubr.bf16.mxu0 %v1113
        %4030 = vmatmul.mubr.bf16.gmra.mxu0 %v1112
        %v4031 = vpop.f32.mrf.mxu0
        %v4032 = vadd.f32 %v3839, %v4031
        %v4033 = vpop.f32.mrf.mxu0
        %v4034 = vadd.f32 %v3841, %v4033
        %v4035 = vpop.f32.mrf.mxu0
        %v4036 = vadd.f32 %v3843, %v4035
        %v4037 = vpop.f32.mrf.mxu0
        %v4038 = vadd.f32 %v3845, %v4037
        %4039 = vmatprep.mubr.bf16.mxu0 %v1121
        %4040 = vmatmul.mubr.bf16.gmra.mxu0 %v1120
        %v4041 = vpop.f32.mrf.mxu0
        %v4042 = vadd.f32 %v3849, %v4041
        %v4043 = vpop.f32.mrf.mxu0
        %v4044 = vadd.f32 %v3851, %v4043
        %v4045 = vpop.f32.mrf.mxu0
        %v4046 = vadd.f32 %v3853, %v4045
        %v4047 = vpop.f32.mrf.mxu0
        %v4048 = vadd.f32 %v3855, %v4047
        %4049 = vmatprep.mubr.bf16.mxu0 %v1129
        %4050 = vmatmul.mubr.bf16.gmra.mxu0 %v1128
        %v4051 = vpop.f32.mrf.mxu0
        %v4052 = vadd.f32 %v3859, %v4051
        %v4053 = vpop.f32.mrf.mxu0
        %v4054 = vadd.f32 %v3861, %v4053
        %v4055 = vpop.f32.mrf.mxu0
        %v4056 = vadd.f32 %v3863, %v4055
        %v4057 = vpop.f32.mrf.mxu0
        %v4058 = vadd.f32 %v3865, %v4057
        %4059 = vmatprep.mubr.bf16.mxu0 %v1137
        %4060 = vmatmul.mubr.bf16.gmra.mxu0 %v1136
        %v4061 = vpop.f32.mrf.mxu0
        %v4062 = vadd.f32 %v3869, %v4061
        %v4063 = vpop.f32.mrf.mxu0
        %v4064 = vadd.f32 %v3871, %v4063
        %v4065 = vpop.f32.mrf.mxu0
        %v4066 = vadd.f32 %v3873, %v4065
        %v4067 = vpop.f32.mrf.mxu0
        %v4068 = vadd.f32 %v3875, %v4067
        %4069 = vmatprep.mubr.bf16.mxu0 %v1145
        %4070 = vmatmul.mubr.bf16.gmra.mxu0 %v1144
        %v4071 = vpop.f32.mrf.mxu0
        %v4072 = vadd.f32 %v3879, %v4071
        %v4073 = vpop.f32.mrf.mxu0
        %v4074 = vadd.f32 %v3881, %v4073
        %v4075 = vpop.f32.mrf.mxu0
        %v4076 = vadd.f32 %v3883, %v4075
        %v4077 = vpop.f32.mrf.mxu0
        %v4078 = vadd.f32 %v3885, %v4077
        %4079 = vmatprep.mubr.bf16.mxu0 %v1153
        %4080 = vmatmul.mubr.bf16.gmra.mxu0 %v1152
        %v4081 = vpop.f32.mrf.mxu0
        %v4082 = vadd.f32 %v3889, %v4081
        %v4083 = vpop.f32.mrf.mxu0
        %v4084 = vadd.f32 %v3891, %v4083
        %v4085 = vpop.f32.mrf.mxu0
        %v4086 = vadd.f32 %v3893, %v4085
        %v4087 = vpop.f32.mrf.mxu0
        %v4088 = vadd.f32 %v3895, %v4087
        %4089 = vmatprep.mubr.bf16.mxu0 %v1161
        %4090 = vmatmul.mubr.bf16.gmra.mxu0 %v1160
        %v4091 = vpop.f32.mrf.mxu0
        %v4092 = vadd.f32 %v3899, %v4091
        %v4093 = vpop.f32.mrf.mxu0
        %v4094 = vadd.f32 %v3901, %v4093
        %v4095 = vpop.f32.mrf.mxu0
        %v4096 = vadd.f32 %v3903, %v4095
        %v4097 = vpop.f32.mrf.mxu0
        %v4098 = vadd.f32 %v3905, %v4097
        %4099 = vmatprep.mubr.bf16.mxu0 %v1169
        %4100 = vmatmul.mubr.bf16.gmra.mxu0 %v1168
        %v4101 = vpop.f32.mrf.mxu0
        %v4102 = vadd.f32 %v3909, %v4101
        %v4103 = vpop.f32.mrf.mxu0
        %v4104 = vadd.f32 %v3911, %v4103
        %v4105 = vpop.f32.mrf.mxu0
        %v4106 = vadd.f32 %v3913, %v4105
        %v4107 = vpop.f32.mrf.mxu0
        %v4108 = vadd.f32 %v3915, %v4107
        %4109 = vmatprep.mubr.bf16.mxu0 %v1177
        %4110 = vmatmul.mubr.bf16.gmra.mxu0 %v1176
        %v4111 = vpop.f32.mrf.mxu0
        %v4112 = vadd.f32 %v3919, %v4111
        %v4113 = vpop.f32.mrf.mxu0
        %v4114 = vadd.f32 %v3921, %v4113
        %v4115 = vpop.f32.mrf.mxu0
        %v4116 = vadd.f32 %v3923, %v4115
        %v4117 = vpop.f32.mrf.mxu0
        %v4118 = vadd.f32 %v3925, %v4117
        %4119 = vmatprep.mubr.bf16.mxu0 %v1185
        %4120 = vmatmul.mubr.bf16.gmra.mxu0 %v1184
        %v4121 = vpop.f32.mrf.mxu0
        %v4122 = vadd.f32 %v3929, %v4121
        %v4123 = vpop.f32.mrf.mxu0
        %v4124 = vadd.f32 %v3931, %v4123
        %v4125 = vpop.f32.mrf.mxu0
        %v4126 = vadd.f32 %v3933, %v4125
        %v4127 = vpop.f32.mrf.mxu0
        %v4128 = vadd.f32 %v3935, %v4127
        %4129 = vmatprep.mubr.bf16.mxu0 %v1193
        %4130 = vmatmul.mubr.bf16.gmra.mxu0 %v1192
        %v4131 = vpop.f32.mrf.mxu0
        %v4132 = vadd.f32 %v3939, %v4131
        %v4133 = vpop.f32.mrf.mxu0
        %v4134 = vadd.f32 %v3941, %v4133
        %v4135 = vpop.f32.mrf.mxu0
        %v4136 = vadd.f32 %v3943, %v4135
        %v4137 = vpop.f32.mrf.mxu0
        %v4138 = vadd.f32 %v3945, %v4137
        %4139 = vmatprep.mubr.bf16.mxu0 %v1201
        %4140 = vmatmul.mubr.bf16.gmra.mxu0 %v1200
        %v4141 = vpop.f32.mrf.mxu0
        %v4142 = vadd.f32 %v3949, %v4141
        %v4143 = vpop.f32.mrf.mxu0
        %v4144 = vadd.f32 %v3951, %v4143
        %v4145 = vpop.f32.mrf.mxu0
        %v4146 = vadd.f32 %v3953, %v4145
        %v4147 = vpop.f32.mrf.mxu0
        %v4148 = vadd.f32 %v3955, %v4147
        %4149 = vmatprep.mubr.bf16.mxu0 %v1209
        %4150 = vmatmul.mubr.bf16.gmra.mxu0 %v1208
        %v4151 = vpop.f32.mrf.mxu0
        %v4152 = vadd.f32 %v3959, %v4151
        %v4153 = vpop.f32.mrf.mxu0
        %v4154 = vadd.f32 %v3961, %v4153
        %v4155 = vpop.f32.mrf.mxu0
        %v4156 = vadd.f32 %v3963, %v4155
        %v4157 = vpop.f32.mrf.mxu0
        %v4158 = vadd.f32 %v3965, %v4157
        %4159 = vmatprep.mubr.bf16.mxu0 %v1217
        %4160 = vmatmul.mubr.bf16.gmra.mxu0 %v1216
        %v4161 = vpop.f32.mrf.mxu0
        %v4162 = vadd.f32 %v3969, %v4161
        %v4163 = vpop.f32.mrf.mxu0
        %v4164 = vadd.f32 %v3971, %v4163
        %v4165 = vpop.f32.mrf.mxu0
        %v4166 = vadd.f32 %v3973, %v4165
        %v4167 = vpop.f32.mrf.mxu0
        %v4168 = vadd.f32 %v3975, %v4167
        %4169 = vdwg.mxu0
        %v4170 = vtanh.pop %v3240
        %v4171 = vtanh.pop %v3242
        %v4172 = vtanh.pop %v3244
        %v4173 = vtanh.pop %v3246
        %v4174 = vtanh.pop %v3250
        %v4175 = vtanh.pop %v3252
        %v4176 = vtanh.pop %v3254
        %v4177 = vtanh.pop %v3256
        %v4178 = vtanh.pop %v3260
        %v4179 = vtanh.pop %v3262
        %v4180 = vtanh.pop %v3264
        %v4181 = vtanh.pop %v3266
        %v4182 = vtanh.pop %v3270
        %v4183 = vtanh.pop %v3272
        %v4184 = vtanh.pop %v3274
        %v4185 = vtanh.pop %v3276
        %v4186 = vtanh.pop %v3280
        %v4187 = vtanh.pop %v3282
        %v4188 = vtanh.pop %v3284
        %v4189 = vtanh.pop %v3286
        %v4190 = vtanh.pop %v3290
        %v4191 = vtanh.pop %v3292
        %v4192 = vtanh.pop %v3294
        %v4193 = vtanh.pop %v3296
        %v4194 = vtanh.pop %v3300
        %v4195 = vtanh.pop %v3302
        %v4196 = vtanh.pop %v3304
        %v4197 = vtanh.pop %v3306
        %v4198 = vtanh.pop %v3310
        %v4199 = vtanh.pop %v3312
        %v4200 = vtanh.pop %v3314
        %v4201 = vtanh.pop %v3316
        %v4202 = vtanh.pop %v3320
        %v4203 = vtanh.pop %v3322
        %v4204 = vtanh.pop %v3324
        %v4205 = vtanh.pop %v3326
        %v4206 = vtanh.pop %v3330
        %v4207 = vtanh.pop %v3332
        %v4208 = vtanh.pop %v3334
        %v4209 = vtanh.pop %v3336
        %v4210 = vtanh.pop %v3340
        %v4211 = vtanh.pop %v3342
        %v4212 = vtanh.pop %v3344
        %v4213 = vtanh.pop %v3346
        %v4214 = vtanh.pop %v3350
        %v4215 = vtanh.pop %v3352
        %v4216 = vtanh.pop %v3354
        %v4217 = vtanh.pop %v3356
        %v4218 = vtanh.pop %v3360
        %v4219 = vtanh.pop %v3362
        %v4220 = vtanh.pop %v3364
        %v4221 = vtanh.pop %v3366
        %v4222 = vtanh.pop %v3370
        %v4223 = vtanh.pop %v3372
        %v4224 = vtanh.pop %v3374
        %v4225 = vtanh.pop %v3376
        %v4226 = vtanh.pop %v3380
        %v4227 = vtanh.pop %v3382
        %v4228 = vtanh.pop %v3384
        %v4229 = vtanh.pop %v3386
        %v4230 = vtanh.pop %v3390
        %v4231 = vtanh.pop %v3392
        %v4232 = vtanh.pop %v3394
        %v4233 = vtanh.pop %v3396
        %v4234 = vxor.u32 %v4012, 2147483648
        %v4235 = vxor.u32 %v4014, 2147483648
        %v4236 = vxor.u32 %v4016, 2147483648
        %v4237 = vxor.u32 %v4018, 2147483648
        %v4238 = vxor.u32 %v4022, 2147483648
        %v4239 = vxor.u32 %v4024, 2147483648
        %v4240 = vxor.u32 %v4026, 2147483648
        %v4241 = vxor.u32 %v4028, 2147483648
        %v4242 = vxor.u32 %v4032, 2147483648
        %v4243 = vxor.u32 %v4034, 2147483648
        %v4244 = vxor.u32 %v4036, 2147483648
        %v4245 = vxor.u32 %v4038, 2147483648
        %v4246 = vxor.u32 %v4042, 2147483648
        %v4247 = vxor.u32 %v4044, 2147483648
        %v4248 = vxor.u32 %v4046, 2147483648
        %v4249 = vxor.u32 %v4048, 2147483648
        %v4250 = vxor.u32 %v4052, 2147483648
        %v4251 = vxor.u32 %v4054, 2147483648
        %v4252 = vxor.u32 %v4056, 2147483648
        %v4253 = vxor.u32 %v4058, 2147483648
        %v4254 = vxor.u32 %v4062, 2147483648
        %v4255 = vxor.u32 %v4064, 2147483648
        %v4256 = vxor.u32 %v4066, 2147483648
        %v4257 = vxor.u32 %v4068, 2147483648
        %v4258 = vxor.u32 %v4072, 2147483648
        %v4259 = vxor.u32 %v4074, 2147483648
        %v4260 = vxor.u32 %v4076, 2147483648
        %v4261 = vxor.u32 %v4078, 2147483648
        %v4262 = vxor.u32 %v4082, 2147483648
        %v4263 = vxor.u32 %v4084, 2147483648
        %v4264 = vxor.u32 %v4086, 2147483648
        %v4265 = vxor.u32 %v4088, 2147483648
        %v4266 = vxor.u32 %v4092, 2147483648
        %v4267 = vxor.u32 %v4094, 2147483648
        %v4268 = vxor.u32 %v4096, 2147483648
        %v4269 = vxor.u32 %v4098, 2147483648
        %v4270 = vxor.u32 %v4102, 2147483648
        %v4271 = vxor.u32 %v4104, 2147483648
        %v4272 = vxor.u32 %v4106, 2147483648
        %v4273 = vxor.u32 %v4108, 2147483648
        %v4274 = vxor.u32 %v4112, 2147483648
        %v4275 = vxor.u32 %v4114, 2147483648
        %v4276 = vxor.u32 %v4116, 2147483648
        %v4277 = vxor.u32 %v4118, 2147483648
        %v4278 = vxor.u32 %v4122, 2147483648
        %v4279 = vxor.u32 %v4124, 2147483648
        %v4280 = vxor.u32 %v4126, 2147483648
        %v4281 = vxor.u32 %v4128, 2147483648
        %v4282 = vxor.u32 %v4132, 2147483648
        %v4283 = vxor.u32 %v4134, 2147483648
        %v4284 = vxor.u32 %v4136, 2147483648
        %v4285 = vxor.u32 %v4138, 2147483648
        %v4286 = vxor.u32 %v4142, 2147483648
        %v4287 = vxor.u32 %v4144, 2147483648
        %v4288 = vxor.u32 %v4146, 2147483648
        %v4289 = vxor.u32 %v4148, 2147483648
        %v4290 = vxor.u32 %v4152, 2147483648
        %v4291 = vxor.u32 %v4154, 2147483648
        %v4292 = vxor.u32 %v4156, 2147483648
        %v4293 = vxor.u32 %v4158, 2147483648
        %v4294 = vxor.u32 %v4162, 2147483648
        %v4295 = vxor.u32 %v4164, 2147483648
        %v4296 = vxor.u32 %v4166, 2147483648
        %v4297 = vxor.u32 %v4168, 2147483648
        %v4298 = vmul.f32 %v4234, 1.442695
        %v4299 = vpow.pop %v4298
        %v4300 = vmul.f32 %v4235, 1.442695
        %v4301 = vpow.pop %v4300
        %v4302 = vmul.f32 %v4236, 1.442695
        %v4303 = vpow.pop %v4302
        %v4304 = vmul.f32 %v4237, 1.442695
        %v4305 = vpow.pop %v4304
        %v4306 = vmul.f32 %v4238, 1.442695
        %v4307 = vpow.pop %v4306
        %v4308 = vmul.f32 %v4239, 1.442695
        %v4309 = vpow.pop %v4308
        %v4310 = vmul.f32 %v4240, 1.442695
        %v4311 = vpow.pop %v4310
        %v4312 = vmul.f32 %v4241, 1.442695
        %v4313 = vpow.pop %v4312
        %v4314 = vmul.f32 %v4242, 1.442695
        %v4315 = vpow.pop %v4314
        %v4316 = vmul.f32 %v4243, 1.442695
        %v4317 = vpow.pop %v4316
        %v4318 = vmul.f32 %v4244, 1.442695
        %v4319 = vpow.pop %v4318
        %v4320 = vmul.f32 %v4245, 1.442695
        %v4321 = vpow.pop %v4320
        %v4322 = vmul.f32 %v4246, 1.442695
        %v4323 = vpow.pop %v4322
        %v4324 = vmul.f32 %v4247, 1.442695
        %v4325 = vpow.pop %v4324
        %v4326 = vmul.f32 %v4248, 1.442695
        %v4327 = vpow.pop %v4326
        %v4328 = vmul.f32 %v4249, 1.442695
        %v4329 = vpow.pop %v4328
        %v4330 = vmul.f32 %v4250, 1.442695
        %v4331 = vpow.pop %v4330
        %v4332 = vmul.f32 %v4251, 1.442695
        %v4333 = vpow.pop %v4332
        %v4334 = vmul.f32 %v4252, 1.442695
        %v4335 = vpow.pop %v4334
        %v4336 = vmul.f32 %v4253, 1.442695
        %v4337 = vpow.pop %v4336
        %v4338 = vmul.f32 %v4254, 1.442695
        %v4339 = vpow.pop %v4338
        %v4340 = vmul.f32 %v4255, 1.442695
        %v4341 = vpow.pop %v4340
        %v4342 = vmul.f32 %v4256, 1.442695
        %v4343 = vpow.pop %v4342
        %v4344 = vmul.f32 %v4257, 1.442695
        %v4345 = vpow.pop %v4344
        %v4346 = vmul.f32 %v4258, 1.442695
        %v4347 = vpow.pop %v4346
        %v4348 = vmul.f32 %v4259, 1.442695
        %v4349 = vpow.pop %v4348
        %v4350 = vmul.f32 %v4260, 1.442695
        %v4351 = vpow.pop %v4350
        %v4352 = vmul.f32 %v4261, 1.442695
        %v4353 = vpow.pop %v4352
        %v4354 = vmul.f32 %v4262, 1.442695
        %v4355 = vpow.pop %v4354
        %v4356 = vmul.f32 %v4263, 1.442695
        %v4357 = vpow.pop %v4356
        %v4358 = vmul.f32 %v4264, 1.442695
        %v4359 = vpow.pop %v4358
        %v4360 = vmul.f32 %v4265, 1.442695
        %v4361 = vpow.pop %v4360
        %v4362 = vmul.f32 %v4266, 1.442695
        %v4363 = vpow.pop %v4362
        %v4364 = vmul.f32 %v4267, 1.442695
        %v4365 = vpow.pop %v4364
        %v4366 = vmul.f32 %v4268, 1.442695
        %v4367 = vpow.pop %v4366
        %v4368 = vmul.f32 %v4269, 1.442695
        %v4369 = vpow.pop %v4368
        %v4370 = vmul.f32 %v4270, 1.442695
        %v4371 = vpow.pop %v4370
        %v4372 = vmul.f32 %v4271, 1.442695
        %v4373 = vpow.pop %v4372
        %v4374 = vmul.f32 %v4272, 1.442695
        %v4375 = vpow.pop %v4374
        %v4376 = vmul.f32 %v4273, 1.442695
        %v4377 = vpow.pop %v4376
        %v4378 = vmul.f32 %v4274, 1.442695
        %v4379 = vpow.pop %v4378
        %v4380 = vmul.f32 %v4275, 1.442695
        %v4381 = vpow.pop %v4380
        %v4382 = vmul.f32 %v4276, 1.442695
        %v4383 = vpow.pop %v4382
        %v4384 = vmul.f32 %v4277, 1.442695
        %v4385 = vpow.pop %v4384
        %v4386 = vmul.f32 %v4278, 1.442695
        %v4387 = vpow.pop %v4386
        %v4388 = vmul.f32 %v4279, 1.442695
        %v4389 = vpow.pop %v4388
        %v4390 = vmul.f32 %v4280, 1.442695
        %v4391 = vpow.pop %v4390
        %v4392 = vmul.f32 %v4281, 1.442695
        %v4393 = vpow.pop %v4392
        %v4394 = vmul.f32 %v4282, 1.442695
        %v4395 = vpow.pop %v4394
        %v4396 = vmul.f32 %v4283, 1.442695
        %v4397 = vpow.pop %v4396
        %v4398 = vmul.f32 %v4284, 1.442695
        %v4399 = vpow.pop %v4398
        %v4400 = vmul.f32 %v4285, 1.442695
        %v4401 = vpow.pop %v4400
        %v4402 = vmul.f32 %v4286, 1.442695
        %v4403 = vpow.pop %v4402
        %v4404 = vmul.f32 %v4287, 1.442695
        %v4405 = vpow.pop %v4404
        %v4406 = vmul.f32 %v4288, 1.442695
        %v4407 = vpow.pop %v4406
        %v4408 = vmul.f32 %v4289, 1.442695
        %v4409 = vpow.pop %v4408
        %v4410 = vmul.f32 %v4290, 1.442695
        %v4411 = vpow.pop %v4410
        %v4412 = vmul.f32 %v4291, 1.442695
        %v4413 = vpow.pop %v4412
        %v4414 = vmul.f32 %v4292, 1.442695
        %v4415 = vpow.pop %v4414
        %v4416 = vmul.f32 %v4293, 1.442695
        %v4417 = vpow.pop %v4416
        %v4418 = vmul.f32 %v4294, 1.442695
        %v4419 = vpow.pop %v4418
        %v4420 = vmul.f32 %v4295, 1.442695
        %v4421 = vpow.pop %v4420
        %v4422 = vmul.f32 %v4296, 1.442695
        %v4423 = vpow.pop %v4422
        %v4424 = vmul.f32 %v4297, 1.442695
        %v4425 = vpow.pop %v4424
        %v4426 = vadd.f32 %v4299, 1.0
        %v4427 = vadd.f32 %v4301, 1.0
        %v4428 = vadd.f32 %v4303, 1.0
        %v4429 = vadd.f32 %v4305, 1.0
        %v4430 = vadd.f32 %v4307, 1.0
        %v4431 = vadd.f32 %v4309, 1.0
        %v4432 = vadd.f32 %v4311, 1.0
        %v4433 = vadd.f32 %v4313, 1.0
        %v4434 = vadd.f32 %v4315, 1.0
        %v4435 = vadd.f32 %v4317, 1.0
        %v4436 = vadd.f32 %v4319, 1.0
        %v4437 = vadd.f32 %v4321, 1.0
        %v4438 = vadd.f32 %v4323, 1.0
        %v4439 = vadd.f32 %v4325, 1.0
        %v4440 = vadd.f32 %v4327, 1.0
        %v4441 = vadd.f32 %v4329, 1.0
        %v4442 = vadd.f32 %v4331, 1.0
        %v4443 = vadd.f32 %v4333, 1.0
        %v4444 = vadd.f32 %v4335, 1.0
        %v4445 = vadd.f32 %v4337, 1.0
        %v4446 = vadd.f32 %v4339, 1.0
        %v4447 = vadd.f32 %v4341, 1.0
        %v4448 = vadd.f32 %v4343, 1.0
        %v4449 = vadd.f32 %v4345, 1.0
        %v4450 = vadd.f32 %v4347, 1.0
        %v4451 = vadd.f32 %v4349, 1.0
        %v4452 = vadd.f32 %v4351, 1.0
        %v4453 = vadd.f32 %v4353, 1.0
        %v4454 = vadd.f32 %v4355, 1.0
        %v4455 = vadd.f32 %v4357, 1.0
        %v4456 = vadd.f32 %v4359, 1.0
        %v4457 = vadd.f32 %v4361, 1.0
        %v4458 = vadd.f32 %v4363, 1.0
        %v4459 = vadd.f32 %v4365, 1.0
        %v4460 = vadd.f32 %v4367, 1.0
        %v4461 = vadd.f32 %v4369, 1.0
        %v4462 = vadd.f32 %v4371, 1.0
        %v4463 = vadd.f32 %v4373, 1.0
        %v4464 = vadd.f32 %v4375, 1.0
        %v4465 = vadd.f32 %v4377, 1.0
        %v4466 = vadd.f32 %v4379, 1.0
        %v4467 = vadd.f32 %v4381, 1.0
        %v4468 = vadd.f32 %v4383, 1.0
        %v4469 = vadd.f32 %v4385, 1.0
        %v4470 = vadd.f32 %v4387, 1.0
        %v4471 = vadd.f32 %v4389, 1.0
        %v4472 = vadd.f32 %v4391, 1.0
        %v4473 = vadd.f32 %v4393, 1.0
        %v4474 = vadd.f32 %v4395, 1.0
        %v4475 = vadd.f32 %v4397, 1.0
        %v4476 = vadd.f32 %v4399, 1.0
        %v4477 = vadd.f32 %v4401, 1.0
        %v4478 = vadd.f32 %v4403, 1.0
        %v4479 = vadd.f32 %v4405, 1.0
        %v4480 = vadd.f32 %v4407, 1.0
        %v4481 = vadd.f32 %v4409, 1.0
        %v4482 = vadd.f32 %v4411, 1.0
        %v4483 = vadd.f32 %v4413, 1.0
        %v4484 = vadd.f32 %v4415, 1.0
        %v4485 = vadd.f32 %v4417, 1.0
        %v4486 = vadd.f32 %v4419, 1.0
        %v4487 = vadd.f32 %v4421, 1.0
        %v4488 = vadd.f32 %v4423, 1.0
        %v4489 = vadd.f32 %v4425, 1.0
        %v4490 = vrcp.pop %v4426
        %v4491 = vmul.f32 1.0, %v4490
        %v4492 = vrcp.pop %v4427
        %v4493 = vmul.f32 1.0, %v4492
        %v4494 = vrcp.pop %v4428
        %v4495 = vmul.f32 1.0, %v4494
        %v4496 = vrcp.pop %v4429
        %v4497 = vmul.f32 1.0, %v4496
        %v4498 = vrcp.pop %v4430
        %v4499 = vmul.f32 1.0, %v4498
        %v4500 = vrcp.pop %v4431
        %v4501 = vmul.f32 1.0, %v4500
        %v4502 = vrcp.pop %v4432
        %v4503 = vmul.f32 1.0, %v4502
        %v4504 = vrcp.pop %v4433
        %v4505 = vmul.f32 1.0, %v4504
        %v4506 = vrcp.pop %v4434
        %v4507 = vmul.f32 1.0, %v4506
        %v4508 = vrcp.pop %v4435
        %v4509 = vmul.f32 1.0, %v4508
        %v4510 = vrcp.pop %v4436
        %v4511 = vmul.f32 1.0, %v4510
        %v4512 = vrcp.pop %v4437
        %v4513 = vmul.f32 1.0, %v4512
        %v4514 = vrcp.pop %v4438
        %v4515 = vmul.f32 1.0, %v4514
        %v4516 = vrcp.pop %v4439
        %v4517 = vmul.f32 1.0, %v4516
        %v4518 = vrcp.pop %v4440
        %v4519 = vmul.f32 1.0, %v4518
        %v4520 = vrcp.pop %v4441
        %v4521 = vmul.f32 1.0, %v4520
        %v4522 = vrcp.pop %v4442
        %v4523 = vmul.f32 1.0, %v4522
        %v4524 = vrcp.pop %v4443
        %v4525 = vmul.f32 1.0, %v4524
        %v4526 = vrcp.pop %v4444
        %v4527 = vmul.f32 1.0, %v4526
        %v4528 = vrcp.pop %v4445
        %v4529 = vmul.f32 1.0, %v4528
        %v4530 = vrcp.pop %v4446
        %v4531 = vmul.f32 1.0, %v4530
        %v4532 = vrcp.pop %v4447
        %v4533 = vmul.f32 1.0, %v4532
        %v4534 = vrcp.pop %v4448
        %v4535 = vmul.f32 1.0, %v4534
        %v4536 = vrcp.pop %v4449
        %v4537 = vmul.f32 1.0, %v4536
        %v4538 = vrcp.pop %v4450
        %v4539 = vmul.f32 1.0, %v4538
        %v4540 = vrcp.pop %v4451
        %v4541 = vmul.f32 1.0, %v4540
        %v4542 = vrcp.pop %v4452
        %v4543 = vmul.f32 1.0, %v4542
        %v4544 = vrcp.pop %v4453
        %v4545 = vmul.f32 1.0, %v4544
        %v4546 = vrcp.pop %v4454
        %v4547 = vmul.f32 1.0, %v4546
        %v4548 = vrcp.pop %v4455
        %v4549 = vmul.f32 1.0, %v4548
        %v4550 = vrcp.pop %v4456
        %v4551 = vmul.f32 1.0, %v4550
        %v4552 = vrcp.pop %v4457
        %v4553 = vmul.f32 1.0, %v4552
        %v4554 = vrcp.pop %v4458
        %v4555 = vmul.f32 1.0, %v4554
        %v4556 = vrcp.pop %v4459
        %v4557 = vmul.f32 1.0, %v4556
        %v4558 = vrcp.pop %v4460
        %v4559 = vmul.f32 1.0, %v4558
        %v4560 = vrcp.pop %v4461
        %v4561 = vmul.f32 1.0, %v4560
        %v4562 = vrcp.pop %v4462
        %v4563 = vmul.f32 1.0, %v4562
        %v4564 = vrcp.pop %v4463
        %v4565 = vmul.f32 1.0, %v4564
        %v4566 = vrcp.pop %v4464
        %v4567 = vmul.f32 1.0, %v4566
        %v4568 = vrcp.pop %v4465
        %v4569 = vmul.f32 1.0, %v4568
        %v4570 = vrcp.pop %v4466
        %v4571 = vmul.f32 1.0, %v4570
        %v4572 = vrcp.pop %v4467
        %v4573 = vmul.f32 1.0, %v4572
        %v4574 = vrcp.pop %v4468
        %v4575 = vmul.f32 1.0, %v4574
        %v4576 = vrcp.pop %v4469
        %v4577 = vmul.f32 1.0, %v4576
        %v4578 = vrcp.pop %v4470
        %v4579 = vmul.f32 1.0, %v4578
        %v4580 = vrcp.pop %v4471
        %v4581 = vmul.f32 1.0, %v4580
        %v4582 = vrcp.pop %v4472
        %v4583 = vmul.f32 1.0, %v4582
        %v4584 = vrcp.pop %v4473
        %v4585 = vmul.f32 1.0, %v4584
        %v4586 = vrcp.pop %v4474
        %v4587 = vmul.f32 1.0, %v4586
        %v4588 = vrcp.pop %v4475
        %v4589 = vmul.f32 1.0, %v4588
        %v4590 = vrcp.pop %v4476
        %v4591 = vmul.f32 1.0, %v4590
        %v4592 = vrcp.pop %v4477
        %v4593 = vmul.f32 1.0, %v4592
        %v4594 = vrcp.pop %v4478
        %v4595 = vmul.f32 1.0, %v4594
        %v4596 = vrcp.pop %v4479
        %v4597 = vmul.f32 1.0, %v4596
        %v4598 = vrcp.pop %v4480
        %v4599 = vmul.f32 1.0, %v4598
        %v4600 = vrcp.pop %v4481
        %v4601 = vmul.f32 1.0, %v4600
        %v4602 = vrcp.pop %v4482
        %v4603 = vmul.f32 1.0, %v4602
        %v4604 = vrcp.pop %v4483
        %v4605 = vmul.f32 1.0, %v4604
        %v4606 = vrcp.pop %v4484
        %v4607 = vmul.f32 1.0, %v4606
        %v4608 = vrcp.pop %v4485
        %v4609 = vmul.f32 1.0, %v4608
        %v4610 = vrcp.pop %v4486
        %v4611 = vmul.f32 1.0, %v4610
        %v4612 = vrcp.pop %v4487
        %v4613 = vmul.f32 1.0, %v4612
        %v4614 = vrcp.pop %v4488
        %v4615 = vmul.f32 1.0, %v4614
        %v4616 = vrcp.pop %v4489
        %v4617 = vmul.f32 1.0, %v4616
        %v4618 = vmul.f32 %v4170, %v4491
        %v4619 = vmul.f32 %v4171, %v4493
        %v4620 = vmul.f32 %v4172, %v4495
        %v4621 = vmul.f32 %v4173, %v4497
        %v4622 = vmul.f32 %v4174, %v4499
        %v4623 = vmul.f32 %v4175, %v4501
        %v4624 = vmul.f32 %v4176, %v4503
        %v4625 = vmul.f32 %v4177, %v4505
        %v4626 = vmul.f32 %v4178, %v4507
        %v4627 = vmul.f32 %v4179, %v4509
        %v4628 = vmul.f32 %v4180, %v4511
        %v4629 = vmul.f32 %v4181, %v4513
        %v4630 = vmul.f32 %v4182, %v4515
        %v4631 = vmul.f32 %v4183, %v4517
        %v4632 = vmul.f32 %v4184, %v4519
        %v4633 = vmul.f32 %v4185, %v4521
        %v4634 = vmul.f32 %v4186, %v4523
        %v4635 = vmul.f32 %v4187, %v4525
        %v4636 = vmul.f32 %v4188, %v4527
        %v4637 = vmul.f32 %v4189, %v4529
        %v4638 = vmul.f32 %v4190, %v4531
        %v4639 = vmul.f32 %v4191, %v4533
        %v4640 = vmul.f32 %v4192, %v4535
        %v4641 = vmul.f32 %v4193, %v4537
        %v4642 = vmul.f32 %v4194, %v4539
        %v4643 = vmul.f32 %v4195, %v4541
        %v4644 = vmul.f32 %v4196, %v4543
        %v4645 = vmul.f32 %v4197, %v4545
        %v4646 = vmul.f32 %v4198, %v4547
        %v4647 = vmul.f32 %v4199, %v4549
        %v4648 = vmul.f32 %v4200, %v4551
        %v4649 = vmul.f32 %v4201, %v4553
        %v4650 = vmul.f32 %v4202, %v4555
        %v4651 = vmul.f32 %v4203, %v4557
        %v4652 = vmul.f32 %v4204, %v4559
        %v4653 = vmul.f32 %v4205, %v4561
        %v4654 = vmul.f32 %v4206, %v4563
        %v4655 = vmul.f32 %v4207, %v4565
        %v4656 = vmul.f32 %v4208, %v4567
        %v4657 = vmul.f32 %v4209, %v4569
        %v4658 = vmul.f32 %v4210, %v4571
        %v4659 = vmul.f32 %v4211, %v4573
        %v4660 = vmul.f32 %v4212, %v4575
        %v4661 = vmul.f32 %v4213, %v4577
        %v4662 = vmul.f32 %v4214, %v4579
        %v4663 = vmul.f32 %v4215, %v4581
        %v4664 = vmul.f32 %v4216, %v4583
        %v4665 = vmul.f32 %v4217, %v4585
        %v4666 = vmul.f32 %v4218, %v4587
        %v4667 = vmul.f32 %v4219, %v4589
        %v4668 = vmul.f32 %v4220, %v4591
        %v4669 = vmul.f32 %v4221, %v4593
        %v4670 = vmul.f32 %v4222, %v4595
        %v4671 = vmul.f32 %v4223, %v4597
        %v4672 = vmul.f32 %v4224, %v4599
        %v4673 = vmul.f32 %v4225, %v4601
        %v4674 = vmul.f32 %v4226, %v4603
        %v4675 = vmul.f32 %v4227, %v4605
        %v4676 = vmul.f32 %v4228, %v4607
        %v4677 = vmul.f32 %v4229, %v4609
        %v4678 = vmul.f32 %v4230, %v4611
        %v4679 = vmul.f32 %v4231, %v4613
        %v4680 = vmul.f32 %v4232, %v4615
        %v4681 = vmul.f32 %v4233, %v4617
        %v4682 = vpack.c.bf16 %v4620, %v4618
        %v4683 = vpack.c.bf16 %v4621, %v4619
        %v4684 = vpack.c.bf16 %v4624, %v4622
        %v4685 = vpack.c.bf16 %v4625, %v4623
        %v4686 = vpack.c.bf16 %v4628, %v4626
        %v4687 = vpack.c.bf16 %v4629, %v4627
        %v4688 = vpack.c.bf16 %v4632, %v4630
        %v4689 = vpack.c.bf16 %v4633, %v4631
        %v4690 = vpack.c.bf16 %v4636, %v4634
        %v4691 = vpack.c.bf16 %v4637, %v4635
        %v4692 = vpack.c.bf16 %v4640, %v4638
        %v4693 = vpack.c.bf16 %v4641, %v4639
        %v4694 = vpack.c.bf16 %v4644, %v4642
        %v4695 = vpack.c.bf16 %v4645, %v4643
        %v4696 = vpack.c.bf16 %v4648, %v4646
        %v4697 = vpack.c.bf16 %v4649, %v4647
        %v4698 = vpack.c.bf16 %v4652, %v4650
        %v4699 = vpack.c.bf16 %v4653, %v4651
        %v4700 = vpack.c.bf16 %v4656, %v4654
        %v4701 = vpack.c.bf16 %v4657, %v4655
        %v4702 = vpack.c.bf16 %v4660, %v4658
        %v4703 = vpack.c.bf16 %v4661, %v4659
        %v4704 = vpack.c.bf16 %v4664, %v4662
        %v4705 = vpack.c.bf16 %v4665, %v4663
        %v4706 = vpack.c.bf16 %v4668, %v4666
        %v4707 = vpack.c.bf16 %v4669, %v4667
        %v4708 = vpack.c.bf16 %v4672, %v4670
        %v4709 = vpack.c.bf16 %v4673, %v4671
        %v4710 = vpack.c.bf16 %v4676, %v4674
        %v4711 = vpack.c.bf16 %v4677, %v4675
        %v4712 = vpack.c.bf16 %v4680, %v4678
        %v4713 = vpack.c.bf16 %v4681, %v4679
        %v4714 = vld [vmem:[#allocation9] sm:$0x3]
        %v4715 = vld [vmem:[#allocation2] sm:$0x1]
        %4717 = vset.pattern.permute.xlu0 0
        %4718 = vperm.xlu0 %4717, %v4715
        %v4719 = vpop.permute.xlu0 %4718
        %v4721 = vlaneseq
        %v4722 = vshrl.u32 %v4721, 7
        %v4723 = vsub.s32 0, %v4722
        %v4724 = vrot.slane %v4719, %v4723
        %v4727 = vunpack.c.l.s4 1966171168
        %v4728 = vunpack.c.0.s8 %v4727
        %v4729 = vlaneseq
        %v4730 = vshrl.u32 %v4729, 7
        %v4731 = vsub.s32 %v4728, %v4730
        %v4732 = vrot.slane %v4714, %v4731
        %v4733 = vcombine.high %v4732, %v4732
        %v4735 = vunpack.c.l.s4 1966171168
        %v4736 = vunpack.c.0.s8 %v4735
        %v4737 = vlaneseq
        %v4738 = vshrl.u32 %v4737, 7
        %v4739 = vsub.s32 %v4736, %v4738
        %v4740 = vrot.slane %v4732, %v4739
        %v4742 = vunpack.c.l.s4 1966171168
        %v4743 = vunpack.c.0.s8 %v4742
        %v4744 = vlaneseq
        %v4745 = vshrl.u32 %v4744, 7
        %v4746 = vsub.s32 %v4743, %v4745
        %v4747 = vrot.slane %v4733, %v4746
        %4750 = vmatprep.subr.bf16.mxu0 %v4697
        %4751 = vmatpush1.bf16.xpose.msra.mxu0 %v4696
        %4752 = vmatprep.subr.bf16.mxu0 %v4695
        %4753 = vmatpush1.bf16.xpose.msra.mxu0 %v4694
        %4754 = vmatprep.subr.bf16.mxu0 %v4693
        %4755 = vmatpush1.bf16.xpose.msra.mxu0 %v4692
        %4756 = vmatprep.subr.bf16.mxu0 %v4691
        %4757 = vmatpush1.bf16.xpose.msra.mxu0 %v4690
        %4758 = vmatprep.subr.bf16.mxu0 %v4689
        %4759 = vmatpush1.bf16.xpose.msra.mxu0 %v4688
        %4760 = vmatprep.subr.bf16.mxu0 %v4687
        %4761 = vmatpush1.bf16.xpose.msra.mxu0 %v4686
        %4762 = vmatprep.subr.bf16.mxu0 %v4685
        %4763 = vmatpush1.bf16.xpose.msra.mxu0 %v4684
        %4764 = vmatprep.subr.bf16.mxu0 %v4683
        %4765 = vmatpush1.bf16.xpose.msra.mxu0 %v4682
        %4766 = vmatprep.subr.bf16.mxu0 %v4713
        %4767 = vmatpush2.bf16.xpose.msra.mxu0 %v4712
        %4768 = vmatprep.subr.bf16.mxu0 %v4711
        %4769 = vmatpush2.bf16.xpose.msra.mxu0 %v4710
        %4770 = vmatprep.subr.bf16.mxu0 %v4709
        %4771 = vmatpush2.bf16.xpose.msra.mxu0 %v4708
        %4772 = vmatprep.subr.bf16.mxu0 %v4707
        %4773 = vmatpush2.bf16.xpose.msra.mxu0 %v4706
        %4774 = vmatprep.subr.bf16.mxu0 %v4705
        %4775 = vmatpush2.bf16.xpose.msra.mxu0 %v4704
        %4776 = vmatprep.subr.bf16.mxu0 %v4703
        %4777 = vmatpush2.bf16.xpose.msra.mxu0 %v4702
        %4778 = vmatprep.subr.bf16.mxu0 %v4701
        %4779 = vmatpush2.bf16.xpose.msra.mxu0 %v4700
        %4780 = vmatprep.subr.bf16.mxu0 %v4699
        %4781 = vmatpush2.bf16.xpose.msra.mxu0 %v4698
        %4782 = vmatprep.mubr.bf16.mxu0 %v4747
        %4783 = vmatmul.mubr.bf16.gmra.mxu0 %v4740
        %v4784 = vpop.f32.mrf.mxu0
        %v4785 = vadd.f32 %v4724, %v4784
        %v4786 = vpop.f32.mrf.mxu0
        %v4787 = vadd.f32 %v4724, %v4786
        %v4788 = vpop.f32.mrf.mxu0
        %v4789 = vpop.f32.mrf.mxu0
        %4790 = vdwg.mxu0
        %v4793 = vcombine.low %v4785, %v4787
        %v4795 = vunpack.c.l.s4 1966171168
        %v4796 = vunpack.c.0.s8 %v4795
        %v4797 = vlaneseq
        %v4798 = vshrl.u32 %v4797, 7
        %v4799 = vsub.s32 %v4796, %v4798
        %v4800 = vrot.slane %v4793, %v4799
        %v4802 = vunpack.c.l.s4 1966171168
        %v4803 = vunpack.c.0.s8 %v4802
        %v4804 = vlaneseq
        %v4805 = vshrl.u32 %v4804, 7
        %v4806 = vsub.s32 %v4803, %v4805
        %v4807 = vrot.slane %v4800, %v4806
        %v4809 = vlaneseq
        %vm4810 = vcmp.ge.s32.totalorder %v4809, 0
        %vm4811 = vcmp.lt.s32.totalorder %v4809, 256
        %vm4812 = vmand %vm4810, %vm4811
        %4813 = vst.msk [vmem:[%s292] sm:$0x3] %vm4812, %v4807
        %s4814 = sand.u32 %s144, 1
        %s4815 = scalar_lea.sflag [#allocation5], %s4814
        %s4816 = sand.u32 %s144, 1
        %s4817 = smul.addr %s4816, 2
        %s4818 = scalar_lea.vmem [#allocation11], %s4817
        // Predicated region
        $region57: #{tpu_custom_call.1} parent=39 // pred_check
          %p4819 = pneg %p154
        $region58: #{tpu_custom_call.1} parent=39 // pred_check_branch
          %4821 = sbr.rel (%p4819) target = $region60
        $region59: #{tpu_custom_call.1} parent=39 // pred_region
          %s4822 = smul.u32 2, %s26
          %s4824 = ssub.s32 32, 32
          %4825 = vsyncadd %s4815, %s4824
          %s4826 = smul.addr %s4822, 16
          %s4827 = scalar_lea.hbm %s5, %s4826
          %s4829 = sshll.u32 %s4818, 4
          %s4830 = int_to_ptr.vmem [resolvable:$true] %s4829
          %4832 = dma.vmem_to_hbm [thread:$0]  %s4830, 32, %s4827, %s4815
        $region60: #{tpu_custom_call.1} parent=39 // pred_fallthru
          _
      $region40: #{tpu_custom_call.1} parent=5 // pred_fallthru
        _
      %p4833 = scmp.le.s32.totalorder 2, %s21
      // Predicated region
      $region61: #{tpu_custom_call.1} parent=5 // pred_check
        %p4834 = pneg %p4833
      $region62: #{tpu_custom_call.1} parent=5 // pred_check_branch
        %4836 = sbr.rel (%p4834) target = $region64
      $region63: #{tpu_custom_call.1} parent=5 // pred_region
        %s4837 = ssub.s32 %s21, 2
        // Predicated region
        $region65: #{tpu_custom_call.1} parent=63 // pred_check
          %p4838 = pneg %p160
        $region66: #{tpu_custom_call.1} parent=63 // pred_check_branch
          %4840 = sbr.rel (%p4838) target = $region68
        $region67: #{tpu_custom_call.1} parent=63 // pred_region
          %s4841 = sand.u32 %s145, 1
          %s4842 = scalar_lea.sflag [#allocation5], %s4841
          %s4843 = sand.u32 %s145, 1
          %s4844 = smul.addr %s4843, 2
          %s4845 = scalar_lea.vmem [#allocation11], %s4844
          %4846 = dma.done %s4842, 32
        $region68: #{tpu_custom_call.1} parent=63 // pred_fallthru
          _
      $region64: #{tpu_custom_call.1} parent=5 // pred_fallthru
        _
    $region6: #{tpu_custom_call.1} parent=1 // loop_footer
      %s25 = sadd.s32 1, %s21
    $region7: #{tpu_custom_call.1} parent=1 // loop_footer_branch
      %20 = sbr.rel target = $region3
    $region8: #{tpu_custom_call.1} parent=1 // loop_exit
      _
    %4847 = vsyncpa [#allocation4], 1
    %s4848 = scalar_lea.sflag [#allocation4], 1
    %4849 = vsyncpa %s4848, 1
    %4850 = vsyncpa [#allocation7], 1
    %4851 = vsyncpa [#allocation10], 1
    %4852 = vsyncpa [#allocation5], 1
    %s4853 = scalar_lea.sflag [#allocation5], 1
    %4854 = vsyncpa %s4853, 1

</llo_original>
